<compile_context>
chip_gen: v5e
topology: v5e:2x2
jax: 0.10.0
libtpu: 0.0.40
codegen_flags: <defaults>
</compile_context>

<pallas_src>
import functools

import jax
import jax.numpy as jnp
from jax import lax
from jax.experimental import pallas as pl
from jax.experimental.pallas import tpu as pltpu


def _round_up(x, m):
    return (x + m - 1) // m * m


def _vmem_capacity_bytes():
    try:
        info = pltpu.get_tpu_info()
        cap = getattr(info, "vmem_capacity_bytes", None)
        if cap:
            return int(cap)
    except Exception:
        pass
    return 64 * 1024 * 1024  # conservative: v7x per-TensorCore VMEM


def _num_tensorcores():
    try:
        info = pltpu.get_tpu_info()
        for name in ("num_cores", "core_count", "num_tensorcores",
                     "tensorcore_count"):
            v = getattr(info, name, None)
            if v:
                return int(v)
    except Exception:
        pass
    try:
        return int(getattr(jax.devices()[0], "num_cores", 1) or 1)
    except Exception:
        return 1


def _block_spec(shape, index_map, buffers=None):
    """BlockSpec with optional single-buffering; falls back if unsupported."""
    if buffers is None:
        return pl.BlockSpec(shape, index_map)
    try:
        return pl.BlockSpec(shape, index_map, pipeline_mode=pl.Buffered(buffers))
    except (TypeError, AttributeError):
        return pl.BlockSpec(shape, index_map)


def _lstm_recurrence_kernel(gx_ref, h0_ref, c0_ref, whh_t_ref,
                            out_ref, hn_ref, cn_ref,
                            h_scr, c_scr, *,
                            tt, hp, t_total, needs_mask, unroll):
    """One grid step == one chunk of `tt` timesteps of the LSTM recurrence.

    gx_ref:    (TT, BB, 4Hp)  precomputed input gates (x@W_ih^T + b_ih + b_hh)
    h0_ref:    (BB, Hp)       initial hidden state for this batch chunk
    c0_ref:    (BB, Hp)       initial cell state for this batch chunk
    whh_t_ref: (Hp, 4Hp)      hidden->hidden weights, pre-transposed (resident)
    out_ref:   (TT, BB, Hp)   hidden-state outputs for this chunk
    hn_ref:    (BB, Hp)       final hidden state (written on last step only)
    cn_ref:    (BB, Hp)       final cell state  (written on last step only)
    h_scr:     (BB, Hp) f32   hidden state carried across grid steps
    c_scr:     (BB, Hp) f32   cell state carried across grid steps
    """
    t_idx = pl.program_id(1)

    @pl.when(t_idx == 0)
    def _init():
        h_scr[...] = h0_ref[...].astype(jnp.float32)
        c_scr[...] = c0_ref[...].astype(jnp.float32)

    w_hh = whh_t_ref[...]                              # (Hp, 4Hp), resident

    def step(i, carry):
        # State stays in vregs across the serial chain (no VMEM round-trip).
        h_prev, c_prev = carry
        gh = jnp.dot(h_prev.astype(w_hh.dtype), w_hh,
                     preferred_element_type=jnp.float32)         # (BB, 4Hp)
        gates = gx_ref[i].astype(jnp.float32) + gh               # (BB, 4Hp)

        # sigmoid(x) == 0.5*tanh(0.5*x) + 0.5 : one EUP push instead of two.
        i_g = 0.5 * jnp.tanh(0.5 * gates[:, 0 * hp:1 * hp]) + 0.5
        f_g = 0.5 * jnp.tanh(0.5 * gates[:, 1 * hp:2 * hp]) + 0.5
        g_g = jnp.tanh(gates[:, 2 * hp:3 * hp])
        o_g = 0.5 * jnp.tanh(0.5 * gates[:, 3 * hp:4 * hp]) + 0.5

        c_new = f_g * c_prev + i_g * g_g
        h_new = o_g * jnp.tanh(c_new)

        if needs_mask:
            # Padded tail timesteps must not advance the recurrent state.
            valid = (t_idx * tt + i) < t_total
            h_new = jnp.where(valid, h_new, h_prev)
            c_new = jnp.where(valid, c_new, c_prev)

        out_ref[i] = h_new.astype(out_ref.dtype)
        return (h_new, c_new)

    h_fin, c_fin = lax.fori_loop(0, tt, step,
                                 (h_scr[...], c_scr[...]), unroll=unroll)

    # Persist state across grid steps (once per chunk, not per timestep).
    h_scr[...] = h_fin
    c_scr[...] = c_fin

    @pl.when(t_idx == pl.num_programs(1) - 1)
    def _finalize():
        hn_ref[...] = h_fin.astype(hn_ref.dtype)
        cn_ref[...] = c_fin.astype(cn_ref.dtype)


def lstm_layer(x, state, w_ih, w_hh, b_ih, b_hh, *,
               time_block=None, batch_block=None, param_dtype=None):
    """Pallas implementation of LSTMLayer.forward.

    Args:
      x:     (T, B, input_size)   time-major, like the PyTorch module
      state: (h0, c0), each (B, hidden_size)
      w_ih:  (4H, input_size)   gate order [i, f, g, o]
      w_hh:  (4H, hidden_size)
      b_ih, b_hh: (4H,)
      time_block:  optional cap on timesteps per grid step (default: derived
                   from the chip's VMEM capacity)
      batch_block: optional batch-chunk size; by default the batch is split
                   across TensorCores when the chip has more than one.
      param_dtype: dtype for weights / precomputed gates (e.g. jnp.bfloat16).
    Returns:
      outputs: (T, B, hidden_size)
      (h_n, c_n): each (B, hidden_size)
    """
    T, B, D = x.shape
    H = w_hh.shape[1]
    h0, c0 = state
    dtype = x.dtype
    if param_dtype is None:
        param_dtype = dtype
    param_dtype = jnp.dtype(param_dtype)
    isz_p = param_dtype.itemsize
    isz_o = jnp.dtype(dtype).itemsize

    # --- padded / blocked geometry ----------------------------------------
    sub = 16 if min(isz_p, isz_o) < 4 else 8     # 16-bit packs 2 rows/sublane
    Hp = _round_up(H, 128)                       # lane multiple (gate-aligned)
    Bp = _round_up(B, sub)

    n_cores = _num_tensorcores()
    if batch_block is not None:
        BB = _round_up(min(batch_block, Bp), sub)
    elif n_cores > 1 and Bp >= n_cores * sub:
        BB = _round_up(-(-Bp // n_cores), sub)   # split batch across TCs (v7x)
    else:
        BB = Bp
    Bp = _round_up(Bp, BB)
    n_b = Bp // BB

    # --- generation-aware VMEM budget -> time-chunk size TT -----------------
    vmem_cap = _vmem_capacity_bytes()
    budget = int(vmem_cap * 0.80)
    fixed = (Hp * 4 * Hp * isz_p            # W_hh^T (single-buffered)
             + 2 * BB * Hp * isz_o          # h0, c0 (single-buffered)
             + 2 * BB * Hp * 4              # f32 h/c scratch
             + 4 * BB * Hp * isz_o          # h_n, c_n output buffers
             + (2 << 20))                   # slack for Mosaic internals
    per_t = 2 * BB * (4 * Hp * isz_p + Hp * isz_o)   # gx + out, double-buffered
    TT = max(1, (budget - fixed) // per_t)
    TT = int(min(TT, T, 256))
    if time_block is not None:
        TT = max(1, min(TT, int(time_block)))
    Tp = _round_up(T, TT)
    n_t = Tp // TT
    needs_mask = Tp != T

    # Always pass an accurate (upper-bound) VMEM limit, clamped to the chip.
    need_worst = (fixed + TT * per_t
                  + Hp * 4 * Hp * isz_p      # second W copy (fallback path)
                  + 2 * BB * Hp * isz_o)     # second h0/c0 copies (fallback)
    vmem_limit = int(min(max(int(need_worst * 1.25), 32 << 20),
                         vmem_cap - (2 << 20)))

    # --- pad parameters so each gate block sits at a lane-aligned offset ----
    def pad_gate_rows(w):                    # (4H, ...) -> (4Hp, ...)
        parts = jnp.split(w, 4, axis=0)
        pad = [(0, Hp - H)] + [(0, 0)] * (w.ndim - 1)
        return jnp.concatenate([jnp.pad(p, pad) for p in parts], axis=0)

    w_ih_p = pad_gate_rows(w_ih)                                    # (4Hp, D)
    w_hh_p = jnp.pad(pad_gate_rows(w_hh), ((0, 0), (0, Hp - H)))    # (4Hp, Hp)
    b_p = pad_gate_rows(b_ih + b_hh)                                # (4Hp,)

    wih_t_p = jnp.transpose(w_ih_p).astype(param_dtype)             # (D, 4Hp)
    whh_t_p = jnp.transpose(w_hh_p).astype(param_dtype)             # (Hp, 4Hp)

    x_p = jnp.pad(x, ((0, 0), (0, Bp - B), (0, 0)))
    h0_p = jnp.pad(h0, ((0, Bp - B), (0, Hp - H))).astype(dtype)
    c0_p = jnp.pad(c0, ((0, Bp - B), (0, Hp - H))).astype(dtype)

    # --- hoisted, time-parallel input projection (one big MXU matmul) -------
    gx = jnp.dot(x_p.reshape(T * Bp, D).astype(param_dtype), wih_t_p,
                 preferred_element_type=jnp.float32)
    gx = (gx + b_p.astype(jnp.float32)[None, :]).reshape(T, Bp, 4 * Hp)
    gx = gx.astype(param_dtype)
    if Tp != T:
        gx = jnp.pad(gx, ((0, Tp - T), (0, 0), (0, 0)))

    # Full unroll for small step working sets; partial unroll to limit vreg
    # pressure / spills when a single timestep's gate tile is already large.
    step_bytes = BB * 4 * Hp * 4
    unroll = True if step_bytes <= 256 * 1024 else min(TT, 4)

    kernel = functools.partial(_lstm_recurrence_kernel, tt=TT, hp=Hp,
                               t_total=T, needs_mask=needs_mask, unroll=unroll)

    out_shape = (jax.ShapeDtypeStruct((Tp, Bp, Hp), dtype),
                 jax.ShapeDtypeStruct((Bp, Hp), dtype),
                 jax.ShapeDtypeStruct((Bp, Hp), dtype))

    def build(single_buffer_constants):
        nbuf = 1 if single_buffer_constants else None
        grid_spec = pltpu.PrefetchScalarGridSpec(
            num_scalar_prefetch=0,
            grid=(n_b, n_t),
            in_specs=[
                pl.BlockSpec((TT, BB, 4 * Hp), lambda b, t: (t, b, 0)),   # gx
                _block_spec((BB, Hp), lambda b, t: (b, 0), nbuf),         # h0
                _block_spec((BB, Hp), lambda b, t: (b, 0), nbuf),         # c0
                _block_spec((Hp, 4 * Hp), lambda b, t: (0, 0), nbuf),     # W_hh^T
            ],
            out_specs=[
                pl.BlockSpec((TT, BB, Hp), lambda b, t: (t, b, 0)),       # out
                pl.BlockSpec((BB, Hp), lambda b, t: (b, 0)),              # h_n
                pl.BlockSpec((BB, Hp), lambda b, t: (b, 0)),              # c_n
            ],
            scratch_shapes=[
                pltpu.VMEM((BB, Hp), jnp.float32),                        # h
                pltpu.VMEM((BB, Hp), jnp.float32),                        # c
            ],
        )
        return pl.pallas_call(
            kernel,
            out_shape=out_shape,
            grid_spec=grid_spec,
            compiler_params=pltpu.CompilerParams(
                dimension_semantics=("parallel", "arbitrary"),
                vmem_limit_bytes=vmem_limit,
            ),
        )

    try:
        out_p, hn_p, cn_p = build(True)(gx, h0_p, c0_p, whh_t_p)
    except Exception:
        # Fallback for environments without BlockSpec pipeline_mode support.
        out_p, hn_p, cn_p = build(False)(gx, h0_p, c0_p, whh_t_p)

    outputs = out_p[:T, :B, :H]
    h_n = hn_p[:B, :H]
    c_n = cn_p[:B, :H]
    return outputs, (h_n, c_n)


def _lstm_reference(x, state, w_ih, w_hh, b_ih, b_hh):
    """Pure-JAX reference (standard torch.nn.LSTMCell math), for verification."""
    H = w_hh.shape[1]

    def step(carry, x_t):
        h, c = carry
        gates = x_t @ w_ih.T + b_ih + h @ w_hh.T + b_hh
        i = jax.nn.sigmoid(gates[:, 0 * H:1 * H])
        f = jax.nn.sigmoid(gates[:, 1 * H:2 * H])
        g = jnp.tanh(gates[:, 2 * H:3 * H])
        o = jax.nn.sigmoid(gates[:, 3 * H:4 * H])
        c_new = f * c + i * g
        h_new = o * jnp.tanh(c_new)
        return (h_new, c_new), h_new

    (h_n, c_n), outs = lax.scan(step, state, x)
    return outs, (h_n, c_n)


if __name__ == "__main__":
    # Small shapes consistent with the module: time-major input (T, B, D),
    # state tuple of (B, H) tensors.
    timesteps, batch, input_size, hidden_size = 8, 2, 16, 32

    key = jax.random.PRNGKey(0)
    kx, kh, kc, k1, k2, k3, k4 = jax.random.split(key, 7)

    x = jax.random.normal(kx, (timesteps, batch, input_size), dtype=jnp.float32)
    h0 = jax.random.normal(kh, (batch, hidden_size), dtype=jnp.float32)
    c0 = jax.random.normal(kc, (batch, hidden_size), dtype=jnp.float32)

    scale = 1.0 / jnp.sqrt(hidden_size)
    w_ih = jax.random.uniform(k1, (4 * hidden_size, input_size),
                              minval=-scale, maxval=scale, dtype=jnp.float32)
    w_hh = jax.random.uniform(k2, (4 * hidden_size, hidden_size),
                              minval=-scale, maxval=scale, dtype=jnp.float32)
    b_ih = jax.random.uniform(k3, (4 * hidden_size,),
                              minval=-scale, maxval=scale, dtype=jnp.float32)
    b_hh = jax.random.uniform(k4, (4 * hidden_size,),
                              minval=-scale, maxval=scale, dtype=jnp.float32)

    ref_out, (ref_h, ref_c) = _lstm_reference(x, (h0, c0), w_ih, w_hh, b_ih, b_hh)

    # 1) default (f32) path
    outputs, (h_n, c_n) = lstm_layer(x, (h0, c0), w_ih, w_hh, b_ih, b_hh)
    jax.block_until_ready((outputs, h_n, c_n))
    assert outputs.shape == (timesteps, batch, hidden_size)
    assert h_n.shape == (batch, hidden_size)
    assert c_n.shape == (batch, hidden_size)
    assert jnp.allclose(outputs, ref_out, atol=1e-4, rtol=1e-4)
    assert jnp.allclose(h_n, ref_h, atol=1e-4, rtol=1e-4)
    assert jnp.allclose(c_n, ref_c, atol=1e-4, rtol=1e-4)

    # 2) non-divisible time chunking (exercises the padded/masked tail path)
    outputs_m, (h_m, c_m) = lstm_layer(x, (h0, c0), w_ih, w_hh, b_ih, b_hh,
                                       time_block=3)
    jax.block_until_ready((outputs_m, h_m, c_m))
    assert jnp.allclose(outputs_m, ref_out, atol=1e-4, rtol=1e-4)
    assert jnp.allclose(h_m, ref_h, atol=1e-4, rtol=1e-4)
    assert jnp.allclose(c_m, ref_c, atol=1e-4, rtol=1e-4)

    # 3) bf16 parameter/gate streams (f32 state/accumulation), loose tolerance
    outputs_b, (h_b, c_b) = lstm_layer(x, (h0, c0), w_ih, w_hh, b_ih, b_hh,
                                       param_dtype=jnp.bfloat16)
    jax.block_until_ready((outputs_b, h_b, c_b))
    assert jnp.allclose(outputs_b, ref_out, atol=7e-2, rtol=0)
    assert jnp.allclose(h_b, ref_h, atol=7e-2, rtol=0)
    assert jnp.allclose(c_b, ref_c, atol=7e-2, rtol=0)

    print("KERNEL_OK")
</pallas_src>

<mosaic_0001>
module attributes {stable_mosaic.version = 11 : i64} {
  func.func @_lstm_recurrence_kernel(%arg0: i32, %arg1: i32, %arg2: memref<8x8x512xf32, #tpu.memory_space<vmem>>, %arg3: memref<8x128xf32, #tpu.memory_space<vmem>>, %arg4: memref<8x128xf32, #tpu.memory_space<vmem>>, %arg5: memref<128x512xf32, #tpu.memory_space<vmem>>, %arg6: memref<8x8x128xf32, #tpu.memory_space<vmem>>, %arg7: memref<8x128xf32, #tpu.memory_space<vmem>>, %arg8: memref<8x128xf32, #tpu.memory_space<vmem>>, %arg9: memref<8x128xf32, #tpu.memory_space<vmem>>, %arg10: memref<8x128xf32, #tpu.memory_space<vmem>>) attributes {dimension_semantics = [#tpu.dimension_semantics<parallel>, #tpu.dimension_semantics<arbitrary>], iteration_bounds = array<i64: 1, 1>, scalar_prefetch = 0 : i64, scratch_operands = 2 : i64, tpu.core_type = #tpu.core_type<tc>, window_params = [{transform_indices = @transform_0, window_bounds = array<i64: 8, 8, 512>}, {pipeline_mode = #tpu.pipeline_mode<synchronous>, transform_indices = @transform_1, window_bounds = array<i64: 8, 128>}, {pipeline_mode = #tpu.pipeline_mode<synchronous>, transform_indices = @transform_2, window_bounds = array<i64: 8, 128>}, {pipeline_mode = #tpu.pipeline_mode<synchronous>, transform_indices = @transform_3, window_bounds = array<i64: 128, 512>}, {transform_indices = @transform_4, window_bounds = array<i64: 8, 8, 128>}, {transform_indices = @transform_5, window_bounds = array<i64: 8, 128>}, {transform_indices = @transform_6, window_bounds = array<i64: 8, 128>}]} {
    %c0_i32 = arith.constant 0 : i32
    %0 = arith.cmpi eq, %arg1, %c0_i32 : i32
    %1 = arith.extui %0 : i1 to i32
    %c0_i32_0 = arith.constant 0 : i32
    %2 = arith.cmpi ne, %1, %c0_i32_0 : i32
    scf.if %2 {
      %c0_124 = arith.constant 0 : index
      %c0_125 = arith.constant 0 : index
      %331 = vector.load %arg3[%c0_124, %c0_125] : memref<8x128xf32, #tpu.memory_space<vmem>>, vector<8x128xf32>
      %c0_126 = arith.constant 0 : index
      %c0_127 = arith.constant 0 : index
      %332 = vector.load %arg9[%c0_126, %c0_127] : memref<8x128xf32, #tpu.memory_space<vmem>>, vector<8x128xf32>
      tpu.vector_store %arg9[%c0_126, %c0_127], %331 {strides = array<i32>} : memref<8x128xf32, #tpu.memory_space<vmem>>, vector<8x128xf32>,
      %c0_128 = arith.constant 0 : index
      %c0_129 = arith.constant 0 : index
      %333 = vector.load %arg4[%c0_128, %c0_129] : memref<8x128xf32, #tpu.memory_space<vmem>>, vector<8x128xf32>
      %c0_130 = arith.constant 0 : index
      %c0_131 = arith.constant 0 : index
      %334 = vector.load %arg10[%c0_130, %c0_131] : memref<8x128xf32, #tpu.memory_space<vmem>>, vector<8x128xf32>
      tpu.vector_store %arg10[%c0_130, %c0_131], %333 {strides = array<i32>} : memref<8x128xf32, #tpu.memory_space<vmem>>, vector<8x128xf32>,
    } else {
    }
    %c0 = arith.constant 0 : index
    %c0_1 = arith.constant 0 : index
    %3 = vector.load %arg5[%c0, %c0_1] : memref<128x512xf32, #tpu.memory_space<vmem>>, vector<128x512xf32>
    %c0_2 = arith.constant 0 : index
    %c0_3 = arith.constant 0 : index
    %4 = vector.load %arg9[%c0_2, %c0_3] : memref<8x128xf32, #tpu.memory_space<vmem>>, vector<8x128xf32>
    %c0_4 = arith.constant 0 : index
    %c0_5 = arith.constant 0 : index
    %5 = vector.load %arg10[%c0_4, %c0_5] : memref<8x128xf32, #tpu.memory_space<vmem>>, vector<8x128xf32>
    %c0_i32_6 = arith.constant 0 : i32
    %cst = arith.constant dense<0.000000e+00> : vector<8x512xf32>
    %6 = tpu.matmul %4, %3, %cst {dimension_numbers = #tpu.dot_dimension_numbers<[1], [0], [0], [1], [0, 0, 1, 1], [], []>} : vector<8x128xf32>, vector<128x512xf32>, vector<8x512xf32> -> vector<8x512xf32>
    %7 = arith.index_cast %c0_i32_6 : i32 to index
    %c0_7 = arith.constant 0 : index
    %c0_8 = arith.constant 0 : index
    %8 = vector.load %arg2[%7, %c0_7, %c0_8] : memref<8x8x512xf32, #tpu.memory_space<vmem>>, vector<1x8x512xf32>
    %9 = vector.shape_cast %8 : vector<1x8x512xf32> to vector<8x512xf32>
    %10 = arith.addf %9, %6 : vector<8x512xf32>
    %11 = vector.extract_strided_slice %10 {offsets = [0, 0], sizes = [8, 128], strides = [1, 1]} : vector<8x512xf32> to vector<8x128xf32>
    %cst_9 = arith.constant 5.000000e-01 : f32
    %12 = vector.broadcast %cst_9 : f32 to vector<8x128xf32>
    %13 = arith.mulf %12, %11 : vector<8x128xf32>
    %14 = math.tanh %13 : vector<8x128xf32>
    %cst_10 = arith.constant 5.000000e-01 : f32
    %15 = vector.broadcast %cst_10 : f32 to vector<8x128xf32>
    %16 = arith.mulf %15, %14 : vector<8x128xf32>
    %cst_11 = arith.constant 5.000000e-01 : f32
    %17 = vector.broadcast %cst_11 : f32 to vector<8x128xf32>
    %18 = arith.addf %16, %17 : vector<8x128xf32>
    %19 = vector.extract_strided_slice %10 {offsets = [0, 128], sizes = [8, 128], strides = [1, 1]} : vector<8x512xf32> to vector<8x128xf32>
    %cst_12 = arith.constant 5.000000e-01 : f32
    %20 = vector.broadcast %cst_12 : f32 to vector<8x128xf32>
    %21 = arith.mulf %20, %19 : vector<8x128xf32>
    %22 = math.tanh %21 : vector<8x128xf32>
    %cst_13 = arith.constant 5.000000e-01 : f32
    %23 = vector.broadcast %cst_13 : f32 to vector<8x128xf32>
    %24 = arith.mulf %23, %22 : vector<8x128xf32>
    %cst_14 = arith.constant 5.000000e-01 : f32
    %25 = vector.broadcast %cst_14 : f32 to vector<8x128xf32>
    %26 = arith.addf %24, %25 : vector<8x128xf32>
    %27 = vector.extract_strided_slice %10 {offsets = [0, 256], sizes = [8, 128], strides = [1, 1]} : vector<8x512xf32> to vector<8x128xf32>
    %28 = math.tanh %27 : vector<8x128xf32>
    %29 = vector.extract_strided_slice %10 {offsets = [0, 384], sizes = [8, 128], strides = [1, 1]} : vector<8x512xf32> to vector<8x128xf32>
    %cst_15 = arith.constant 5.000000e-01 : f32
    %30 = vector.broadcast %cst_15 : f32 to vector<8x128xf32>
    %31 = arith.mulf %30, %29 : vector<8x128xf32>
    %32 = math.tanh %31 : vector<8x128xf32>
    %cst_16 = arith.constant 5.000000e-01 : f32
    %33 = vector.broadcast %cst_16 : f32 to vector<8x128xf32>
    %34 = arith.mulf %33, %32 : vector<8x128xf32>
    %cst_17 = arith.constant 5.000000e-01 : f32
    %35 = vector.broadcast %cst_17 : f32 to vector<8x128xf32>
    %36 = arith.addf %34, %35 : vector<8x128xf32>
    %37 = arith.mulf %26, %5 : vector<8x128xf32>
    %38 = arith.mulf %18, %28 : vector<8x128xf32>
    %39 = arith.addf %37, %38 : vector<8x128xf32>
    %40 = math.tanh %39 : vector<8x128xf32>
    %41 = arith.mulf %36, %40 : vector<8x128xf32>
    %42 = arith.index_cast %c0_i32_6 : i32 to index
    %c0_18 = arith.constant 0 : index
    %c0_19 = arith.constant 0 : index
    %43 = vector.load %arg6[%42, %c0_18, %c0_19] : memref<8x8x128xf32, #tpu.memory_space<vmem>>, vector<1x8x128xf32>
    %44 = vector.shape_cast %43 : vector<1x8x128xf32> to vector<8x128xf32>
    %45 = vector.shape_cast %41 : vector<8x128xf32> to vector<1x8x128xf32>
    tpu.vector_store %arg6[%42, %c0_18, %c0_19], %45 {strides = array<i32>} : memref<8x8x128xf32, #tpu.memory_space<vmem>>, vector<1x8x128xf32>,
    %c1_i32 = arith.constant 1 : i32
    %cst_20 = arith.constant dense<0.000000e+00> : vector<8x512xf32>
    %46 = tpu.matmul %41, %3, %cst_20 {dimension_numbers = #tpu.dot_dimension_numbers<[1], [0], [0], [1], [0, 0, 1, 1], [], []>} : vector<8x128xf32>, vector<128x512xf32>, vector<8x512xf32> -> vector<8x512xf32>
    %47 = arith.index_cast %c1_i32 : i32 to index
    %c0_21 = arith.constant 0 : index
    %c0_22 = arith.constant 0 : index
    %48 = vector.load %arg2[%47, %c0_21, %c0_22] : memref<8x8x512xf32, #tpu.memory_space<vmem>>, vector<1x8x512xf32>
    %49 = vector.shape_cast %48 : vector<1x8x512xf32> to vector<8x512xf32>
    %50 = arith.addf %49, %46 : vector<8x512xf32>
    %51 = vector.extract_strided_slice %50 {offsets = [0, 0], sizes = [8, 128], strides = [1, 1]} : vector<8x512xf32> to vector<8x128xf32>
    %cst_23 = arith.constant 5.000000e-01 : f32
    %52 = vector.broadcast %cst_23 : f32 to vector<8x128xf32>
    %53 = arith.mulf %52, %51 : vector<8x128xf32>
    %54 = math.tanh %53 : vector<8x128xf32>
    %cst_24 = arith.constant 5.000000e-01 : f32
    %55 = vector.broadcast %cst_24 : f32 to vector<8x128xf32>
    %56 = arith.mulf %55, %54 : vector<8x128xf32>
    %cst_25 = arith.constant 5.000000e-01 : f32
    %57 = vector.broadcast %cst_25 : f32 to vector<8x128xf32>
    %58 = arith.addf %56, %57 : vector<8x128xf32>
    %59 = vector.extract_strided_slice %50 {offsets = [0, 128], sizes = [8, 128], strides = [1, 1]} : vector<8x512xf32> to vector<8x128xf32>
    %cst_26 = arith.constant 5.000000e-01 : f32
    %60 = vector.broadcast %cst_26 : f32 to vector<8x128xf32>
    %61 = arith.mulf %60, %59 : vector<8x128xf32>
    %62 = math.tanh %61 : vector<8x128xf32>
    %cst_27 = arith.constant 5.000000e-01 : f32
    %63 = vector.broadcast %cst_27 : f32 to vector<8x128xf32>
    %64 = arith.mulf %63, %62 : vector<8x128xf32>
    %cst_28 = arith.constant 5.000000e-01 : f32
    %65 = vector.broadcast %cst_28 : f32 to vector<8x128xf32>
    %66 = arith.addf %64, %65 : vector<8x128xf32>
    %67 = vector.extract_strided_slice %50 {offsets = [0, 256], sizes = [8, 128], strides = [1, 1]} : vector<8x512xf32> to vector<8x128xf32>
    %68 = math.tanh %67 : vector<8x128xf32>
    %69 = vector.extract_strided_slice %50 {offsets = [0, 384], sizes = [8, 128], strides = [1, 1]} : vector<8x512xf32> to vector<8x128xf32>
    %cst_29 = arith.constant 5.000000e-01 : f32
    %70 = vector.broadcast %cst_29 : f32 to vector<8x128xf32>
    %71 = arith.mulf %70, %69 : vector<8x128xf32>
    %72 = math.tanh %71 : vector<8x128xf32>
    %cst_30 = arith.constant 5.000000e-01 : f32
    %73 = vector.broadcast %cst_30 : f32 to vector<8x128xf32>
    %74 = arith.mulf %73, %72 : vector<8x128xf32>
    %cst_31 = arith.constant 5.000000e-01 : f32
    %75 = vector.broadcast %cst_31 : f32 to vector<8x128xf32>
    %76 = arith.addf %74, %75 : vector<8x128xf32>
    %77 = arith.mulf %66, %39 : vector<8x128xf32>
    %78 = arith.mulf %58, %68 : vector<8x128xf32>
    %79 = arith.addf %77, %78 : vector<8x128xf32>
    %80 = math.tanh %79 : vector<8x128xf32>
    %81 = arith.mulf %76, %80 : vector<8x128xf32>
    %82 = arith.index_cast %c1_i32 : i32 to index
    %c0_32 = arith.constant 0 : index
    %c0_33 = arith.constant 0 : index
    %83 = vector.load %arg6[%82, %c0_32, %c0_33] : memref<8x8x128xf32, #tpu.memory_space<vmem>>, vector<1x8x128xf32>
    %84 = vector.shape_cast %83 : vector<1x8x128xf32> to vector<8x128xf32>
    %85 = vector.shape_cast %81 : vector<8x128xf32> to vector<1x8x128xf32>
    tpu.vector_store %arg6[%82, %c0_32, %c0_33], %85 {strides = array<i32>} : memref<8x8x128xf32, #tpu.memory_space<vmem>>, vector<1x8x128xf32>,
    %c2_i32 = arith.constant 2 : i32
    %cst_34 = arith.constant dense<0.000000e+00> : vector<8x512xf32>
    %86 = tpu.matmul %81, %3, %cst_34 {dimension_numbers = #tpu.dot_dimension_numbers<[1], [0], [0], [1], [0, 0, 1, 1], [], []>} : vector<8x128xf32>, vector<128x512xf32>, vector<8x512xf32> -> vector<8x512xf32>
    %87 = arith.index_cast %c2_i32 : i32 to index
    %c0_35 = arith.constant 0 : index
    %c0_36 = arith.constant 0 : index
    %88 = vector.load %arg2[%87, %c0_35, %c0_36] : memref<8x8x512xf32, #tpu.memory_space<vmem>>, vector<1x8x512xf32>
    %89 = vector.shape_cast %88 : vector<1x8x512xf32> to vector<8x512xf32>
    %90 = arith.addf %89, %86 : vector<8x512xf32>
    %91 = vector.extract_strided_slice %90 {offsets = [0, 0], sizes = [8, 128], strides = [1, 1]} : vector<8x512xf32> to vector<8x128xf32>
    %cst_37 = arith.constant 5.000000e-01 : f32
    %92 = vector.broadcast %cst_37 : f32 to vector<8x128xf32>
    %93 = arith.mulf %92, %91 : vector<8x128xf32>
    %94 = math.tanh %93 : vector<8x128xf32>
    %cst_38 = arith.constant 5.000000e-01 : f32
    %95 = vector.broadcast %cst_38 : f32 to vector<8x128xf32>
    %96 = arith.mulf %95, %94 : vector<8x128xf32>
    %cst_39 = arith.constant 5.000000e-01 : f32
    %97 = vector.broadcast %cst_39 : f32 to vector<8x128xf32>
    %98 = arith.addf %96, %97 : vector<8x128xf32>
    %99 = vector.extract_strided_slice %90 {offsets = [0, 128], sizes = [8, 128], strides = [1, 1]} : vector<8x512xf32> to vector<8x128xf32>
    %cst_40 = arith.constant 5.000000e-01 : f32
    %100 = vector.broadcast %cst_40 : f32 to vector<8x128xf32>
    %101 = arith.mulf %100, %99 : vector<8x128xf32>
    %102 = math.tanh %101 : vector<8x128xf32>
    %cst_41 = arith.constant 5.000000e-01 : f32
    %103 = vector.broadcast %cst_41 : f32 to vector<8x128xf32>
    %104 = arith.mulf %103, %102 : vector<8x128xf32>
    %cst_42 = arith.constant 5.000000e-01 : f32
    %105 = vector.broadcast %cst_42 : f32 to vector<8x128xf32>
    %106 = arith.addf %104, %105 : vector<8x128xf32>
    %107 = vector.extract_strided_slice %90 {offsets = [0, 256], sizes = [8, 128], strides = [1, 1]} : vector<8x512xf32> to vector<8x128xf32>
    %108 = math.tanh %107 : vector<8x128xf32>
    %109 = vector.extract_strided_slice %90 {offsets = [0, 384], sizes = [8, 128], strides = [1, 1]} : vector<8x512xf32> to vector<8x128xf32>
    %cst_43 = arith.constant 5.000000e-01 : f32
    %110 = vector.broadcast %cst_43 : f32 to vector<8x128xf32>
    %111 = arith.mulf %110, %109 : vector<8x128xf32>
    %112 = math.tanh %111 : vector<8x128xf32>
    %cst_44 = arith.constant 5.000000e-01 : f32
    %113 = vector.broadcast %cst_44 : f32 to vector<8x128xf32>
    %114 = arith.mulf %113, %112 : vector<8x128xf32>
    %cst_45 = arith.constant 5.000000e-01 : f32
    %115 = vector.broadcast %cst_45 : f32 to vector<8x128xf32>
    %116 = arith.addf %114, %115 : vector<8x128xf32>
    %117 = arith.mulf %106, %79 : vector<8x128xf32>
    %118 = arith.mulf %98, %108 : vector<8x128xf32>
    %119 = arith.addf %117, %118 : vector<8x128xf32>
    %120 = math.tanh %119 : vector<8x128xf32>
    %121 = arith.mulf %116, %120 : vector<8x128xf32>
    %122 = arith.index_cast %c2_i32 : i32 to index
    %c0_46 = arith.constant 0 : index
    %c0_47 = arith.constant 0 : index
    %123 = vector.load %arg6[%122, %c0_46, %c0_47] : memref<8x8x128xf32, #tpu.memory_space<vmem>>, vector<1x8x128xf32>
    %124 = vector.shape_cast %123 : vector<1x8x128xf32> to vector<8x128xf32>
    %125 = vector.shape_cast %121 : vector<8x128xf32> to vector<1x8x128xf32>
    tpu.vector_store %arg6[%122, %c0_46, %c0_47], %125 {strides = array<i32>} : memref<8x8x128xf32, #tpu.memory_space<vmem>>, vector<1x8x128xf32>,
    %c3_i32 = arith.constant 3 : i32
    %cst_48 = arith.constant dense<0.000000e+00> : vector<8x512xf32>
    %126 = tpu.matmul %121, %3, %cst_48 {dimension_numbers = #tpu.dot_dimension_numbers<[1], [0], [0], [1], [0, 0, 1, 1], [], []>} : vector<8x128xf32>, vector<128x512xf32>, vector<8x512xf32> -> vector<8x512xf32>
    %127 = arith.index_cast %c3_i32 : i32 to index
    %c0_49 = arith.constant 0 : index
    %c0_50 = arith.constant 0 : index
    %128 = vector.load %arg2[%127, %c0_49, %c0_50] : memref<8x8x512xf32, #tpu.memory_space<vmem>>, vector<1x8x512xf32>
    %129 = vector.shape_cast %128 : vector<1x8x512xf32> to vector<8x512xf32>
    %130 = arith.addf %129, %126 : vector<8x512xf32>
    %131 = vector.extract_strided_slice %130 {offsets = [0, 0], sizes = [8, 128], strides = [1, 1]} : vector<8x512xf32> to vector<8x128xf32>
    %cst_51 = arith.constant 5.000000e-01 : f32
    %132 = vector.broadcast %cst_51 : f32 to vector<8x128xf32>
    %133 = arith.mulf %132, %131 : vector<8x128xf32>
    %134 = math.tanh %133 : vector<8x128xf32>
    %cst_52 = arith.constant 5.000000e-01 : f32
    %135 = vector.broadcast %cst_52 : f32 to vector<8x128xf32>
    %136 = arith.mulf %135, %134 : vector<8x128xf32>
    %cst_53 = arith.constant 5.000000e-01 : f32
    %137 = vector.broadcast %cst_53 : f32 to vector<8x128xf32>
    %138 = arith.addf %136, %137 : vector<8x128xf32>
    %139 = vector.extract_strided_slice %130 {offsets = [0, 128], sizes = [8, 128], strides = [1, 1]} : vector<8x512xf32> to vector<8x128xf32>
    %cst_54 = arith.constant 5.000000e-01 : f32
    %140 = vector.broadcast %cst_54 : f32 to vector<8x128xf32>
    %141 = arith.mulf %140, %139 : vector<8x128xf32>
    %142 = math.tanh %141 : vector<8x128xf32>
    %cst_55 = arith.constant 5.000000e-01 : f32
    %143 = vector.broadcast %cst_55 : f32 to vector<8x128xf32>
    %144 = arith.mulf %143, %142 : vector<8x128xf32>
    %cst_56 = arith.constant 5.000000e-01 : f32
    %145 = vector.broadcast %cst_56 : f32 to vector<8x128xf32>
    %146 = arith.addf %144, %145 : vector<8x128xf32>
    %147 = vector.extract_strided_slice %130 {offsets = [0, 256], sizes = [8, 128], strides = [1, 1]} : vector<8x512xf32> to vector<8x128xf32>
    %148 = math.tanh %147 : vector<8x128xf32>
    %149 = vector.extract_strided_slice %130 {offsets = [0, 384], sizes = [8, 128], strides = [1, 1]} : vector<8x512xf32> to vector<8x128xf32>
    %cst_57 = arith.constant 5.000000e-01 : f32
    %150 = vector.broadcast %cst_57 : f32 to vector<8x128xf32>
    %151 = arith.mulf %150, %149 : vector<8x128xf32>
    %152 = math.tanh %151 : vector<8x128xf32>
    %cst_58 = arith.constant 5.000000e-01 : f32
    %153 = vector.broadcast %cst_58 : f32 to vector<8x128xf32>
    %154 = arith.mulf %153, %152 : vector<8x128xf32>
    %cst_59 = arith.constant 5.000000e-01 : f32
    %155 = vector.broadcast %cst_59 : f32 to vector<8x128xf32>
    %156 = arith.addf %154, %155 : vector<8x128xf32>
    %157 = arith.mulf %146, %119 : vector<8x128xf32>
    %158 = arith.mulf %138, %148 : vector<8x128xf32>
    %159 = arith.addf %157, %158 : vector<8x128xf32>
    %160 = math.tanh %159 : vector<8x128xf32>
    %161 = arith.mulf %156, %160 : vector<8x128xf32>
    %162 = arith.index_cast %c3_i32 : i32 to index
    %c0_60 = arith.constant 0 : index
    %c0_61 = arith.constant 0 : index
    %163 = vector.load %arg6[%162, %c0_60, %c0_61] : memref<8x8x128xf32, #tpu.memory_space<vmem>>, vector<1x8x128xf32>
    %164 = vector.shape_cast %163 : vector<1x8x128xf32> to vector<8x128xf32>
    %165 = vector.shape_cast %161 : vector<8x128xf32> to vector<1x8x128xf32>
    tpu.vector_store %arg6[%162, %c0_60, %c0_61], %165 {strides = array<i32>} : memref<8x8x128xf32, #tpu.memory_space<vmem>>, vector<1x8x128xf32>,
    %c4_i32 = arith.constant 4 : i32
    %cst_62 = arith.constant dense<0.000000e+00> : vector<8x512xf32>
    %166 = tpu.matmul %161, %3, %cst_62 {dimension_numbers = #tpu.dot_dimension_numbers<[1], [0], [0], [1], [0, 0, 1, 1], [], []>} : vector<8x128xf32>, vector<128x512xf32>, vector<8x512xf32> -> vector<8x512xf32>
    %167 = arith.index_cast %c4_i32 : i32 to index
    %c0_63 = arith.constant 0 : index
    %c0_64 = arith.constant 0 : index
    %168 = vector.load %arg2[%167, %c0_63, %c0_64] : memref<8x8x512xf32, #tpu.memory_space<vmem>>, vector<1x8x512xf32>
    %169 = vector.shape_cast %168 : vector<1x8x512xf32> to vector<8x512xf32>
    %170 = arith.addf %169, %166 : vector<8x512xf32>
    %171 = vector.extract_strided_slice %170 {offsets = [0, 0], sizes = [8, 128], strides = [1, 1]} : vector<8x512xf32> to vector<8x128xf32>
    %cst_65 = arith.constant 5.000000e-01 : f32
    %172 = vector.broadcast %cst_65 : f32 to vector<8x128xf32>
    %173 = arith.mulf %172, %171 : vector<8x128xf32>
    %174 = math.tanh %173 : vector<8x128xf32>
    %cst_66 = arith.constant 5.000000e-01 : f32
    %175 = vector.broadcast %cst_66 : f32 to vector<8x128xf32>
    %176 = arith.mulf %175, %174 : vector<8x128xf32>
    %cst_67 = arith.constant 5.000000e-01 : f32
    %177 = vector.broadcast %cst_67 : f32 to vector<8x128xf32>
    %178 = arith.addf %176, %177 : vector<8x128xf32>
    %179 = vector.extract_strided_slice %170 {offsets = [0, 128], sizes = [8, 128], strides = [1, 1]} : vector<8x512xf32> to vector<8x128xf32>
    %cst_68 = arith.constant 5.000000e-01 : f32
    %180 = vector.broadcast %cst_68 : f32 to vector<8x128xf32>
    %181 = arith.mulf %180, %179 : vector<8x128xf32>
    %182 = math.tanh %181 : vector<8x128xf32>
    %cst_69 = arith.constant 5.000000e-01 : f32
    %183 = vector.broadcast %cst_69 : f32 to vector<8x128xf32>
    %184 = arith.mulf %183, %182 : vector<8x128xf32>
    %cst_70 = arith.constant 5.000000e-01 : f32
    %185 = vector.broadcast %cst_70 : f32 to vector<8x128xf32>
    %186 = arith.addf %184, %185 : vector<8x128xf32>
    %187 = vector.extract_strided_slice %170 {offsets = [0, 256], sizes = [8, 128], strides = [1, 1]} : vector<8x512xf32> to vector<8x128xf32>
    %188 = math.tanh %187 : vector<8x128xf32>
    %189 = vector.extract_strided_slice %170 {offsets = [0, 384], sizes = [8, 128], strides = [1, 1]} : vector<8x512xf32> to vector<8x128xf32>
    %cst_71 = arith.constant 5.000000e-01 : f32
    %190 = vector.broadcast %cst_71 : f32 to vector<8x128xf32>
    %191 = arith.mulf %190, %189 : vector<8x128xf32>
    %192 = math.tanh %191 : vector<8x128xf32>
    %cst_72 = arith.constant 5.000000e-01 : f32
    %193 = vector.broadcast %cst_72 : f32 to vector<8x128xf32>
    %194 = arith.mulf %193, %192 : vector<8x128xf32>
    %cst_73 = arith.constant 5.000000e-01 : f32
    %195 = vector.broadcast %cst_73 : f32 to vector<8x128xf32>
    %196 = arith.addf %194, %195 : vector<8x128xf32>
    %197 = arith.mulf %186, %159 : vector<8x128xf32>
    %198 = arith.mulf %178, %188 : vector<8x128xf32>
    %199 = arith.addf %197, %198 : vector<8x128xf32>
    %200 = math.tanh %199 : vector<8x128xf32>
    %201 = arith.mulf %196, %200 : vector<8x128xf32>
    %202 = arith.index_cast %c4_i32 : i32 to index
    %c0_74 = arith.constant 0 : index
    %c0_75 = arith.constant 0 : index
    %203 = vector.load %arg6[%202, %c0_74, %c0_75] : memref<8x8x128xf32, #tpu.memory_space<vmem>>, vector<1x8x128xf32>
    %204 = vector.shape_cast %203 : vector<1x8x128xf32> to vector<8x128xf32>
    %205 = vector.shape_cast %201 : vector<8x128xf32> to vector<1x8x128xf32>
    tpu.vector_store %arg6[%202, %c0_74, %c0_75], %205 {strides = array<i32>} : memref<8x8x128xf32, #tpu.memory_space<vmem>>, vector<1x8x128xf32>,
    %c5_i32 = arith.constant 5 : i32
    %cst_76 = arith.constant dense<0.000000e+00> : vector<8x512xf32>
    %206 = tpu.matmul %201, %3, %cst_76 {dimension_numbers = #tpu.dot_dimension_numbers<[1], [0], [0], [1], [0, 0, 1, 1], [], []>} : vector<8x128xf32>, vector<128x512xf32>, vector<8x512xf32> -> vector<8x512xf32>
    %207 = arith.index_cast %c5_i32 : i32 to index
    %c0_77 = arith.constant 0 : index
    %c0_78 = arith.constant 0 : index
    %208 = vector.load %arg2[%207, %c0_77, %c0_78] : memref<8x8x512xf32, #tpu.memory_space<vmem>>, vector<1x8x512xf32>
    %209 = vector.shape_cast %208 : vector<1x8x512xf32> to vector<8x512xf32>
    %210 = arith.addf %209, %206 : vector<8x512xf32>
    %211 = vector.extract_strided_slice %210 {offsets = [0, 0], sizes = [8, 128], strides = [1, 1]} : vector<8x512xf32> to vector<8x128xf32>
    %cst_79 = arith.constant 5.000000e-01 : f32
    %212 = vector.broadcast %cst_79 : f32 to vector<8x128xf32>
    %213 = arith.mulf %212, %211 : vector<8x128xf32>
    %214 = math.tanh %213 : vector<8x128xf32>
    %cst_80 = arith.constant 5.000000e-01 : f32
    %215 = vector.broadcast %cst_80 : f32 to vector<8x128xf32>
    %216 = arith.mulf %215, %214 : vector<8x128xf32>
    %cst_81 = arith.constant 5.000000e-01 : f32
    %217 = vector.broadcast %cst_81 : f32 to vector<8x128xf32>
    %218 = arith.addf %216, %217 : vector<8x128xf32>
    %219 = vector.extract_strided_slice %210 {offsets = [0, 128], sizes = [8, 128], strides = [1, 1]} : vector<8x512xf32> to vector<8x128xf32>
    %cst_82 = arith.constant 5.000000e-01 : f32
    %220 = vector.broadcast %cst_82 : f32 to vector<8x128xf32>
    %221 = arith.mulf %220, %219 : vector<8x128xf32>
    %222 = math.tanh %221 : vector<8x128xf32>
    %cst_83 = arith.constant 5.000000e-01 : f32
    %223 = vector.broadcast %cst_83 : f32 to vector<8x128xf32>
    %224 = arith.mulf %223, %222 : vector<8x128xf32>
    %cst_84 = arith.constant 5.000000e-01 : f32
    %225 = vector.broadcast %cst_84 : f32 to vector<8x128xf32>
    %226 = arith.addf %224, %225 : vector<8x128xf32>
    %227 = vector.extract_strided_slice %210 {offsets = [0, 256], sizes = [8, 128], strides = [1, 1]} : vector<8x512xf32> to vector<8x128xf32>
    %228 = math.tanh %227 : vector<8x128xf32>
    %229 = vector.extract_strided_slice %210 {offsets = [0, 384], sizes = [8, 128], strides = [1, 1]} : vector<8x512xf32> to vector<8x128xf32>
    %cst_85 = arith.constant 5.000000e-01 : f32
    %230 = vector.broadcast %cst_85 : f32 to vector<8x128xf32>
    %231 = arith.mulf %230, %229 : vector<8x128xf32>
    %232 = math.tanh %231 : vector<8x128xf32>
    %cst_86 = arith.constant 5.000000e-01 : f32
    %233 = vector.broadcast %cst_86 : f32 to vector<8x128xf32>
    %234 = arith.mulf %233, %232 : vector<8x128xf32>
    %cst_87 = arith.constant 5.000000e-01 : f32
    %235 = vector.broadcast %cst_87 : f32 to vector<8x128xf32>
    %236 = arith.addf %234, %235 : vector<8x128xf32>
    %237 = arith.mulf %226, %199 : vector<8x128xf32>
    %238 = arith.mulf %218, %228 : vector<8x128xf32>
    %239 = arith.addf %237, %238 : vector<8x128xf32>
    %240 = math.tanh %239 : vector<8x128xf32>
    %241 = arith.mulf %236, %240 : vector<8x128xf32>
    %242 = arith.index_cast %c5_i32 : i32 to index
    %c0_88 = arith.constant 0 : index
    %c0_89 = arith.constant 0 : index
    %243 = vector.load %arg6[%242, %c0_88, %c0_89] : memref<8x8x128xf32, #tpu.memory_space<vmem>>, vector<1x8x128xf32>
    %244 = vector.shape_cast %243 : vector<1x8x128xf32> to vector<8x128xf32>
    %245 = vector.shape_cast %241 : vector<8x128xf32> to vector<1x8x128xf32>
    tpu.vector_store %arg6[%242, %c0_88, %c0_89], %245 {strides = array<i32>} : memref<8x8x128xf32, #tpu.memory_space<vmem>>, vector<1x8x128xf32>,
    %c6_i32 = arith.constant 6 : i32
    %cst_90 = arith.constant dense<0.000000e+00> : vector<8x512xf32>
    %246 = tpu.matmul %241, %3, %cst_90 {dimension_numbers = #tpu.dot_dimension_numbers<[1], [0], [0], [1], [0, 0, 1, 1], [], []>} : vector<8x128xf32>, vector<128x512xf32>, vector<8x512xf32> -> vector<8x512xf32>
    %247 = arith.index_cast %c6_i32 : i32 to index
    %c0_91 = arith.constant 0 : index
    %c0_92 = arith.constant 0 : index
    %248 = vector.load %arg2[%247, %c0_91, %c0_92] : memref<8x8x512xf32, #tpu.memory_space<vmem>>, vector<1x8x512xf32>
    %249 = vector.shape_cast %248 : vector<1x8x512xf32> to vector<8x512xf32>
    %250 = arith.addf %249, %246 : vector<8x512xf32>
    %251 = vector.extract_strided_slice %250 {offsets = [0, 0], sizes = [8, 128], strides = [1, 1]} : vector<8x512xf32> to vector<8x128xf32>
    %cst_93 = arith.constant 5.000000e-01 : f32
    %252 = vector.broadcast %cst_93 : f32 to vector<8x128xf32>
    %253 = arith.mulf %252, %251 : vector<8x128xf32>
    %254 = math.tanh %253 : vector<8x128xf32>
    %cst_94 = arith.constant 5.000000e-01 : f32
    %255 = vector.broadcast %cst_94 : f32 to vector<8x128xf32>
    %256 = arith.mulf %255, %254 : vector<8x128xf32>
    %cst_95 = arith.constant 5.000000e-01 : f32
    %257 = vector.broadcast %cst_95 : f32 to vector<8x128xf32>
    %258 = arith.addf %256, %257 : vector<8x128xf32>
    %259 = vector.extract_strided_slice %250 {offsets = [0, 128], sizes = [8, 128], strides = [1, 1]} : vector<8x512xf32> to vector<8x128xf32>
    %cst_96 = arith.constant 5.000000e-01 : f32
    %260 = vector.broadcast %cst_96 : f32 to vector<8x128xf32>
    %261 = arith.mulf %260, %259 : vector<8x128xf32>
    %262 = math.tanh %261 : vector<8x128xf32>
    %cst_97 = arith.constant 5.000000e-01 : f32
    %263 = vector.broadcast %cst_97 : f32 to vector<8x128xf32>
    %264 = arith.mulf %263, %262 : vector<8x128xf32>
    %cst_98 = arith.constant 5.000000e-01 : f32
    %265 = vector.broadcast %cst_98 : f32 to vector<8x128xf32>
    %266 = arith.addf %264, %265 : vector<8x128xf32>
    %267 = vector.extract_strided_slice %250 {offsets = [0, 256], sizes = [8, 128], strides = [1, 1]} : vector<8x512xf32> to vector<8x128xf32>
    %268 = math.tanh %267 : vector<8x128xf32>
    %269 = vector.extract_strided_slice %250 {offsets = [0, 384], sizes = [8, 128], strides = [1, 1]} : vector<8x512xf32> to vector<8x128xf32>
    %cst_99 = arith.constant 5.000000e-01 : f32
    %270 = vector.broadcast %cst_99 : f32 to vector<8x128xf32>
    %271 = arith.mulf %270, %269 : vector<8x128xf32>
    %272 = math.tanh %271 : vector<8x128xf32>
    %cst_100 = arith.constant 5.000000e-01 : f32
    %273 = vector.broadcast %cst_100 : f32 to vector<8x128xf32>
    %274 = arith.mulf %273, %272 : vector<8x128xf32>
    %cst_101 = arith.constant 5.000000e-01 : f32
    %275 = vector.broadcast %cst_101 : f32 to vector<8x128xf32>
    %276 = arith.addf %274, %275 : vector<8x128xf32>
    %277 = arith.mulf %266, %239 : vector<8x128xf32>
    %278 = arith.mulf %258, %268 : vector<8x128xf32>
    %279 = arith.addf %277, %278 : vector<8x128xf32>
    %280 = math.tanh %279 : vector<8x128xf32>
    %281 = arith.mulf %276, %280 : vector<8x128xf32>
    %282 = arith.index_cast %c6_i32 : i32 to index
    %c0_102 = arith.constant 0 : index
    %c0_103 = arith.constant 0 : index
    %283 = vector.load %arg6[%282, %c0_102, %c0_103] : memref<8x8x128xf32, #tpu.memory_space<vmem>>, vector<1x8x128xf32>
    %284 = vector.shape_cast %283 : vector<1x8x128xf32> to vector<8x128xf32>
    %285 = vector.shape_cast %281 : vector<8x128xf32> to vector<1x8x128xf32>
    tpu.vector_store %arg6[%282, %c0_102, %c0_103], %285 {strides = array<i32>} : memref<8x8x128xf32, #tpu.memory_space<vmem>>, vector<1x8x128xf32>,
    %c7_i32 = arith.constant 7 : i32
    %cst_104 = arith.constant dense<0.000000e+00> : vector<8x512xf32>
    %286 = tpu.matmul %281, %3, %cst_104 {dimension_numbers = #tpu.dot_dimension_numbers<[1], [0], [0], [1], [0, 0, 1, 1], [], []>} : vector<8x128xf32>, vector<128x512xf32>, vector<8x512xf32> -> vector<8x512xf32>
    %287 = arith.index_cast %c7_i32 : i32 to index
    %c0_105 = arith.constant 0 : index
    %c0_106 = arith.constant 0 : index
    %288 = vector.load %arg2[%287, %c0_105, %c0_106] : memref<8x8x512xf32, #tpu.memory_space<vmem>>, vector<1x8x512xf32>
    %289 = vector.shape_cast %288 : vector<1x8x512xf32> to vector<8x512xf32>
    %290 = arith.addf %289, %286 : vector<8x512xf32>
    %291 = vector.extract_strided_slice %290 {offsets = [0, 0], sizes = [8, 128], strides = [1, 1]} : vector<8x512xf32> to vector<8x128xf32>
    %cst_107 = arith.constant 5.000000e-01 : f32
    %292 = vector.broadcast %cst_107 : f32 to vector<8x128xf32>
    %293 = arith.mulf %292, %291 : vector<8x128xf32>
    %294 = math.tanh %293 : vector<8x128xf32>
    %cst_108 = arith.constant 5.000000e-01 : f32
    %295 = vector.broadcast %cst_108 : f32 to vector<8x128xf32>
    %296 = arith.mulf %295, %294 : vector<8x128xf32>
    %cst_109 = arith.constant 5.000000e-01 : f32
    %297 = vector.broadcast %cst_109 : f32 to vector<8x128xf32>
    %298 = arith.addf %296, %297 : vector<8x128xf32>
    %299 = vector.extract_strided_slice %290 {offsets = [0, 128], sizes = [8, 128], strides = [1, 1]} : vector<8x512xf32> to vector<8x128xf32>
    %cst_110 = arith.constant 5.000000e-01 : f32
    %300 = vector.broadcast %cst_110 : f32 to vector<8x128xf32>
    %301 = arith.mulf %300, %299 : vector<8x128xf32>
    %302 = math.tanh %301 : vector<8x128xf32>
    %cst_111 = arith.constant 5.000000e-01 : f32
    %303 = vector.broadcast %cst_111 : f32 to vector<8x128xf32>
    %304 = arith.mulf %303, %302 : vector<8x128xf32>
    %cst_112 = arith.constant 5.000000e-01 : f32
    %305 = vector.broadcast %cst_112 : f32 to vector<8x128xf32>
    %306 = arith.addf %304, %305 : vector<8x128xf32>
    %307 = vector.extract_strided_slice %290 {offsets = [0, 256], sizes = [8, 128], strides = [1, 1]} : vector<8x512xf32> to vector<8x128xf32>
    %308 = math.tanh %307 : vector<8x128xf32>
    %309 = vector.extract_strided_slice %290 {offsets = [0, 384], sizes = [8, 128], strides = [1, 1]} : vector<8x512xf32> to vector<8x128xf32>
    %cst_113 = arith.constant 5.000000e-01 : f32
    %310 = vector.broadcast %cst_113 : f32 to vector<8x128xf32>
    %311 = arith.mulf %310, %309 : vector<8x128xf32>
    %312 = math.tanh %311 : vector<8x128xf32>
    %cst_114 = arith.constant 5.000000e-01 : f32
    %313 = vector.broadcast %cst_114 : f32 to vector<8x128xf32>
    %314 = arith.mulf %313, %312 : vector<8x128xf32>
    %cst_115 = arith.constant 5.000000e-01 : f32
    %315 = vector.broadcast %cst_115 : f32 to vector<8x128xf32>
    %316 = arith.addf %314, %315 : vector<8x128xf32>
    %317 = arith.mulf %306, %279 : vector<8x128xf32>
    %318 = arith.mulf %298, %308 : vector<8x128xf32>
    %319 = arith.addf %317, %318 : vector<8x128xf32>
    %320 = math.tanh %319 : vector<8x128xf32>
    %321 = arith.mulf %316, %320 : vector<8x128xf32>
    %322 = arith.index_cast %c7_i32 : i32 to index
    %c0_116 = arith.constant 0 : index
    %c0_117 = arith.constant 0 : index
    %323 = vector.load %arg6[%322, %c0_116, %c0_117] : memref<8x8x128xf32, #tpu.memory_space<vmem>>, vector<1x8x128xf32>
    %324 = vector.shape_cast %323 : vector<1x8x128xf32> to vector<8x128xf32>
    %325 = vector.shape_cast %321 : vector<8x128xf32> to vector<1x8x128xf32>
    tpu.vector_store %arg6[%322, %c0_116, %c0_117], %325 {strides = array<i32>} : memref<8x8x128xf32, #tpu.memory_space<vmem>>, vector<1x8x128xf32>,
    %c8_i32 = arith.constant 8 : i32
    %c0_118 = arith.constant 0 : index
    %c0_119 = arith.constant 0 : index
    %326 = vector.load %arg9[%c0_118, %c0_119] : memref<8x128xf32, #tpu.memory_space<vmem>>, vector<8x128xf32>
    tpu.vector_store %arg9[%c0_118, %c0_119], %321 {strides = array<i32>} : memref<8x128xf32, #tpu.memory_space<vmem>>, vector<8x128xf32>,
    %c0_120 = arith.constant 0 : index
    %c0_121 = arith.constant 0 : index
    %327 = vector.load %arg10[%c0_120, %c0_121] : memref<8x128xf32, #tpu.memory_space<vmem>>, vector<8x128xf32>
    tpu.vector_store %arg10[%c0_120, %c0_121], %319 {strides = array<i32>} : memref<8x128xf32, #tpu.memory_space<vmem>>, vector<8x128xf32>,
    %c0_i32_122 = arith.constant 0 : i32
    %328 = arith.cmpi eq, %arg1, %c0_i32_122 : i32
    %329 = arith.extui %328 : i1 to i32
    %c0_i32_123 = arith.constant 0 : i32
    %330 = arith.cmpi ne, %329, %c0_i32_123 : i32
    scf.if %330 {
      %c0_124 = arith.constant 0 : index
      %c0_125 = arith.constant 0 : index
      %331 = vector.load %arg7[%c0_124, %c0_125] : memref<8x128xf32, #tpu.memory_space<vmem>>, vector<8x128xf32>
      tpu.vector_store %arg7[%c0_124, %c0_125], %321 {strides = array<i32>} : memref<8x128xf32, #tpu.memory_space<vmem>>, vector<8x128xf32>,
      %c0_126 = arith.constant 0 : index
      %c0_127 = arith.constant 0 : index
      %332 = vector.load %arg8[%c0_126, %c0_127] : memref<8x128xf32, #tpu.memory_space<vmem>>, vector<8x128xf32>
      tpu.vector_store %arg8[%c0_126, %c0_127], %319 {strides = array<i32>} : memref<8x128xf32, #tpu.memory_space<vmem>>, vector<8x128xf32>,
    } else {
    }
    return
  }
  func.func @transform_0(%arg0: i32, %arg1: i32) -> (i32, i32, i32) {
    %c0_i32 = arith.constant 0 : i32
    %c0_i32_0 = arith.constant 0 : i32
    return %arg1, %arg0, %c0_i32 : i32, i32, i32
  }
  func.func @transform_1(%arg0: i32, %arg1: i32) -> (i32, i32) {
    %c0_i32 = arith.constant 0 : i32
    %c0_i32_0 = arith.constant 0 : i32
    return %arg0, %c0_i32 : i32, i32
  }
  func.func @transform_2(%arg0: i32, %arg1: i32) -> (i32, i32) {
    %c0_i32 = arith.constant 0 : i32
    %c0_i32_0 = arith.constant 0 : i32
    return %arg0, %c0_i32 : i32, i32
  }
  func.func @transform_3(%arg0: i32, %arg1: i32) -> (i32, i32) {
    %c0_i32 = arith.constant 0 : i32
    %c0_i32_0 = arith.constant 0 : i32
    %c0_i32_1 = arith.constant 0 : i32
    return %c0_i32, %c0_i32_0 : i32, i32
  }
  func.func @transform_4(%arg0: i32, %arg1: i32) -> (i32, i32, i32) {
    %c0_i32 = arith.constant 0 : i32
    %c0_i32_0 = arith.constant 0 : i32
    return %arg1, %arg0, %c0_i32 : i32, i32, i32
  }
  func.func @transform_5(%arg0: i32, %arg1: i32) -> (i32, i32) {
    %c0_i32 = arith.constant 0 : i32
    %c0_i32_0 = arith.constant 0 : i32
    return %arg0, %c0_i32 : i32, i32
  }
  func.func @transform_6(%arg0: i32, %arg1: i32) -> (i32, i32) {
    %c0_i32 = arith.constant 0 : i32
    %c0_i32_0 = arith.constant 0 : i32
    return %arg0, %c0_i32 : i32, i32
  }
}

module attributes {stable_mosaic.version = 11 : i64} {
  func.func @_lstm_recurrence_kernel(%arg0: i32, %arg1: i32, %arg2: memref<8x8x512xf32, #tpu.memory_space<vmem>>, %arg3: memref<8x128xf32, #tpu.memory_space<vmem>>, %arg4: memref<8x128xf32, #tpu.memory_space<vmem>>, %arg5: memref<128x512xf32, #tpu.memory_space<vmem>>, %arg6: memref<8x8x128xf32, #tpu.memory_space<vmem>>, %arg7: memref<8x128xf32, #tpu.memory_space<vmem>>, %arg8: memref<8x128xf32, #tpu.memory_space<vmem>>, %arg9: memref<8x128xf32, #tpu.memory_space<vmem>>, %arg10: memref<8x128xf32, #tpu.memory_space<vmem>>) attributes {dimension_semantics = [#tpu.dimension_semantics<parallel>, #tpu.dimension_semantics<arbitrary>], iteration_bounds = array<i64: 1, 1>, scalar_prefetch = 0 : i64, scratch_operands = 2 : i64, tpu.core_type = #tpu.core_type<tc>, window_params = [{transform_indices = @transform_0, window_bounds = array<i64: 8, 8, 512>}, {transform_indices = @transform_1, window_bounds = array<i64: 8, 128>}, {transform_indices = @transform_2, window_bounds = array<i64: 8, 128>}, {pipeline_mode = #tpu.pipeline_mode<synchronous>, transform_indices = @transform_3, window_bounds = array<i64: 128, 512>}, {transform_indices = @transform_4, window_bounds = array<i64: 8, 8, 128>}, {transform_indices = @transform_5, window_bounds = array<i64: 8, 128>}, {transform_indices = @transform_6, window_bounds = array<i64: 8, 128>}]} {
    %c0_i32 = arith.constant 0 : i32
    %0 = arith.cmpi eq, %arg1, %c0_i32 : i32
    %1 = arith.extui %0 : i1 to i32
    %c0_i32_0 = arith.constant 0 : i32
    %2 = arith.cmpi ne, %1, %c0_i32_0 : i32
    scf.if %2 {
      %c0_124 = arith.constant 0 : index
      %c0_125 = arith.constant 0 : index
      %331 = vector.load %arg3[%c0_124, %c0_125] : memref<8x128xf32, #tpu.memory_space<vmem>>, vector<8x128xf32>
      %c0_126 = arith.constant 0 : index
      %c0_127 = arith.constant 0 : index
      %332 = vector.load %arg9[%c0_126, %c0_127] : memref<8x128xf32, #tpu.memory_space<vmem>>, vector<8x128xf32>
      tpu.vector_store %arg9[%c0_126, %c0_127], %331 {strides = array<i32>} : memref<8x128xf32, #tpu.memory_space<vmem>>, vector<8x128xf32>,
      %c0_128 = arith.constant 0 : index
      %c0_129 = arith.constant 0 : index
      %333 = vector.load %arg4[%c0_128, %c0_129] : memref<8x128xf32, #tpu.memory_space<vmem>>, vector<8x128xf32>
      %c0_130 = arith.constant 0 : index
      %c0_131 = arith.constant 0 : index
      %334 = vector.load %arg10[%c0_130, %c0_131] : memref<8x128xf32, #tpu.memory_space<vmem>>, vector<8x128xf32>
      tpu.vector_store %arg10[%c0_130, %c0_131], %333 {strides = array<i32>} : memref<8x128xf32, #tpu.memory_space<vmem>>, vector<8x128xf32>,
    } else {
    }
    %c0 = arith.constant 0 : index
    %c0_1 = arith.constant 0 : index
    %3 = vector.load %arg5[%c0, %c0_1] : memref<128x512xf32, #tpu.memory_space<vmem>>, vector<128x512xf32>
    %c0_2 = arith.constant 0 : index
    %c0_3 = arith.constant 0 : index
    %4 = vector.load %arg9[%c0_2, %c0_3] : memref<8x128xf32, #tpu.memory_space<vmem>>, vector<8x128xf32>
    %c0_4 = arith.constant 0 : index
    %c0_5 = arith.constant 0 : index
    %5 = vector.load %arg10[%c0_4, %c0_5] : memref<8x128xf32, #tpu.memory_space<vmem>>, vector<8x128xf32>
    %c0_i32_6 = arith.constant 0 : i32
    %cst = arith.constant dense<0.000000e+00> : vector<8x512xf32>
    %6 = tpu.matmul %4, %3, %cst {dimension_numbers = #tpu.dot_dimension_numbers<[1], [0], [0], [1], [0, 0, 1, 1], [], []>} : vector<8x128xf32>, vector<128x512xf32>, vector<8x512xf32> -> vector<8x512xf32>
    %7 = arith.index_cast %c0_i32_6 : i32 to index
    %c0_7 = arith.constant 0 : index
    %c0_8 = arith.constant 0 : index
    %8 = vector.load %arg2[%7, %c0_7, %c0_8] : memref<8x8x512xf32, #tpu.memory_space<vmem>>, vector<1x8x512xf32>
    %9 = vector.shape_cast %8 : vector<1x8x512xf32> to vector<8x512xf32>
    %10 = arith.addf %9, %6 : vector<8x512xf32>
    %11 = vector.extract_strided_slice %10 {offsets = [0, 0], sizes = [8, 128], strides = [1, 1]} : vector<8x512xf32> to vector<8x128xf32>
    %cst_9 = arith.constant 5.000000e-01 : f32
    %12 = vector.broadcast %cst_9 : f32 to vector<8x128xf32>
    %13 = arith.mulf %12, %11 : vector<8x128xf32>
    %14 = math.tanh %13 : vector<8x128xf32>
    %cst_10 = arith.constant 5.000000e-01 : f32
    %15 = vector.broadcast %cst_10 : f32 to vector<8x128xf32>
    %16 = arith.mulf %15, %14 : vector<8x128xf32>
    %cst_11 = arith.constant 5.000000e-01 : f32
    %17 = vector.broadcast %cst_11 : f32 to vector<8x128xf32>
    %18 = arith.addf %16, %17 : vector<8x128xf32>
    %19 = vector.extract_strided_slice %10 {offsets = [0, 128], sizes = [8, 128], strides = [1, 1]} : vector<8x512xf32> to vector<8x128xf32>
    %cst_12 = arith.constant 5.000000e-01 : f32
    %20 = vector.broadcast %cst_12 : f32 to vector<8x128xf32>
    %21 = arith.mulf %20, %19 : vector<8x128xf32>
    %22 = math.tanh %21 : vector<8x128xf32>
    %cst_13 = arith.constant 5.000000e-01 : f32
    %23 = vector.broadcast %cst_13 : f32 to vector<8x128xf32>
    %24 = arith.mulf %23, %22 : vector<8x128xf32>
    %cst_14 = arith.constant 5.000000e-01 : f32
    %25 = vector.broadcast %cst_14 : f32 to vector<8x128xf32>
    %26 = arith.addf %24, %25 : vector<8x128xf32>
    %27 = vector.extract_strided_slice %10 {offsets = [0, 256], sizes = [8, 128], strides = [1, 1]} : vector<8x512xf32> to vector<8x128xf32>
    %28 = math.tanh %27 : vector<8x128xf32>
    %29 = vector.extract_strided_slice %10 {offsets = [0, 384], sizes = [8, 128], strides = [1, 1]} : vector<8x512xf32> to vector<8x128xf32>
    %cst_15 = arith.constant 5.000000e-01 : f32
    %30 = vector.broadcast %cst_15 : f32 to vector<8x128xf32>
    %31 = arith.mulf %30, %29 : vector<8x128xf32>
    %32 = math.tanh %31 : vector<8x128xf32>
    %cst_16 = arith.constant 5.000000e-01 : f32
    %33 = vector.broadcast %cst_16 : f32 to vector<8x128xf32>
    %34 = arith.mulf %33, %32 : vector<8x128xf32>
    %cst_17 = arith.constant 5.000000e-01 : f32
    %35 = vector.broadcast %cst_17 : f32 to vector<8x128xf32>
    %36 = arith.addf %34, %35 : vector<8x128xf32>
    %37 = arith.mulf %26, %5 : vector<8x128xf32>
    %38 = arith.mulf %18, %28 : vector<8x128xf32>
    %39 = arith.addf %37, %38 : vector<8x128xf32>
    %40 = math.tanh %39 : vector<8x128xf32>
    %41 = arith.mulf %36, %40 : vector<8x128xf32>
    %42 = arith.index_cast %c0_i32_6 : i32 to index
    %c0_18 = arith.constant 0 : index
    %c0_19 = arith.constant 0 : index
    %43 = vector.load %arg6[%42, %c0_18, %c0_19] : memref<8x8x128xf32, #tpu.memory_space<vmem>>, vector<1x8x128xf32>
    %44 = vector.shape_cast %43 : vector<1x8x128xf32> to vector<8x128xf32>
    %45 = vector.shape_cast %41 : vector<8x128xf32> to vector<1x8x128xf32>
    tpu.vector_store %arg6[%42, %c0_18, %c0_19], %45 {strides = array<i32>} : memref<8x8x128xf32, #tpu.memory_space<vmem>>, vector<1x8x128xf32>,
    %c1_i32 = arith.constant 1 : i32
    %cst_20 = arith.constant dense<0.000000e+00> : vector<8x512xf32>
    %46 = tpu.matmul %41, %3, %cst_20 {dimension_numbers = #tpu.dot_dimension_numbers<[1], [0], [0], [1], [0, 0, 1, 1], [], []>} : vector<8x128xf32>, vector<128x512xf32>, vector<8x512xf32> -> vector<8x512xf32>
    %47 = arith.index_cast %c1_i32 : i32 to index
    %c0_21 = arith.constant 0 : index
    %c0_22 = arith.constant 0 : index
    %48 = vector.load %arg2[%47, %c0_21, %c0_22] : memref<8x8x512xf32, #tpu.memory_space<vmem>>, vector<1x8x512xf32>
    %49 = vector.shape_cast %48 : vector<1x8x512xf32> to vector<8x512xf32>
    %50 = arith.addf %49, %46 : vector<8x512xf32>
    %51 = vector.extract_strided_slice %50 {offsets = [0, 0], sizes = [8, 128], strides = [1, 1]} : vector<8x512xf32> to vector<8x128xf32>
    %cst_23 = arith.constant 5.000000e-01 : f32
    %52 = vector.broadcast %cst_23 : f32 to vector<8x128xf32>
    %53 = arith.mulf %52, %51 : vector<8x128xf32>
    %54 = math.tanh %53 : vector<8x128xf32>
    %cst_24 = arith.constant 5.000000e-01 : f32
    %55 = vector.broadcast %cst_24 : f32 to vector<8x128xf32>
    %56 = arith.mulf %55, %54 : vector<8x128xf32>
    %cst_25 = arith.constant 5.000000e-01 : f32
    %57 = vector.broadcast %cst_25 : f32 to vector<8x128xf32>
    %58 = arith.addf %56, %57 : vector<8x128xf32>
    %59 = vector.extract_strided_slice %50 {offsets = [0, 128], sizes = [8, 128], strides = [1, 1]} : vector<8x512xf32> to vector<8x128xf32>
    %cst_26 = arith.constant 5.000000e-01 : f32
    %60 = vector.broadcast %cst_26 : f32 to vector<8x128xf32>
    %61 = arith.mulf %60, %59 : vector<8x128xf32>
    %62 = math.tanh %61 : vector<8x128xf32>
    %cst_27 = arith.constant 5.000000e-01 : f32
    %63 = vector.broadcast %cst_27 : f32 to vector<8x128xf32>
    %64 = arith.mulf %63, %62 : vector<8x128xf32>
    %cst_28 = arith.constant 5.000000e-01 : f32
    %65 = vector.broadcast %cst_28 : f32 to vector<8x128xf32>
    %66 = arith.addf %64, %65 : vector<8x128xf32>
    %67 = vector.extract_strided_slice %50 {offsets = [0, 256], sizes = [8, 128], strides = [1, 1]} : vector<8x512xf32> to vector<8x128xf32>
    %68 = math.tanh %67 : vector<8x128xf32>
    %69 = vector.extract_strided_slice %50 {offsets = [0, 384], sizes = [8, 128], strides = [1, 1]} : vector<8x512xf32> to vector<8x128xf32>
    %cst_29 = arith.constant 5.000000e-01 : f32
    %70 = vector.broadcast %cst_29 : f32 to vector<8x128xf32>
    %71 = arith.mulf %70, %69 : vector<8x128xf32>
    %72 = math.tanh %71 : vector<8x128xf32>
    %cst_30 = arith.constant 5.000000e-01 : f32
    %73 = vector.broadcast %cst_30 : f32 to vector<8x128xf32>
    %74 = arith.mulf %73, %72 : vector<8x128xf32>
    %cst_31 = arith.constant 5.000000e-01 : f32
    %75 = vector.broadcast %cst_31 : f32 to vector<8x128xf32>
    %76 = arith.addf %74, %75 : vector<8x128xf32>
    %77 = arith.mulf %66, %39 : vector<8x128xf32>
    %78 = arith.mulf %58, %68 : vector<8x128xf32>
    %79 = arith.addf %77, %78 : vector<8x128xf32>
    %80 = math.tanh %79 : vector<8x128xf32>
    %81 = arith.mulf %76, %80 : vector<8x128xf32>
    %82 = arith.index_cast %c1_i32 : i32 to index
    %c0_32 = arith.constant 0 : index
    %c0_33 = arith.constant 0 : index
    %83 = vector.load %arg6[%82, %c0_32, %c0_33] : memref<8x8x128xf32, #tpu.memory_space<vmem>>, vector<1x8x128xf32>
    %84 = vector.shape_cast %83 : vector<1x8x128xf32> to vector<8x128xf32>
    %85 = vector.shape_cast %81 : vector<8x128xf32> to vector<1x8x128xf32>
    tpu.vector_store %arg6[%82, %c0_32, %c0_33], %85 {strides = array<i32>} : memref<8x8x128xf32, #tpu.memory_space<vmem>>, vector<1x8x128xf32>,
    %c2_i32 = arith.constant 2 : i32
    %cst_34 = arith.constant dense<0.000000e+00> : vector<8x512xf32>
    %86 = tpu.matmul %81, %3, %cst_34 {dimension_numbers = #tpu.dot_dimension_numbers<[1], [0], [0], [1], [0, 0, 1, 1], [], []>} : vector<8x128xf32>, vector<128x512xf32>, vector<8x512xf32> -> vector<8x512xf32>
    %87 = arith.index_cast %c2_i32 : i32 to index
    %c0_35 = arith.constant 0 : index
    %c0_36 = arith.constant 0 : index
    %88 = vector.load %arg2[%87, %c0_35, %c0_36] : memref<8x8x512xf32, #tpu.memory_space<vmem>>, vector<1x8x512xf32>
    %89 = vector.shape_cast %88 : vector<1x8x512xf32> to vector<8x512xf32>
    %90 = arith.addf %89, %86 : vector<8x512xf32>
    %91 = vector.extract_strided_slice %90 {offsets = [0, 0], sizes = [8, 128], strides = [1, 1]} : vector<8x512xf32> to vector<8x128xf32>
    %cst_37 = arith.constant 5.000000e-01 : f32
    %92 = vector.broadcast %cst_37 : f32 to vector<8x128xf32>
    %93 = arith.mulf %92, %91 : vector<8x128xf32>
    %94 = math.tanh %93 : vector<8x128xf32>
    %cst_38 = arith.constant 5.000000e-01 : f32
    %95 = vector.broadcast %cst_38 : f32 to vector<8x128xf32>
    %96 = arith.mulf %95, %94 : vector<8x128xf32>
    %cst_39 = arith.constant 5.000000e-01 : f32
    %97 = vector.broadcast %cst_39 : f32 to vector<8x128xf32>
    %98 = arith.addf %96, %97 : vector<8x128xf32>
    %99 = vector.extract_strided_slice %90 {offsets = [0, 128], sizes = [8, 128], strides = [1, 1]} : vector<8x512xf32> to vector<8x128xf32>
    %cst_40 = arith.constant 5.000000e-01 : f32
    %100 = vector.broadcast %cst_40 : f32 to vector<8x128xf32>
    %101 = arith.mulf %100, %99 : vector<8x128xf32>
    %102 = math.tanh %101 : vector<8x128xf32>
    %cst_41 = arith.constant 5.000000e-01 : f32
    %103 = vector.broadcast %cst_41 : f32 to vector<8x128xf32>
    %104 = arith.mulf %103, %102 : vector<8x128xf32>
    %cst_42 = arith.constant 5.000000e-01 : f32
    %105 = vector.broadcast %cst_42 : f32 to vector<8x128xf32>
    %106 = arith.addf %104, %105 : vector<8x128xf32>
    %107 = vector.extract_strided_slice %90 {offsets = [0, 256], sizes = [8, 128], strides = [1, 1]} : vector<8x512xf32> to vector<8x128xf32>
    %108 = math.tanh %107 : vector<8x128xf32>
    %109 = vector.extract_strided_slice %90 {offsets = [0, 384], sizes = [8, 128], strides = [1, 1]} : vector<8x512xf32> to vector<8x128xf32>
    %cst_43 = arith.constant 5.000000e-01 : f32
    %110 = vector.broadcast %cst_43 : f32 to vector<8x128xf32>
    %111 = arith.mulf %110, %109 : vector<8x128xf32>
    %112 = math.tanh %111 : vector<8x128xf32>
    %cst_44 = arith.constant 5.000000e-01 : f32
    %113 = vector.broadcast %cst_44 : f32 to vector<8x128xf32>
    %114 = arith.mulf %113, %112 : vector<8x128xf32>
    %cst_45 = arith.constant 5.000000e-01 : f32
    %115 = vector.broadcast %cst_45 : f32 to vector<8x128xf32>
    %116 = arith.addf %114, %115 : vector<8x128xf32>
    %117 = arith.mulf %106, %79 : vector<8x128xf32>
    %118 = arith.mulf %98, %108 : vector<8x128xf32>
    %119 = arith.addf %117, %118 : vector<8x128xf32>
    %120 = math.tanh %119 : vector<8x128xf32>
    %121 = arith.mulf %116, %120 : vector<8x128xf32>
    %122 = arith.index_cast %c2_i32 : i32 to index
    %c0_46 = arith.constant 0 : index
    %c0_47 = arith.constant 0 : index
    %123 = vector.load %arg6[%122, %c0_46, %c0_47] : memref<8x8x128xf32, #tpu.memory_space<vmem>>, vector<1x8x128xf32>
    %124 = vector.shape_cast %123 : vector<1x8x128xf32> to vector<8x128xf32>
    %125 = vector.shape_cast %121 : vector<8x128xf32> to vector<1x8x128xf32>
    tpu.vector_store %arg6[%122, %c0_46, %c0_47], %125 {strides = array<i32>} : memref<8x8x128xf32, #tpu.memory_space<vmem>>, vector<1x8x128xf32>,
    %c3_i32 = arith.constant 3 : i32
    %cst_48 = arith.constant dense<0.000000e+00> : vector<8x512xf32>
    %126 = tpu.matmul %121, %3, %cst_48 {dimension_numbers = #tpu.dot_dimension_numbers<[1], [0], [0], [1], [0, 0, 1, 1], [], []>} : vector<8x128xf32>, vector<128x512xf32>, vector<8x512xf32> -> vector<8x512xf32>
    %127 = arith.index_cast %c3_i32 : i32 to index
    %c0_49 = arith.constant 0 : index
    %c0_50 = arith.constant 0 : index
    %128 = vector.load %arg2[%127, %c0_49, %c0_50] : memref<8x8x512xf32, #tpu.memory_space<vmem>>, vector<1x8x512xf32>
    %129 = vector.shape_cast %128 : vector<1x8x512xf32> to vector<8x512xf32>
    %130 = arith.addf %129, %126 : vector<8x512xf32>
    %131 = vector.extract_strided_slice %130 {offsets = [0, 0], sizes = [8, 128], strides = [1, 1]} : vector<8x512xf32> to vector<8x128xf32>
    %cst_51 = arith.constant 5.000000e-01 : f32
    %132 = vector.broadcast %cst_51 : f32 to vector<8x128xf32>
    %133 = arith.mulf %132, %131 : vector<8x128xf32>
    %134 = math.tanh %133 : vector<8x128xf32>
    %cst_52 = arith.constant 5.000000e-01 : f32
    %135 = vector.broadcast %cst_52 : f32 to vector<8x128xf32>
    %136 = arith.mulf %135, %134 : vector<8x128xf32>
    %cst_53 = arith.constant 5.000000e-01 : f32
    %137 = vector.broadcast %cst_53 : f32 to vector<8x128xf32>
    %138 = arith.addf %136, %137 : vector<8x128xf32>
    %139 = vector.extract_strided_slice %130 {offsets = [0, 128], sizes = [8, 128], strides = [1, 1]} : vector<8x512xf32> to vector<8x128xf32>
    %cst_54 = arith.constant 5.000000e-01 : f32
    %140 = vector.broadcast %cst_54 : f32 to vector<8x128xf32>
    %141 = arith.mulf %140, %139 : vector<8x128xf32>
    %142 = math.tanh %141 : vector<8x128xf32>
    %cst_55 = arith.constant 5.000000e-01 : f32
    %143 = vector.broadcast %cst_55 : f32 to vector<8x128xf32>
    %144 = arith.mulf %143, %142 : vector<8x128xf32>
    %cst_56 = arith.constant 5.000000e-01 : f32
    %145 = vector.broadcast %cst_56 : f32 to vector<8x128xf32>
    %146 = arith.addf %144, %145 : vector<8x128xf32>
    %147 = vector.extract_strided_slice %130 {offsets = [0, 256], sizes = [8, 128], strides = [1, 1]} : vector<8x512xf32> to vector<8x128xf32>
    %148 = math.tanh %147 : vector<8x128xf32>
    %149 = vector.extract_strided_slice %130 {offsets = [0, 384], sizes = [8, 128], strides = [1, 1]} : vector<8x512xf32> to vector<8x128xf32>
    %cst_57 = arith.constant 5.000000e-01 : f32
    %150 = vector.broadcast %cst_57 : f32 to vector<8x128xf32>
    %151 = arith.mulf %150, %149 : vector<8x128xf32>
    %152 = math.tanh %151 : vector<8x128xf32>
    %cst_58 = arith.constant 5.000000e-01 : f32
    %153 = vector.broadcast %cst_58 : f32 to vector<8x128xf32>
    %154 = arith.mulf %153, %152 : vector<8x128xf32>
    %cst_59 = arith.constant 5.000000e-01 : f32
    %155 = vector.broadcast %cst_59 : f32 to vector<8x128xf32>
    %156 = arith.addf %154, %155 : vector<8x128xf32>
    %157 = arith.mulf %146, %119 : vector<8x128xf32>
    %158 = arith.mulf %138, %148 : vector<8x128xf32>
    %159 = arith.addf %157, %158 : vector<8x128xf32>
    %160 = math.tanh %159 : vector<8x128xf32>
    %161 = arith.mulf %156, %160 : vector<8x128xf32>
    %162 = arith.index_cast %c3_i32 : i32 to index
    %c0_60 = arith.constant 0 : index
    %c0_61 = arith.constant 0 : index
    %163 = vector.load %arg6[%162, %c0_60, %c0_61] : memref<8x8x128xf32, #tpu.memory_space<vmem>>, vector<1x8x128xf32>
    %164 = vector.shape_cast %163 : vector<1x8x128xf32> to vector<8x128xf32>
    %165 = vector.shape_cast %161 : vector<8x128xf32> to vector<1x8x128xf32>
    tpu.vector_store %arg6[%162, %c0_60, %c0_61], %165 {strides = array<i32>} : memref<8x8x128xf32, #tpu.memory_space<vmem>>, vector<1x8x128xf32>,
    %c4_i32 = arith.constant 4 : i32
    %cst_62 = arith.constant dense<0.000000e+00> : vector<8x512xf32>
    %166 = tpu.matmul %161, %3, %cst_62 {dimension_numbers = #tpu.dot_dimension_numbers<[1], [0], [0], [1], [0, 0, 1, 1], [], []>} : vector<8x128xf32>, vector<128x512xf32>, vector<8x512xf32> -> vector<8x512xf32>
    %167 = arith.index_cast %c4_i32 : i32 to index
    %c0_63 = arith.constant 0 : index
    %c0_64 = arith.constant 0 : index
    %168 = vector.load %arg2[%167, %c0_63, %c0_64] : memref<8x8x512xf32, #tpu.memory_space<vmem>>, vector<1x8x512xf32>
    %169 = vector.shape_cast %168 : vector<1x8x512xf32> to vector<8x512xf32>
    %170 = arith.addf %169, %166 : vector<8x512xf32>
    %171 = vector.extract_strided_slice %170 {offsets = [0, 0], sizes = [8, 128], strides = [1, 1]} : vector<8x512xf32> to vector<8x128xf32>
    %cst_65 = arith.constant 5.000000e-01 : f32
    %172 = vector.broadcast %cst_65 : f32 to vector<8x128xf32>
    %173 = arith.mulf %172, %171 : vector<8x128xf32>
    %174 = math.tanh %173 : vector<8x128xf32>
    %cst_66 = arith.constant 5.000000e-01 : f32
    %175 = vector.broadcast %cst_66 : f32 to vector<8x128xf32>
    %176 = arith.mulf %175, %174 : vector<8x128xf32>
    %cst_67 = arith.constant 5.000000e-01 : f32
    %177 = vector.broadcast %cst_67 : f32 to vector<8x128xf32>
    %178 = arith.addf %176, %177 : vector<8x128xf32>
    %179 = vector.extract_strided_slice %170 {offsets = [0, 128], sizes = [8, 128], strides = [1, 1]} : vector<8x512xf32> to vector<8x128xf32>
    %cst_68 = arith.constant 5.000000e-01 : f32
    %180 = vector.broadcast %cst_68 : f32 to vector<8x128xf32>
    %181 = arith.mulf %180, %179 : vector<8x128xf32>
    %182 = math.tanh %181 : vector<8x128xf32>
    %cst_69 = arith.constant 5.000000e-01 : f32
    %183 = vector.broadcast %cst_69 : f32 to vector<8x128xf32>
    %184 = arith.mulf %183, %182 : vector<8x128xf32>
    %cst_70 = arith.constant 5.000000e-01 : f32
    %185 = vector.broadcast %cst_70 : f32 to vector<8x128xf32>
    %186 = arith.addf %184, %185 : vector<8x128xf32>
    %187 = vector.extract_strided_slice %170 {offsets = [0, 256], sizes = [8, 128], strides = [1, 1]} : vector<8x512xf32> to vector<8x128xf32>
    %188 = math.tanh %187 : vector<8x128xf32>
    %189 = vector.extract_strided_slice %170 {offsets = [0, 384], sizes = [8, 128], strides = [1, 1]} : vector<8x512xf32> to vector<8x128xf32>
    %cst_71 = arith.constant 5.000000e-01 : f32
    %190 = vector.broadcast %cst_71 : f32 to vector<8x128xf32>
    %191 = arith.mulf %190, %189 : vector<8x128xf32>
    %192 = math.tanh %191 : vector<8x128xf32>
    %cst_72 = arith.constant 5.000000e-01 : f32
    %193 = vector.broadcast %cst_72 : f32 to vector<8x128xf32>
    %194 = arith.mulf %193, %192 : vector<8x128xf32>
    %cst_73 = arith.constant 5.000000e-01 : f32
    %195 = vector.broadcast %cst_73 : f32 to vector<8x128xf32>
    %196 = arith.addf %194, %195 : vector<8x128xf32>
    %197 = arith.mulf %186, %159 : vector<8x128xf32>
    %198 = arith.mulf %178, %188 : vector<8x128xf32>
    %199 = arith.addf %197, %198 : vector<8x128xf32>
    %200 = math.tanh %199 : vector<8x128xf32>
    %201 = arith.mulf %196, %200 : vector<8x128xf32>
    %202 = arith.index_cast %c4_i32 : i32 to index
    %c0_74 = arith.constant 0 : index
    %c0_75 = arith.constant 0 : index
    %203 = vector.load %arg6[%202, %c0_74, %c0_75] : memref<8x8x128xf32, #tpu.memory_space<vmem>>, vector<1x8x128xf32>
    %204 = vector.shape_cast %203 : vector<1x8x128xf32> to vector<8x128xf32>
    %205 = vector.shape_cast %201 : vector<8x128xf32> to vector<1x8x128xf32>
    tpu.vector_store %arg6[%202, %c0_74, %c0_75], %205 {strides = array<i32>} : memref<8x8x128xf32, #tpu.memory_space<vmem>>, vector<1x8x128xf32>,
    %c5_i32 = arith.constant 5 : i32
    %cst_76 = arith.constant dense<0.000000e+00> : vector<8x512xf32>
    %206 = tpu.matmul %201, %3, %cst_76 {dimension_numbers = #tpu.dot_dimension_numbers<[1], [0], [0], [1], [0, 0, 1, 1], [], []>} : vector<8x128xf32>, vector<128x512xf32>, vector<8x512xf32> -> vector<8x512xf32>
    %207 = arith.index_cast %c5_i32 : i32 to index
    %c0_77 = arith.constant 0 : index
    %c0_78 = arith.constant 0 : index
    %208 = vector.load %arg2[%207, %c0_77, %c0_78] : memref<8x8x512xf32, #tpu.memory_space<vmem>>, vector<1x8x512xf32>
    %209 = vector.shape_cast %208 : vector<1x8x512xf32> to vector<8x512xf32>
    %210 = arith.addf %209, %206 : vector<8x512xf32>
    %211 = vector.extract_strided_slice %210 {offsets = [0, 0], sizes = [8, 128], strides = [1, 1]} : vector<8x512xf32> to vector<8x128xf32>
    %cst_79 = arith.constant 5.000000e-01 : f32
    %212 = vector.broadcast %cst_79 : f32 to vector<8x128xf32>
    %213 = arith.mulf %212, %211 : vector<8x128xf32>
    %214 = math.tanh %213 : vector<8x128xf32>
    %cst_80 = arith.constant 5.000000e-01 : f32
    %215 = vector.broadcast %cst_80 : f32 to vector<8x128xf32>
    %216 = arith.mulf %215, %214 : vector<8x128xf32>
    %cst_81 = arith.constant 5.000000e-01 : f32
    %217 = vector.broadcast %cst_81 : f32 to vector<8x128xf32>
    %218 = arith.addf %216, %217 : vector<8x128xf32>
    %219 = vector.extract_strided_slice %210 {offsets = [0, 128], sizes = [8, 128], strides = [1, 1]} : vector<8x512xf32> to vector<8x128xf32>
    %cst_82 = arith.constant 5.000000e-01 : f32
    %220 = vector.broadcast %cst_82 : f32 to vector<8x128xf32>
    %221 = arith.mulf %220, %219 : vector<8x128xf32>
    %222 = math.tanh %221 : vector<8x128xf32>
    %cst_83 = arith.constant 5.000000e-01 : f32
    %223 = vector.broadcast %cst_83 : f32 to vector<8x128xf32>
    %224 = arith.mulf %223, %222 : vector<8x128xf32>
    %cst_84 = arith.constant 5.000000e-01 : f32
    %225 = vector.broadcast %cst_84 : f32 to vector<8x128xf32>
    %226 = arith.addf %224, %225 : vector<8x128xf32>
    %227 = vector.extract_strided_slice %210 {offsets = [0, 256], sizes = [8, 128], strides = [1, 1]} : vector<8x512xf32> to vector<8x128xf32>
    %228 = math.tanh %227 : vector<8x128xf32>
    %229 = vector.extract_strided_slice %210 {offsets = [0, 384], sizes = [8, 128], strides = [1, 1]} : vector<8x512xf32> to vector<8x128xf32>
    %cst_85 = arith.constant 5.000000e-01 : f32
    %230 = vector.broadcast %cst_85 : f32 to vector<8x128xf32>
    %231 = arith.mulf %230, %229 : vector<8x128xf32>
    %232 = math.tanh %231 : vector<8x128xf32>
    %cst_86 = arith.constant 5.000000e-01 : f32
    %233 = vector.broadcast %cst_86 : f32 to vector<8x128xf32>
    %234 = arith.mulf %233, %232 : vector<8x128xf32>
    %cst_87 = arith.constant 5.000000e-01 : f32
    %235 = vector.broadcast %cst_87 : f32 to vector<8x128xf32>
    %236 = arith.addf %234, %235 : vector<8x128xf32>
    %237 = arith.mulf %226, %199 : vector<8x128xf32>
    %238 = arith.mulf %218, %228 : vector<8x128xf32>
    %239 = arith.addf %237, %238 : vector<8x128xf32>
    %240 = math.tanh %239 : vector<8x128xf32>
    %241 = arith.mulf %236, %240 : vector<8x128xf32>
    %242 = arith.index_cast %c5_i32 : i32 to index
    %c0_88 = arith.constant 0 : index
    %c0_89 = arith.constant 0 : index
    %243 = vector.load %arg6[%242, %c0_88, %c0_89] : memref<8x8x128xf32, #tpu.memory_space<vmem>>, vector<1x8x128xf32>
    %244 = vector.shape_cast %243 : vector<1x8x128xf32> to vector<8x128xf32>
    %245 = vector.shape_cast %241 : vector<8x128xf32> to vector<1x8x128xf32>
    tpu.vector_store %arg6[%242, %c0_88, %c0_89], %245 {strides = array<i32>} : memref<8x8x128xf32, #tpu.memory_space<vmem>>, vector<1x8x128xf32>,
    %c6_i32 = arith.constant 6 : i32
    %cst_90 = arith.constant dense<0.000000e+00> : vector<8x512xf32>
    %246 = tpu.matmul %241, %3, %cst_90 {dimension_numbers = #tpu.dot_dimension_numbers<[1], [0], [0], [1], [0, 0, 1, 1], [], []>} : vector<8x128xf32>, vector<128x512xf32>, vector<8x512xf32> -> vector<8x512xf32>
    %247 = arith.index_cast %c6_i32 : i32 to index
    %c0_91 = arith.constant 0 : index
    %c0_92 = arith.constant 0 : index
    %248 = vector.load %arg2[%247, %c0_91, %c0_92] : memref<8x8x512xf32, #tpu.memory_space<vmem>>, vector<1x8x512xf32>
    %249 = vector.shape_cast %248 : vector<1x8x512xf32> to vector<8x512xf32>
    %250 = arith.addf %249, %246 : vector<8x512xf32>
    %251 = vector.extract_strided_slice %250 {offsets = [0, 0], sizes = [8, 128], strides = [1, 1]} : vector<8x512xf32> to vector<8x128xf32>
    %cst_93 = arith.constant 5.000000e-01 : f32
    %252 = vector.broadcast %cst_93 : f32 to vector<8x128xf32>
    %253 = arith.mulf %252, %251 : vector<8x128xf32>
    %254 = math.tanh %253 : vector<8x128xf32>
    %cst_94 = arith.constant 5.000000e-01 : f32
    %255 = vector.broadcast %cst_94 : f32 to vector<8x128xf32>
    %256 = arith.mulf %255, %254 : vector<8x128xf32>
    %cst_95 = arith.constant 5.000000e-01 : f32
    %257 = vector.broadcast %cst_95 : f32 to vector<8x128xf32>
    %258 = arith.addf %256, %257 : vector<8x128xf32>
    %259 = vector.extract_strided_slice %250 {offsets = [0, 128], sizes = [8, 128], strides = [1, 1]} : vector<8x512xf32> to vector<8x128xf32>
    %cst_96 = arith.constant 5.000000e-01 : f32
    %260 = vector.broadcast %cst_96 : f32 to vector<8x128xf32>
    %261 = arith.mulf %260, %259 : vector<8x128xf32>
    %262 = math.tanh %261 : vector<8x128xf32>
    %cst_97 = arith.constant 5.000000e-01 : f32
    %263 = vector.broadcast %cst_97 : f32 to vector<8x128xf32>
    %264 = arith.mulf %263, %262 : vector<8x128xf32>
    %cst_98 = arith.constant 5.000000e-01 : f32
    %265 = vector.broadcast %cst_98 : f32 to vector<8x128xf32>
    %266 = arith.addf %264, %265 : vector<8x128xf32>
    %267 = vector.extract_strided_slice %250 {offsets = [0, 256], sizes = [8, 128], strides = [1, 1]} : vector<8x512xf32> to vector<8x128xf32>
    %268 = math.tanh %267 : vector<8x128xf32>
    %269 = vector.extract_strided_slice %250 {offsets = [0, 384], sizes = [8, 128], strides = [1, 1]} : vector<8x512xf32> to vector<8x128xf32>
    %cst_99 = arith.constant 5.000000e-01 : f32
    %270 = vector.broadcast %cst_99 : f32 to vector<8x128xf32>
    %271 = arith.mulf %270, %269 : vector<8x128xf32>
    %272 = math.tanh %271 : vector<8x128xf32>
    %cst_100 = arith.constant 5.000000e-01 : f32
    %273 = vector.broadcast %cst_100 : f32 to vector<8x128xf32>
    %274 = arith.mulf %273, %272 : vector<8x128xf32>
    %cst_101 = arith.constant 5.000000e-01 : f32
    %275 = vector.broadcast %cst_101 : f32 to vector<8x128xf32>
    %276 = arith.addf %274, %275 : vector<8x128xf32>
    %277 = arith.mulf %266, %239 : vector<8x128xf32>
    %278 = arith.mulf %258, %268 : vector<8x128xf32>
    %279 = arith.addf %277, %278 : vector<8x128xf32>
    %280 = math.tanh %279 : vector<8x128xf32>
    %281 = arith.mulf %276, %280 : vector<8x128xf32>
    %282 = arith.index_cast %c6_i32 : i32 to index
    %c0_102 = arith.constant 0 : index
    %c0_103 = arith.constant 0 : index
    %283 = vector.load %arg6[%282, %c0_102, %c0_103] : memref<8x8x128xf32, #tpu.memory_space<vmem>>, vector<1x8x128xf32>
    %284 = vector.shape_cast %283 : vector<1x8x128xf32> to vector<8x128xf32>
    %285 = vector.shape_cast %281 : vector<8x128xf32> to vector<1x8x128xf32>
    tpu.vector_store %arg6[%282, %c0_102, %c0_103], %285 {strides = array<i32>} : memref<8x8x128xf32, #tpu.memory_space<vmem>>, vector<1x8x128xf32>,
    %c7_i32 = arith.constant 7 : i32
    %cst_104 = arith.constant dense<0.000000e+00> : vector<8x512xf32>
    %286 = tpu.matmul %281, %3, %cst_104 {dimension_numbers = #tpu.dot_dimension_numbers<[1], [0], [0], [1], [0, 0, 1, 1], [], []>} : vector<8x128xf32>, vector<128x512xf32>, vector<8x512xf32> -> vector<8x512xf32>
    %287 = arith.index_cast %c7_i32 : i32 to index
    %c0_105 = arith.constant 0 : index
    %c0_106 = arith.constant 0 : index
    %288 = vector.load %arg2[%287, %c0_105, %c0_106] : memref<8x8x512xf32, #tpu.memory_space<vmem>>, vector<1x8x512xf32>
    %289 = vector.shape_cast %288 : vector<1x8x512xf32> to vector<8x512xf32>
    %290 = arith.addf %289, %286 : vector<8x512xf32>
    %291 = vector.extract_strided_slice %290 {offsets = [0, 0], sizes = [8, 128], strides = [1, 1]} : vector<8x512xf32> to vector<8x128xf32>
    %cst_107 = arith.constant 5.000000e-01 : f32
    %292 = vector.broadcast %cst_107 : f32 to vector<8x128xf32>
    %293 = arith.mulf %292, %291 : vector<8x128xf32>
    %294 = math.tanh %293 : vector<8x128xf32>
    %cst_108 = arith.constant 5.000000e-01 : f32
    %295 = vector.broadcast %cst_108 : f32 to vector<8x128xf32>
    %296 = arith.mulf %295, %294 : vector<8x128xf32>
    %cst_109 = arith.constant 5.000000e-01 : f32
    %297 = vector.broadcast %cst_109 : f32 to vector<8x128xf32>
    %298 = arith.addf %296, %297 : vector<8x128xf32>
    %299 = vector.extract_strided_slice %290 {offsets = [0, 128], sizes = [8, 128], strides = [1, 1]} : vector<8x512xf32> to vector<8x128xf32>
    %cst_110 = arith.constant 5.000000e-01 : f32
    %300 = vector.broadcast %cst_110 : f32 to vector<8x128xf32>
    %301 = arith.mulf %300, %299 : vector<8x128xf32>
    %302 = math.tanh %301 : vector<8x128xf32>
    %cst_111 = arith.constant 5.000000e-01 : f32
    %303 = vector.broadcast %cst_111 : f32 to vector<8x128xf32>
    %304 = arith.mulf %303, %302 : vector<8x128xf32>
    %cst_112 = arith.constant 5.000000e-01 : f32
    %305 = vector.broadcast %cst_112 : f32 to vector<8x128xf32>
    %306 = arith.addf %304, %305 : vector<8x128xf32>
    %307 = vector.extract_strided_slice %290 {offsets = [0, 256], sizes = [8, 128], strides = [1, 1]} : vector<8x512xf32> to vector<8x128xf32>
    %308 = math.tanh %307 : vector<8x128xf32>
    %309 = vector.extract_strided_slice %290 {offsets = [0, 384], sizes = [8, 128], strides = [1, 1]} : vector<8x512xf32> to vector<8x128xf32>
    %cst_113 = arith.constant 5.000000e-01 : f32
    %310 = vector.broadcast %cst_113 : f32 to vector<8x128xf32>
    %311 = arith.mulf %310, %309 : vector<8x128xf32>
    %312 = math.tanh %311 : vector<8x128xf32>
    %cst_114 = arith.constant 5.000000e-01 : f32
    %313 = vector.broadcast %cst_114 : f32 to vector<8x128xf32>
    %314 = arith.mulf %313, %312 : vector<8x128xf32>
    %cst_115 = arith.constant 5.000000e-01 : f32
    %315 = vector.broadcast %cst_115 : f32 to vector<8x128xf32>
    %316 = arith.addf %314, %315 : vector<8x128xf32>
    %317 = arith.mulf %306, %279 : vector<8x128xf32>
    %318 = arith.mulf %298, %308 : vector<8x128xf32>
    %319 = arith.addf %317, %318 : vector<8x128xf32>
    %320 = math.tanh %319 : vector<8x128xf32>
    %321 = arith.mulf %316, %320 : vector<8x128xf32>
    %322 = arith.index_cast %c7_i32 : i32 to index
    %c0_116 = arith.constant 0 : index
    %c0_117 = arith.constant 0 : index
    %323 = vector.load %arg6[%322, %c0_116, %c0_117] : memref<8x8x128xf32, #tpu.memory_space<vmem>>, vector<1x8x128xf32>
    %324 = vector.shape_cast %323 : vector<1x8x128xf32> to vector<8x128xf32>
    %325 = vector.shape_cast %321 : vector<8x128xf32> to vector<1x8x128xf32>
    tpu.vector_store %arg6[%322, %c0_116, %c0_117], %325 {strides = array<i32>} : memref<8x8x128xf32, #tpu.memory_space<vmem>>, vector<1x8x128xf32>,
    %c8_i32 = arith.constant 8 : i32
    %c0_118 = arith.constant 0 : index
    %c0_119 = arith.constant 0 : index
    %326 = vector.load %arg9[%c0_118, %c0_119] : memref<8x128xf32, #tpu.memory_space<vmem>>, vector<8x128xf32>
    tpu.vector_store %arg9[%c0_118, %c0_119], %321 {strides = array<i32>} : memref<8x128xf32, #tpu.memory_space<vmem>>, vector<8x128xf32>,
    %c0_120 = arith.constant 0 : index
    %c0_121 = arith.constant 0 : index
    %327 = vector.load %arg10[%c0_120, %c0_121] : memref<8x128xf32, #tpu.memory_space<vmem>>, vector<8x128xf32>
    tpu.vector_store %arg10[%c0_120, %c0_121], %319 {strides = array<i32>} : memref<8x128xf32, #tpu.memory_space<vmem>>, vector<8x128xf32>,
    %c0_i32_122 = arith.constant 0 : i32
    %328 = arith.cmpi eq, %arg1, %c0_i32_122 : i32
    %329 = arith.extui %328 : i1 to i32
    %c0_i32_123 = arith.constant 0 : i32
    %330 = arith.cmpi ne, %329, %c0_i32_123 : i32
    scf.if %330 {
      %c0_124 = arith.constant 0 : index
      %c0_125 = arith.constant 0 : index
      %331 = vector.load %arg7[%c0_124, %c0_125] : memref<8x128xf32, #tpu.memory_space<vmem>>, vector<8x128xf32>
      tpu.vector_store %arg7[%c0_124, %c0_125], %321 {strides = array<i32>} : memref<8x128xf32, #tpu.memory_space<vmem>>, vector<8x128xf32>,
      %c0_126 = arith.constant 0 : index
      %c0_127 = arith.constant 0 : index
      %332 = vector.load %arg8[%c0_126, %c0_127] : memref<8x128xf32, #tpu.memory_space<vmem>>, vector<8x128xf32>
      tpu.vector_store %arg8[%c0_126, %c0_127], %319 {strides = array<i32>} : memref<8x128xf32, #tpu.memory_space<vmem>>, vector<8x128xf32>,
    } else {
    }
    return
  }
  func.func @transform_0(%arg0: i32, %arg1: i32) -> (i32, i32, i32) {
    %c0_i32 = arith.constant 0 : i32
    %c0_i32_0 = arith.constant 0 : i32
    return %arg1, %arg0, %c0_i32 : i32, i32, i32
  }
  func.func @transform_1(%arg0: i32, %arg1: i32) -> (i32, i32) {
    %c0_i32 = arith.constant 0 : i32
    %c0_i32_0 = arith.constant 0 : i32
    return %arg0, %c0_i32 : i32, i32
  }
  func.func @transform_2(%arg0: i32, %arg1: i32) -> (i32, i32) {
    %c0_i32 = arith.constant 0 : i32
    %c0_i32_0 = arith.constant 0 : i32
    return %arg0, %c0_i32 : i32, i32
  }
  func.func @transform_3(%arg0: i32, %arg1: i32) -> (i32, i32) {
    %c0_i32 = arith.constant 0 : i32
    %c0_i32_0 = arith.constant 0 : i32
    %c0_i32_1 = arith.constant 0 : i32
    return %c0_i32, %c0_i32_0 : i32, i32
  }
  func.func @transform_4(%arg0: i32, %arg1: i32) -> (i32, i32, i32) {
    %c0_i32 = arith.constant 0 : i32
    %c0_i32_0 = arith.constant 0 : i32
    return %arg1, %arg0, %c0_i32 : i32, i32, i32
  }
  func.func @transform_5(%arg0: i32, %arg1: i32) -> (i32, i32) {
    %c0_i32 = arith.constant 0 : i32
    %c0_i32_0 = arith.constant 0 : i32
    return %arg0, %c0_i32 : i32, i32
  }
  func.func @transform_6(%arg0: i32, %arg1: i32) -> (i32, i32) {
    %c0_i32 = arith.constant 0 : i32
    %c0_i32_0 = arith.constant 0 : i32
    return %arg0, %c0_i32 : i32, i32
  }
}

</mosaic_0001>

<llo_original>
// kernel: tpu_custom_call.1
$region0: #{tpu_custom_call.1}
  #allocation0 [shape = 'u32[]', space=smem, size = 0x4, offset = 0x4, fixed_abs, tag = 'smem constant byte address 0x4 - core index']
  #allocation1 [shape = 'u32[72,128]{1,0:T(1,128)}', space=vmem, size = 0x9000, scoped, tag = 'internal scratch']
  #allocation2 [shape = 'f32[8,128]{1,0:T(8,128)}', space=vmem, size = 0x1000, scoped, tag = 'scratch operand']
  #allocation3 [shape = 'f32[8,128]{1,0:T(8,128)}', space=vmem, size = 0x1000, scoped, tag = 'scratch operand']
  %s0 = inlined_call_operand.hbm [shape: f32[8,8,512], index: 0, kind: input, shape index: {}]
  %s1 = inlined_call_operand.hbm [shape: f32[8,128], index: 1, kind: input, shape index: {}]
  %s2 = inlined_call_operand.hbm [shape: f32[8,128], index: 2, kind: input, shape index: {}]
  %s3 = inlined_call_operand.hbm [shape: f32[128,512], index: 3, kind: input, shape index: {}]
  %s4 = inlined_call_operand.hbm [shape: f32[8,8,128], index: 4, kind: output, shape index: {0}]
  %s5 = inlined_call_operand.hbm [shape: f32[8,128], index: 5, kind: output, shape index: {1}]
  %s6 = inlined_call_operand.hbm [shape: f32[8,128], index: 6, kind: output, shape index: {2}]
  %7 = xla_tuple %s4, %s5, %s6
  %s8 = sld [smem:[#allocation0]]
  $region66: #{tpu_custom_call.1} parent=0
    _
  %s10 = ssub.s32 1, %s8
  %s11 = scalar_select 0, %s10, %s8
  $region1: #{tpu_custom_call.1} parent=0
    #allocation4 [shape = 'u8[131072]{0}', space=vmem, size = 0x20000, scoped, tag = 'input window, operand 0, single buffered']
    #allocation5 [shape = 's32[1]{0}', space=sflag, size = 0x4, scoped, tag = 'scoped memory for tpu_custom_call.1']
    #allocation6 [shape = 's32[1]{0}', space=sflag, size = 0x4, scoped, tag = 'scoped memory for tpu_custom_call.1']
    #allocation7 [shape = 'u8[4096]{0}', space=vmem, size = 0x1000, scoped, tag = 'input window, operand 1, single buffered']
    #allocation8 [shape = 's32[1]{0}', space=sflag, size = 0x4, scoped, tag = 'scoped memory for tpu_custom_call.1']
    #allocation9 [shape = 'u8[4096]{0}', space=vmem, size = 0x1000, scoped, tag = 'input window, operand 2, single buffered']
    #allocation10 [shape = 'u8[262144]{0}', space=vmem, size = 0x40000, scoped, tag = 'input window, operand 3, single buffered']
    #allocation11 [shape = 's32[1]{0}', space=sflag, size = 0x4, scoped, tag = 'scoped memory for tpu_custom_call.1']
    #allocation12 [shape = 'u8[32768]{0}', space=vmem, size = 0x8000, scoped, tag = 'output window, operand 0, single buffered']
    #allocation13 [shape = 'u8[4096]{0}', space=vmem, size = 0x1000, scoped, tag = 'output window, operand 1, single buffered']
    #allocation14 [shape = 's32[1]{0}', space=sflag, size = 0x4, scoped, tag = 'scoped memory for tpu_custom_call.1']
    #allocation15 [shape = 'u8[4096]{0}', space=vmem, size = 0x1000, scoped, tag = 'output window, operand 2, single buffered']
    %12 = vsyncpa [#allocation5], 0
    %13 = vsyncpa [#allocation8], 0
    %14 = vsyncpa [#allocation11], 0
    %15 = vsyncpa [#allocation6], 0
    %16 = vsyncpa [#allocation14], 0
    // Predicated region
    $region2: #{tpu_custom_call.1} parent=1 // pred_check
      _
    $region3: #{tpu_custom_call.1} parent=1 // pred_check_branch
      %18 = sbr.rel (0) target = $region5
    $region4: #{tpu_custom_call.1} parent=1 // pred_region
      %20 = vsyncadd [#allocation5], 0
      %s21 = sshll.u32 %s0, 4
      %s22 = int_to_ptr.hbm [resolvable:$true] %s21
      %s23 = sshll.u32 [#allocation4], 4
      %s24 = int_to_ptr.vmem [resolvable:$true] %s23
      %29 = dma.hbm_to_vmem [thread:$0]  %s22, 4096, %s24, [#allocation5], 512, 512, 32
    $region5: #{tpu_custom_call.1} parent=1 // pred_fallthru
      _
    // Predicated region
    $region6: #{tpu_custom_call.1} parent=1 // pred_check
      _
    $region7: #{tpu_custom_call.1} parent=1 // pred_check_branch
      %31 = sbr.rel (0) target = $region9
    $region8: #{tpu_custom_call.1} parent=1 // pred_region
      %33 = vsyncadd [#allocation8], 0
      %s35 = sshll.u32 %s1, 4
      %s36 = int_to_ptr.hbm [resolvable:$true] %s35
      %s37 = sshll.u32 [#allocation7], 4
      %s38 = int_to_ptr.vmem [resolvable:$true] %s37
      %40 = dma.hbm_to_vmem [thread:$0]  %s36, 128, %s38, [#allocation8]
    $region9: #{tpu_custom_call.1} parent=1 // pred_fallthru
      _
    // Predicated region
    $region10: #{tpu_custom_call.1} parent=1 // pred_check
      _
    $region11: #{tpu_custom_call.1} parent=1 // pred_check_branch
      %42 = sbr.rel (0) target = $region13
    $region12: #{tpu_custom_call.1} parent=1 // pred_region
      %44 = vsyncadd [#allocation8], 0
      %s46 = sshll.u32 %s2, 4
      %s47 = int_to_ptr.hbm [resolvable:$true] %s46
      %s48 = sshll.u32 [#allocation9], 4
      %s49 = int_to_ptr.vmem [resolvable:$true] %s48
      %51 = dma.hbm_to_vmem [thread:$0]  %s47, 128, %s49, [#allocation8]
    $region13: #{tpu_custom_call.1} parent=1 // pred_fallthru
      _
    // Predicated region
    $region14: #{tpu_custom_call.1} parent=1 // pred_check
      _
    $region15: #{tpu_custom_call.1} parent=1 // pred_check_branch
      %53 = sbr.rel (0) target = $region17
    $region16: #{tpu_custom_call.1} parent=1 // pred_region
      %55 = vsyncadd [#allocation11], 0
      %s56 = sshll.u32 %s3, 4
      %s57 = int_to_ptr.hbm [resolvable:$true] %s56
      %s58 = sshll.u32 [#allocation10], 4
      %s59 = int_to_ptr.vmem [resolvable:$true] %s58
      %64 = dma.hbm_to_vmem [thread:$0]  %s57, 8192, %s59, [#allocation11], 512, 512, 32
    $region17: #{tpu_custom_call.1} parent=1 // pred_fallthru
      _
    // Predicated region
    $region18: #{tpu_custom_call.1} parent=1 // pred_check
      _
    $region19: #{tpu_custom_call.1} parent=1 // pred_check_branch
      %66 = sbr.rel (0) target = $region21
    $region20: #{tpu_custom_call.1} parent=1 // pred_region
      %68 = dma.done [#allocation5], 4096
    $region21: #{tpu_custom_call.1} parent=1 // pred_fallthru
      _
    // Predicated region
    $region22: #{tpu_custom_call.1} parent=1 // pred_check
      _
    $region23: #{tpu_custom_call.1} parent=1 // pred_check_branch
      %70 = sbr.rel (0) target = $region25
    $region24: #{tpu_custom_call.1} parent=1 // pred_region
      %72 = dma.done [#allocation8], 128
    $region25: #{tpu_custom_call.1} parent=1 // pred_fallthru
      _
    // Predicated region
    $region26: #{tpu_custom_call.1} parent=1 // pred_check
      _
    $region27: #{tpu_custom_call.1} parent=1 // pred_check_branch
      %74 = sbr.rel (0) target = $region29
    $region28: #{tpu_custom_call.1} parent=1 // pred_region
      %76 = dma.done [#allocation8], 128
    $region29: #{tpu_custom_call.1} parent=1 // pred_fallthru
      _
    // Predicated region
    $region30: #{tpu_custom_call.1} parent=1 // pred_check
      _
    $region31: #{tpu_custom_call.1} parent=1 // pred_check_branch
      %78 = sbr.rel (0) target = $region33
    $region32: #{tpu_custom_call.1} parent=1 // pred_region
      %80 = dma.done [#allocation11], 8192
    $region33: #{tpu_custom_call.1} parent=1 // pred_fallthru
      _
    %p81 = scmp.eq.s32.totalorder 0, 0
    // Predicated region
    $region34: #{tpu_custom_call.1} parent=1 // pred_check
      %p82 = pneg %p81
    $region35: #{tpu_custom_call.1} parent=1 // pred_check_branch
      %84 = sbr.rel (%p82) target = $region37
    $region36: #{tpu_custom_call.1} parent=1 // pred_region
      %v85 = vld [vmem:[#allocation7] sm:$0xff]
      %86 = vst [vmem:[#allocation2] sm:$0xff] %v85
      %v87 = vld [vmem:[#allocation9] sm:$0xff]
      %88 = vst [vmem:[#allocation3] sm:$0xff] %v87
    $region37: #{tpu_custom_call.1} parent=1 // pred_fallthru
      _
    %v89 = vld [vmem:[#allocation10] sm:$0xff]
    %v90 = vld [vmem:[#allocation10 + $0x8] sm:$0xff]
    %v91 = vld [vmem:[#allocation10 + $0x10] sm:$0xff]
    %v92 = vld [vmem:[#allocation10 + $0x18] sm:$0xff]
    %v93 = vld [vmem:[#allocation10 + $0x20] sm:$0xff]
    %v94 = vld [vmem:[#allocation10 + $0x28] sm:$0xff]
    %v95 = vld [vmem:[#allocation10 + $0x30] sm:$0xff]
    %v96 = vld [vmem:[#allocation10 + $0x38] sm:$0xff]
    %v97 = vld [vmem:[#allocation10 + $0x40] sm:$0xff]
    %v98 = vld [vmem:[#allocation10 + $0x48] sm:$0xff]
    %v99 = vld [vmem:[#allocation10 + $0x50] sm:$0xff]
    %v100 = vld [vmem:[#allocation10 + $0x58] sm:$0xff]
    %v101 = vld [vmem:[#allocation10 + $0x60] sm:$0xff]
    %v102 = vld [vmem:[#allocation10 + $0x68] sm:$0xff]
    %v103 = vld [vmem:[#allocation10 + $0x70] sm:$0xff]
    %v104 = vld [vmem:[#allocation10 + $0x78] sm:$0xff]
    %v105 = vld [vmem:[#allocation10 + $0x80] sm:$0xff]
    %v106 = vld [vmem:[#allocation10 + $0x88] sm:$0xff]
    %v107 = vld [vmem:[#allocation10 + $0x90] sm:$0xff]
    %v108 = vld [vmem:[#allocation10 + $0x98] sm:$0xff]
    %v109 = vld [vmem:[#allocation10 + $0xa0] sm:$0xff]
    %v110 = vld [vmem:[#allocation10 + $0xa8] sm:$0xff]
    %v111 = vld [vmem:[#allocation10 + $0xb0] sm:$0xff]
    %v112 = vld [vmem:[#allocation10 + $0xb8] sm:$0xff]
    %v113 = vld [vmem:[#allocation10 + $0xc0] sm:$0xff]
    %v114 = vld [vmem:[#allocation10 + $0xc8] sm:$0xff]
    %v115 = vld [vmem:[#allocation10 + $0xd0] sm:$0xff]
    %v116 = vld [vmem:[#allocation10 + $0xd8] sm:$0xff]
    %v117 = vld [vmem:[#allocation10 + $0xe0] sm:$0xff]
    %v118 = vld [vmem:[#allocation10 + $0xe8] sm:$0xff]
    %v119 = vld [vmem:[#allocation10 + $0xf0] sm:$0xff]
    %v120 = vld [vmem:[#allocation10 + $0xf8] sm:$0xff]
    %v121 = vld [vmem:[#allocation10 + $0x100] sm:$0xff]
    %v122 = vld [vmem:[#allocation10 + $0x108] sm:$0xff]
    %v123 = vld [vmem:[#allocation10 + $0x110] sm:$0xff]
    %v124 = vld [vmem:[#allocation10 + $0x118] sm:$0xff]
    %v125 = vld [vmem:[#allocation10 + $0x120] sm:$0xff]
    %v126 = vld [vmem:[#allocation10 + $0x128] sm:$0xff]
    %v127 = vld [vmem:[#allocation10 + $0x130] sm:$0xff]
    %v128 = vld [vmem:[#allocation10 + $0x138] sm:$0xff]
    %v129 = vld [vmem:[#allocation10 + $0x140] sm:$0xff]
    %v130 = vld [vmem:[#allocation10 + $0x148] sm:$0xff]
    %v131 = vld [vmem:[#allocation10 + $0x150] sm:$0xff]
    %v132 = vld [vmem:[#allocation10 + $0x158] sm:$0xff]
    %v133 = vld [vmem:[#allocation10 + $0x160] sm:$0xff]
    %v134 = vld [vmem:[#allocation10 + $0x168] sm:$0xff]
    %v135 = vld [vmem:[#allocation10 + $0x170] sm:$0xff]
    %v136 = vld [vmem:[#allocation10 + $0x178] sm:$0xff]
    %v137 = vld [vmem:[#allocation10 + $0x180] sm:$0xff]
    %v138 = vld [vmem:[#allocation10 + $0x188] sm:$0xff]
    %v139 = vld [vmem:[#allocation10 + $0x190] sm:$0xff]
    %v140 = vld [vmem:[#allocation10 + $0x198] sm:$0xff]
    %v141 = vld [vmem:[#allocation10 + $0x1a0] sm:$0xff]
    %v142 = vld [vmem:[#allocation10 + $0x1a8] sm:$0xff]
    %v143 = vld [vmem:[#allocation10 + $0x1b0] sm:$0xff]
    %v144 = vld [vmem:[#allocation10 + $0x1b8] sm:$0xff]
    %v145 = vld [vmem:[#allocation10 + $0x1c0] sm:$0xff]
    %v146 = vld [vmem:[#allocation10 + $0x1c8] sm:$0xff]
    %v147 = vld [vmem:[#allocation10 + $0x1d0] sm:$0xff]
    %v148 = vld [vmem:[#allocation10 + $0x1d8] sm:$0xff]
    %v149 = vld [vmem:[#allocation10 + $0x1e0] sm:$0xff]
    %v150 = vld [vmem:[#allocation10 + $0x1e8] sm:$0xff]
    %v151 = vld [vmem:[#allocation10 + $0x1f0] sm:$0xff]
    %v152 = vld [vmem:[#allocation10 + $0x1f8] sm:$0xff]
    %v153 = vld [vmem:[#allocation2] sm:$0xff]
    %v154 = vld [vmem:[#allocation3] sm:$0xff]
    %155 = vmatpush.msra.mxu0 %v149
    %156 = vmatpush.msra.mxu0 %v145
    %157 = vmatpush.msra.mxu0 %v141
    %158 = vmatpush.msra.mxu0 %v137
    %159 = vmatpush.msra.mxu0 %v133
    %160 = vmatpush.msra.mxu0 %v129
    %161 = vmatpush.msra.mxu0 %v125
    %162 = vmatpush.msra.mxu0 %v121
    %163 = vmatpush.msra.mxu0 %v117
    %164 = vmatpush.msra.mxu0 %v113
    %165 = vmatpush.msra.mxu0 %v109
    %166 = vmatpush.msra.mxu0 %v105
    %167 = vmatpush.msra.mxu0 %v101
    %168 = vmatpush.msra.mxu0 %v97
    %169 = vmatpush.msra.mxu0 %v93
    %170 = vmatpush.msra.mxu0 %v89
    %171 = vmatmul.f32.gmra.mxu0 %v153
    %v172 = vpop.f32.mrf.mxu0
    %v173 = vadd.f32 0.0, %v172
    %174 = vdwg.mxu0
    %175 = vmatpush.msra.mxu0 %v150
    %176 = vmatpush.msra.mxu0 %v146
    %177 = vmatpush.msra.mxu0 %v142
    %178 = vmatpush.msra.mxu0 %v138
    %179 = vmatpush.msra.mxu0 %v134
    %180 = vmatpush.msra.mxu0 %v130
    %181 = vmatpush.msra.mxu0 %v126
    %182 = vmatpush.msra.mxu0 %v122
    %183 = vmatpush.msra.mxu0 %v118
    %184 = vmatpush.msra.mxu0 %v114
    %185 = vmatpush.msra.mxu0 %v110
    %186 = vmatpush.msra.mxu0 %v106
    %187 = vmatpush.msra.mxu0 %v102
    %188 = vmatpush.msra.mxu0 %v98
    %189 = vmatpush.msra.mxu0 %v94
    %190 = vmatpush.msra.mxu0 %v90
    %191 = vmatmul.f32.gmra.mxu0 %v153
    %v192 = vpop.f32.mrf.mxu0
    %v193 = vadd.f32 0.0, %v192
    %194 = vdwg.mxu0
    %195 = vmatpush.msra.mxu0 %v151
    %196 = vmatpush.msra.mxu0 %v147
    %197 = vmatpush.msra.mxu0 %v143
    %198 = vmatpush.msra.mxu0 %v139
    %199 = vmatpush.msra.mxu0 %v135
    %200 = vmatpush.msra.mxu0 %v131
    %201 = vmatpush.msra.mxu0 %v127
    %202 = vmatpush.msra.mxu0 %v123
    %203 = vmatpush.msra.mxu0 %v119
    %204 = vmatpush.msra.mxu0 %v115
    %205 = vmatpush.msra.mxu0 %v111
    %206 = vmatpush.msra.mxu0 %v107
    %207 = vmatpush.msra.mxu0 %v103
    %208 = vmatpush.msra.mxu0 %v99
    %209 = vmatpush.msra.mxu0 %v95
    %210 = vmatpush.msra.mxu0 %v91
    %211 = vmatmul.f32.gmra.mxu0 %v153
    %v212 = vpop.f32.mrf.mxu0
    %v213 = vadd.f32 0.0, %v212
    %214 = vdwg.mxu0
    %215 = vmatpush.msra.mxu0 %v152
    %216 = vmatpush.msra.mxu0 %v148
    %217 = vmatpush.msra.mxu0 %v144
    %218 = vmatpush.msra.mxu0 %v140
    %219 = vmatpush.msra.mxu0 %v136
    %220 = vmatpush.msra.mxu0 %v132
    %221 = vmatpush.msra.mxu0 %v128
    %222 = vmatpush.msra.mxu0 %v124
    %223 = vmatpush.msra.mxu0 %v120
    %224 = vmatpush.msra.mxu0 %v116
    %225 = vmatpush.msra.mxu0 %v112
    %226 = vmatpush.msra.mxu0 %v108
    %227 = vmatpush.msra.mxu0 %v104
    %228 = vmatpush.msra.mxu0 %v100
    %229 = vmatpush.msra.mxu0 %v96
    %230 = vmatpush.msra.mxu0 %v92
    %231 = vmatmul.f32.gmra.mxu0 %v153
    %v232 = vpop.f32.mrf.mxu0
    %v233 = vadd.f32 0.0, %v232
    %234 = vdwg.mxu0
    %v235 = vld [vmem:[#allocation4] sm:$0xff]
    %v236 = vld [vmem:[#allocation4 + $0x8] sm:$0xff]
    %v237 = vld [vmem:[#allocation4 + $0x10] sm:$0xff]
    %v238 = vld [vmem:[#allocation4 + $0x18] sm:$0xff]
    %v239 = vadd.f32 %v235, %v173
    %v240 = vadd.f32 %v236, %v193
    %v241 = vadd.f32 %v237, %v213
    %v242 = vadd.f32 %v238, %v233
    %v243 = vmul.f32 %v239, 0.5
    %v244 = vtanh.pop %v243
    %v245 = vmul.f32 %v244, 0.5
    %v246 = vadd.f32 %v245, 0.5
    %v247 = vmul.f32 %v240, 0.5
    %v248 = vtanh.pop %v247
    %v249 = vmul.f32 %v248, 0.5
    %v250 = vadd.f32 %v249, 0.5
    %v251 = vtanh.pop %v241
    %v252 = vmul.f32 %v242, 0.5
    %v253 = vtanh.pop %v252
    %v254 = vmul.f32 %v253, 0.5
    %v255 = vadd.f32 %v254, 0.5
    %v256 = vmul.f32 %v250, %v154
    %v257 = vmul.f32 %v246, %v251
    %v258 = vadd.f32 %v256, %v257
    %v259 = vtanh.pop %v258
    %v260 = vmul.f32 %v255, %v259
    %261 = vst [vmem:[#allocation12] sm:$0xff] %v260
    %262 = vmatpush.msra.mxu0 %v149
    %263 = vmatpush.msra.mxu0 %v145
    %264 = vmatpush.msra.mxu0 %v141
    %265 = vmatpush.msra.mxu0 %v137
    %266 = vmatpush.msra.mxu0 %v133
    %267 = vmatpush.msra.mxu0 %v129
    %268 = vmatpush.msra.mxu0 %v125
    %269 = vmatpush.msra.mxu0 %v121
    %270 = vmatpush.msra.mxu0 %v117
    %271 = vmatpush.msra.mxu0 %v113
    %272 = vmatpush.msra.mxu0 %v109
    %273 = vmatpush.msra.mxu0 %v105
    %274 = vmatpush.msra.mxu0 %v101
    %275 = vmatpush.msra.mxu0 %v97
    %276 = vmatpush.msra.mxu0 %v93
    %277 = vmatpush.msra.mxu0 %v89
    %278 = vmatmul.f32.gmra.mxu0 %v260
    %v279 = vpop.f32.mrf.mxu0
    %v280 = vadd.f32 0.0, %v279
    %281 = vdwg.mxu0
    %282 = vmatpush.msra.mxu0 %v150
    %283 = vmatpush.msra.mxu0 %v146
    %284 = vmatpush.msra.mxu0 %v142
    %285 = vmatpush.msra.mxu0 %v138
    %286 = vmatpush.msra.mxu0 %v134
    %287 = vmatpush.msra.mxu0 %v130
    %288 = vmatpush.msra.mxu0 %v126
    %289 = vmatpush.msra.mxu0 %v122
    %290 = vmatpush.msra.mxu0 %v118
    %291 = vmatpush.msra.mxu0 %v114
    %292 = vmatpush.msra.mxu0 %v110
    %293 = vmatpush.msra.mxu0 %v106
    %294 = vmatpush.msra.mxu0 %v102
    %295 = vmatpush.msra.mxu0 %v98
    %296 = vmatpush.msra.mxu0 %v94
    %297 = vmatpush.msra.mxu0 %v90
    %298 = vmatmul.f32.gmra.mxu0 %v260
    %v299 = vpop.f32.mrf.mxu0
    %v300 = vadd.f32 0.0, %v299
    %301 = vdwg.mxu0
    %302 = vmatpush.msra.mxu0 %v151
    %303 = vmatpush.msra.mxu0 %v147
    %304 = vmatpush.msra.mxu0 %v143
    %305 = vmatpush.msra.mxu0 %v139
    %306 = vmatpush.msra.mxu0 %v135
    %307 = vmatpush.msra.mxu0 %v131
    %308 = vmatpush.msra.mxu0 %v127
    %309 = vmatpush.msra.mxu0 %v123
    %310 = vmatpush.msra.mxu0 %v119
    %311 = vmatpush.msra.mxu0 %v115
    %312 = vmatpush.msra.mxu0 %v111
    %313 = vmatpush.msra.mxu0 %v107
    %314 = vmatpush.msra.mxu0 %v103
    %315 = vmatpush.msra.mxu0 %v99
    %316 = vmatpush.msra.mxu0 %v95
    %317 = vmatpush.msra.mxu0 %v91
    %318 = vmatmul.f32.gmra.mxu0 %v260
    %v319 = vpop.f32.mrf.mxu0
    %v320 = vadd.f32 0.0, %v319
    %321 = vdwg.mxu0
    %322 = vmatpush.msra.mxu0 %v152
    %323 = vmatpush.msra.mxu0 %v148
    %324 = vmatpush.msra.mxu0 %v144
    %325 = vmatpush.msra.mxu0 %v140
    %326 = vmatpush.msra.mxu0 %v136
    %327 = vmatpush.msra.mxu0 %v132
    %328 = vmatpush.msra.mxu0 %v128
    %329 = vmatpush.msra.mxu0 %v124
    %330 = vmatpush.msra.mxu0 %v120
    %331 = vmatpush.msra.mxu0 %v116
    %332 = vmatpush.msra.mxu0 %v112
    %333 = vmatpush.msra.mxu0 %v108
    %334 = vmatpush.msra.mxu0 %v104
    %335 = vmatpush.msra.mxu0 %v100
    %336 = vmatpush.msra.mxu0 %v96
    %337 = vmatpush.msra.mxu0 %v92
    %338 = vmatmul.f32.gmra.mxu0 %v260
    %v339 = vpop.f32.mrf.mxu0
    %v340 = vadd.f32 0.0, %v339
    %341 = vdwg.mxu0
    %s342 = scalar_lea.vmem [#allocation4], 32
    %v343 = vld [vmem:[%s342] sm:$0xff]
    %v344 = vld [vmem:[%s342 + $0x8] sm:$0xff]
    %v345 = vld [vmem:[%s342 + $0x10] sm:$0xff]
    %v346 = vld [vmem:[%s342 + $0x18] sm:$0xff]
    %v347 = vadd.f32 %v343, %v280
    %v348 = vadd.f32 %v344, %v300
    %v349 = vadd.f32 %v345, %v320
    %v350 = vadd.f32 %v346, %v340
    %v351 = vmul.f32 %v347, 0.5
    %v352 = vtanh.pop %v351
    %v353 = vmul.f32 %v352, 0.5
    %v354 = vadd.f32 %v353, 0.5
    %v355 = vmul.f32 %v348, 0.5
    %v356 = vtanh.pop %v355
    %v357 = vmul.f32 %v356, 0.5
    %v358 = vadd.f32 %v357, 0.5
    %v359 = vtanh.pop %v349
    %v360 = vmul.f32 %v350, 0.5
    %v361 = vtanh.pop %v360
    %v362 = vmul.f32 %v361, 0.5
    %v363 = vadd.f32 %v362, 0.5
    %v364 = vmul.f32 %v358, %v258
    %v365 = vmul.f32 %v354, %v359
    %v366 = vadd.f32 %v364, %v365
    %v367 = vtanh.pop %v366
    %v368 = vmul.f32 %v363, %v367
    %s369 = scalar_lea.vmem [#allocation12], 8
    %370 = vst [vmem:[%s369] sm:$0xff] %v368
    %371 = vmatpush.msra.mxu0 %v149
    %372 = vmatpush.msra.mxu0 %v145
    %373 = vmatpush.msra.mxu0 %v141
    %374 = vmatpush.msra.mxu0 %v137
    %375 = vmatpush.msra.mxu0 %v133
    %376 = vmatpush.msra.mxu0 %v129
    %377 = vmatpush.msra.mxu0 %v125
    %378 = vmatpush.msra.mxu0 %v121
    %379 = vmatpush.msra.mxu0 %v117
    %380 = vmatpush.msra.mxu0 %v113
    %381 = vmatpush.msra.mxu0 %v109
    %382 = vmatpush.msra.mxu0 %v105
    %383 = vmatpush.msra.mxu0 %v101
    %384 = vmatpush.msra.mxu0 %v97
    %385 = vmatpush.msra.mxu0 %v93
    %386 = vmatpush.msra.mxu0 %v89
    %387 = vmatmul.f32.gmra.mxu0 %v368
    %v388 = vpop.f32.mrf.mxu0
    %v389 = vadd.f32 0.0, %v388
    %390 = vdwg.mxu0
    %391 = vmatpush.msra.mxu0 %v150
    %392 = vmatpush.msra.mxu0 %v146
    %393 = vmatpush.msra.mxu0 %v142
    %394 = vmatpush.msra.mxu0 %v138
    %395 = vmatpush.msra.mxu0 %v134
    %396 = vmatpush.msra.mxu0 %v130
    %397 = vmatpush.msra.mxu0 %v126
    %398 = vmatpush.msra.mxu0 %v122
    %399 = vmatpush.msra.mxu0 %v118
    %400 = vmatpush.msra.mxu0 %v114
    %401 = vmatpush.msra.mxu0 %v110
    %402 = vmatpush.msra.mxu0 %v106
    %403 = vmatpush.msra.mxu0 %v102
    %404 = vmatpush.msra.mxu0 %v98
    %405 = vmatpush.msra.mxu0 %v94
    %406 = vmatpush.msra.mxu0 %v90
    %407 = vmatmul.f32.gmra.mxu0 %v368
    %v408 = vpop.f32.mrf.mxu0
    %v409 = vadd.f32 0.0, %v408
    %410 = vdwg.mxu0
    %411 = vmatpush.msra.mxu0 %v151
    %412 = vmatpush.msra.mxu0 %v147
    %413 = vmatpush.msra.mxu0 %v143
    %414 = vmatpush.msra.mxu0 %v139
    %415 = vmatpush.msra.mxu0 %v135
    %416 = vmatpush.msra.mxu0 %v131
    %417 = vmatpush.msra.mxu0 %v127
    %418 = vmatpush.msra.mxu0 %v123
    %419 = vmatpush.msra.mxu0 %v119
    %420 = vmatpush.msra.mxu0 %v115
    %421 = vmatpush.msra.mxu0 %v111
    %422 = vmatpush.msra.mxu0 %v107
    %423 = vmatpush.msra.mxu0 %v103
    %424 = vmatpush.msra.mxu0 %v99
    %425 = vmatpush.msra.mxu0 %v95
    %426 = vmatpush.msra.mxu0 %v91
    %427 = vmatmul.f32.gmra.mxu0 %v368
    %v428 = vpop.f32.mrf.mxu0
    %v429 = vadd.f32 0.0, %v428
    %430 = vdwg.mxu0
    %431 = vmatpush.msra.mxu0 %v152
    %432 = vmatpush.msra.mxu0 %v148
    %433 = vmatpush.msra.mxu0 %v144
    %434 = vmatpush.msra.mxu0 %v140
    %435 = vmatpush.msra.mxu0 %v136
    %436 = vmatpush.msra.mxu0 %v132
    %437 = vmatpush.msra.mxu0 %v128
    %438 = vmatpush.msra.mxu0 %v124
    %439 = vmatpush.msra.mxu0 %v120
    %440 = vmatpush.msra.mxu0 %v116
    %441 = vmatpush.msra.mxu0 %v112
    %442 = vmatpush.msra.mxu0 %v108
    %443 = vmatpush.msra.mxu0 %v104
    %444 = vmatpush.msra.mxu0 %v100
    %445 = vmatpush.msra.mxu0 %v96
    %446 = vmatpush.msra.mxu0 %v92
    %447 = vmatmul.f32.gmra.mxu0 %v368
    %v448 = vpop.f32.mrf.mxu0
    %v449 = vadd.f32 0.0, %v448
    %450 = vdwg.mxu0
    %s451 = scalar_lea.vmem [#allocation4], 64
    %v452 = vld [vmem:[%s451] sm:$0xff]
    %v453 = vld [vmem:[%s451 + $0x8] sm:$0xff]
    %v454 = vld [vmem:[%s451 + $0x10] sm:$0xff]
    %v455 = vld [vmem:[%s451 + $0x18] sm:$0xff]
    %v456 = vadd.f32 %v452, %v389
    %v457 = vadd.f32 %v453, %v409
    %v458 = vadd.f32 %v454, %v429
    %v459 = vadd.f32 %v455, %v449
    %v460 = vmul.f32 %v456, 0.5
    %v461 = vtanh.pop %v460
    %v462 = vmul.f32 %v461, 0.5
    %v463 = vadd.f32 %v462, 0.5
    %v464 = vmul.f32 %v457, 0.5
    %v465 = vtanh.pop %v464
    %v466 = vmul.f32 %v465, 0.5
    %v467 = vadd.f32 %v466, 0.5
    %v468 = vtanh.pop %v458
    %v469 = vmul.f32 %v459, 0.5
    %v470 = vtanh.pop %v469
    %v471 = vmul.f32 %v470, 0.5
    %v472 = vadd.f32 %v471, 0.5
    %v473 = vmul.f32 %v467, %v366
    %v474 = vmul.f32 %v463, %v468
    %v475 = vadd.f32 %v473, %v474
    %v476 = vtanh.pop %v475
    %v477 = vmul.f32 %v472, %v476
    %s478 = scalar_lea.vmem [#allocation12], 16
    %479 = vst [vmem:[%s478] sm:$0xff] %v477
    %480 = vmatpush.msra.mxu0 %v149
    %481 = vmatpush.msra.mxu0 %v145
    %482 = vmatpush.msra.mxu0 %v141
    %483 = vmatpush.msra.mxu0 %v137
    %484 = vmatpush.msra.mxu0 %v133
    %485 = vmatpush.msra.mxu0 %v129
    %486 = vmatpush.msra.mxu0 %v125
    %487 = vmatpush.msra.mxu0 %v121
    %488 = vmatpush.msra.mxu0 %v117
    %489 = vmatpush.msra.mxu0 %v113
    %490 = vmatpush.msra.mxu0 %v109
    %491 = vmatpush.msra.mxu0 %v105
    %492 = vmatpush.msra.mxu0 %v101
    %493 = vmatpush.msra.mxu0 %v97
    %494 = vmatpush.msra.mxu0 %v93
    %495 = vmatpush.msra.mxu0 %v89
    %496 = vmatmul.f32.gmra.mxu0 %v477
    %v497 = vpop.f32.mrf.mxu0
    %v498 = vadd.f32 0.0, %v497
    %499 = vdwg.mxu0
    %500 = vmatpush.msra.mxu0 %v150
    %501 = vmatpush.msra.mxu0 %v146
    %502 = vmatpush.msra.mxu0 %v142
    %503 = vmatpush.msra.mxu0 %v138
    %504 = vmatpush.msra.mxu0 %v134
    %505 = vmatpush.msra.mxu0 %v130
    %506 = vmatpush.msra.mxu0 %v126
    %507 = vmatpush.msra.mxu0 %v122
    %508 = vmatpush.msra.mxu0 %v118
    %509 = vmatpush.msra.mxu0 %v114
    %510 = vmatpush.msra.mxu0 %v110
    %511 = vmatpush.msra.mxu0 %v106
    %512 = vmatpush.msra.mxu0 %v102
    %513 = vmatpush.msra.mxu0 %v98
    %514 = vmatpush.msra.mxu0 %v94
    %515 = vmatpush.msra.mxu0 %v90
    %516 = vmatmul.f32.gmra.mxu0 %v477
    %v517 = vpop.f32.mrf.mxu0
    %v518 = vadd.f32 0.0, %v517
    %519 = vdwg.mxu0
    %520 = vmatpush.msra.mxu0 %v151
    %521 = vmatpush.msra.mxu0 %v147
    %522 = vmatpush.msra.mxu0 %v143
    %523 = vmatpush.msra.mxu0 %v139
    %524 = vmatpush.msra.mxu0 %v135
    %525 = vmatpush.msra.mxu0 %v131
    %526 = vmatpush.msra.mxu0 %v127
    %527 = vmatpush.msra.mxu0 %v123
    %528 = vmatpush.msra.mxu0 %v119
    %529 = vmatpush.msra.mxu0 %v115
    %530 = vmatpush.msra.mxu0 %v111
    %531 = vmatpush.msra.mxu0 %v107
    %532 = vmatpush.msra.mxu0 %v103
    %533 = vmatpush.msra.mxu0 %v99
    %534 = vmatpush.msra.mxu0 %v95
    %535 = vmatpush.msra.mxu0 %v91
    %536 = vmatmul.f32.gmra.mxu0 %v477
    %v537 = vpop.f32.mrf.mxu0
    %v538 = vadd.f32 0.0, %v537
    %539 = vdwg.mxu0
    %540 = vmatpush.msra.mxu0 %v152
    %541 = vmatpush.msra.mxu0 %v148
    %542 = vmatpush.msra.mxu0 %v144
    %543 = vmatpush.msra.mxu0 %v140
    %544 = vmatpush.msra.mxu0 %v136
    %545 = vmatpush.msra.mxu0 %v132
    %546 = vmatpush.msra.mxu0 %v128
    %547 = vmatpush.msra.mxu0 %v124
    %548 = vmatpush.msra.mxu0 %v120
    %549 = vmatpush.msra.mxu0 %v116
    %550 = vmatpush.msra.mxu0 %v112
    %551 = vmatpush.msra.mxu0 %v108
    %552 = vmatpush.msra.mxu0 %v104
    %553 = vmatpush.msra.mxu0 %v100
    %554 = vmatpush.msra.mxu0 %v96
    %555 = vmatpush.msra.mxu0 %v92
    %556 = vmatmul.f32.gmra.mxu0 %v477
    %v557 = vpop.f32.mrf.mxu0
    %v558 = vadd.f32 0.0, %v557
    %559 = vdwg.mxu0
    %s560 = scalar_lea.vmem [#allocation4], 96
    %v561 = vld [vmem:[%s560] sm:$0xff]
    %v562 = vld [vmem:[%s560 + $0x8] sm:$0xff]
    %v563 = vld [vmem:[%s560 + $0x10] sm:$0xff]
    %v564 = vld [vmem:[%s560 + $0x18] sm:$0xff]
    %v565 = vadd.f32 %v561, %v498
    %v566 = vadd.f32 %v562, %v518
    %v567 = vadd.f32 %v563, %v538
    %v568 = vadd.f32 %v564, %v558
    %v569 = vmul.f32 %v565, 0.5
    %v570 = vtanh.pop %v569
    %v571 = vmul.f32 %v570, 0.5
    %v572 = vadd.f32 %v571, 0.5
    %v573 = vmul.f32 %v566, 0.5
    %v574 = vtanh.pop %v573
    %v575 = vmul.f32 %v574, 0.5
    %v576 = vadd.f32 %v575, 0.5
    %v577 = vtanh.pop %v567
    %v578 = vmul.f32 %v568, 0.5
    %v579 = vtanh.pop %v578
    %v580 = vmul.f32 %v579, 0.5
    %v581 = vadd.f32 %v580, 0.5
    %v582 = vmul.f32 %v576, %v475
    %v583 = vmul.f32 %v572, %v577
    %v584 = vadd.f32 %v582, %v583
    %v585 = vtanh.pop %v584
    %v586 = vmul.f32 %v581, %v585
    %s587 = scalar_lea.vmem [#allocation12], 24
    %588 = vst [vmem:[%s587] sm:$0xff] %v586
    %589 = vmatpush.msra.mxu0 %v149
    %590 = vmatpush.msra.mxu0 %v145
    %591 = vmatpush.msra.mxu0 %v141
    %592 = vmatpush.msra.mxu0 %v137
    %593 = vmatpush.msra.mxu0 %v133
    %594 = vmatpush.msra.mxu0 %v129
    %595 = vmatpush.msra.mxu0 %v125
    %596 = vmatpush.msra.mxu0 %v121
    %597 = vmatpush.msra.mxu0 %v117
    %598 = vmatpush.msra.mxu0 %v113
    %599 = vmatpush.msra.mxu0 %v109
    %600 = vmatpush.msra.mxu0 %v105
    %601 = vmatpush.msra.mxu0 %v101
    %602 = vmatpush.msra.mxu0 %v97
    %603 = vmatpush.msra.mxu0 %v93
    %604 = vmatpush.msra.mxu0 %v89
    %605 = vmatmul.f32.gmra.mxu0 %v586
    %v606 = vpop.f32.mrf.mxu0
    %v607 = vadd.f32 0.0, %v606
    %608 = vdwg.mxu0
    %609 = vmatpush.msra.mxu0 %v150
    %610 = vmatpush.msra.mxu0 %v146
    %611 = vmatpush.msra.mxu0 %v142
    %612 = vmatpush.msra.mxu0 %v138
    %613 = vmatpush.msra.mxu0 %v134
    %614 = vmatpush.msra.mxu0 %v130
    %615 = vmatpush.msra.mxu0 %v126
    %616 = vmatpush.msra.mxu0 %v122
    %617 = vmatpush.msra.mxu0 %v118
    %618 = vmatpush.msra.mxu0 %v114
    %619 = vmatpush.msra.mxu0 %v110
    %620 = vmatpush.msra.mxu0 %v106
    %621 = vmatpush.msra.mxu0 %v102
    %622 = vmatpush.msra.mxu0 %v98
    %623 = vmatpush.msra.mxu0 %v94
    %624 = vmatpush.msra.mxu0 %v90
    %625 = vmatmul.f32.gmra.mxu0 %v586
    %v626 = vpop.f32.mrf.mxu0
    %v627 = vadd.f32 0.0, %v626
    %628 = vdwg.mxu0
    %629 = vmatpush.msra.mxu0 %v151
    %630 = vmatpush.msra.mxu0 %v147
    %631 = vmatpush.msra.mxu0 %v143
    %632 = vmatpush.msra.mxu0 %v139
    %633 = vmatpush.msra.mxu0 %v135
    %634 = vmatpush.msra.mxu0 %v131
    %635 = vmatpush.msra.mxu0 %v127
    %636 = vmatpush.msra.mxu0 %v123
    %637 = vmatpush.msra.mxu0 %v119
    %638 = vmatpush.msra.mxu0 %v115
    %639 = vmatpush.msra.mxu0 %v111
    %640 = vmatpush.msra.mxu0 %v107
    %641 = vmatpush.msra.mxu0 %v103
    %642 = vmatpush.msra.mxu0 %v99
    %643 = vmatpush.msra.mxu0 %v95
    %644 = vmatpush.msra.mxu0 %v91
    %645 = vmatmul.f32.gmra.mxu0 %v586
    %v646 = vpop.f32.mrf.mxu0
    %v647 = vadd.f32 0.0, %v646
    %648 = vdwg.mxu0
    %649 = vmatpush.msra.mxu0 %v152
    %650 = vmatpush.msra.mxu0 %v148
    %651 = vmatpush.msra.mxu0 %v144
    %652 = vmatpush.msra.mxu0 %v140
    %653 = vmatpush.msra.mxu0 %v136
    %654 = vmatpush.msra.mxu0 %v132
    %655 = vmatpush.msra.mxu0 %v128
    %656 = vmatpush.msra.mxu0 %v124
    %657 = vmatpush.msra.mxu0 %v120
    %658 = vmatpush.msra.mxu0 %v116
    %659 = vmatpush.msra.mxu0 %v112
    %660 = vmatpush.msra.mxu0 %v108
    %661 = vmatpush.msra.mxu0 %v104
    %662 = vmatpush.msra.mxu0 %v100
    %663 = vmatpush.msra.mxu0 %v96
    %664 = vmatpush.msra.mxu0 %v92
    %665 = vmatmul.f32.gmra.mxu0 %v586
    %v666 = vpop.f32.mrf.mxu0
    %v667 = vadd.f32 0.0, %v666
    %668 = vdwg.mxu0
    %s669 = scalar_lea.vmem [#allocation4], 128
    %v670 = vld [vmem:[%s669] sm:$0xff]
    %v671 = vld [vmem:[%s669 + $0x8] sm:$0xff]
    %v672 = vld [vmem:[%s669 + $0x10] sm:$0xff]
    %v673 = vld [vmem:[%s669 + $0x18] sm:$0xff]
    %v674 = vadd.f32 %v670, %v607
    %v675 = vadd.f32 %v671, %v627
    %v676 = vadd.f32 %v672, %v647
    %v677 = vadd.f32 %v673, %v667
    %v678 = vmul.f32 %v674, 0.5
    %v679 = vtanh.pop %v678
    %v680 = vmul.f32 %v679, 0.5
    %v681 = vadd.f32 %v680, 0.5
    %v682 = vmul.f32 %v675, 0.5
    %v683 = vtanh.pop %v682
    %v684 = vmul.f32 %v683, 0.5
    %v685 = vadd.f32 %v684, 0.5
    %v686 = vtanh.pop %v676
    %v687 = vmul.f32 %v677, 0.5
    %v688 = vtanh.pop %v687
    %v689 = vmul.f32 %v688, 0.5
    %v690 = vadd.f32 %v689, 0.5
    %v691 = vmul.f32 %v685, %v584
    %v692 = vmul.f32 %v681, %v686
    %v693 = vadd.f32 %v691, %v692
    %v694 = vtanh.pop %v693
    %v695 = vmul.f32 %v690, %v694
    %s696 = scalar_lea.vmem [#allocation12], 32
    %697 = vst [vmem:[%s696] sm:$0xff] %v695
    %698 = vmatpush.msra.mxu0 %v149
    %699 = vmatpush.msra.mxu0 %v145
    %700 = vmatpush.msra.mxu0 %v141
    %701 = vmatpush.msra.mxu0 %v137
    %702 = vmatpush.msra.mxu0 %v133
    %703 = vmatpush.msra.mxu0 %v129
    %704 = vmatpush.msra.mxu0 %v125
    %705 = vmatpush.msra.mxu0 %v121
    %706 = vmatpush.msra.mxu0 %v117
    %707 = vmatpush.msra.mxu0 %v113
    %708 = vmatpush.msra.mxu0 %v109
    %709 = vmatpush.msra.mxu0 %v105
    %710 = vmatpush.msra.mxu0 %v101
    %711 = vmatpush.msra.mxu0 %v97
    %712 = vmatpush.msra.mxu0 %v93
    %713 = vmatpush.msra.mxu0 %v89
    %714 = vmatmul.f32.gmra.mxu0 %v695
    %v715 = vpop.f32.mrf.mxu0
    %v716 = vadd.f32 0.0, %v715
    %717 = vdwg.mxu0
    %718 = vmatpush.msra.mxu0 %v150
    %719 = vmatpush.msra.mxu0 %v146
    %720 = vmatpush.msra.mxu0 %v142
    %721 = vmatpush.msra.mxu0 %v138
    %722 = vmatpush.msra.mxu0 %v134
    %723 = vmatpush.msra.mxu0 %v130
    %724 = vmatpush.msra.mxu0 %v126
    %725 = vmatpush.msra.mxu0 %v122
    %726 = vmatpush.msra.mxu0 %v118
    %727 = vmatpush.msra.mxu0 %v114
    %728 = vmatpush.msra.mxu0 %v110
    %729 = vmatpush.msra.mxu0 %v106
    %730 = vmatpush.msra.mxu0 %v102
    %731 = vmatpush.msra.mxu0 %v98
    %732 = vmatpush.msra.mxu0 %v94
    %733 = vmatpush.msra.mxu0 %v90
    %734 = vmatmul.f32.gmra.mxu0 %v695
    %v735 = vpop.f32.mrf.mxu0
    %v736 = vadd.f32 0.0, %v735
    %737 = vdwg.mxu0
    %738 = vmatpush.msra.mxu0 %v151
    %739 = vmatpush.msra.mxu0 %v147
    %740 = vmatpush.msra.mxu0 %v143
    %741 = vmatpush.msra.mxu0 %v139
    %742 = vmatpush.msra.mxu0 %v135
    %743 = vmatpush.msra.mxu0 %v131
    %744 = vmatpush.msra.mxu0 %v127
    %745 = vmatpush.msra.mxu0 %v123
    %746 = vmatpush.msra.mxu0 %v119
    %747 = vmatpush.msra.mxu0 %v115
    %748 = vmatpush.msra.mxu0 %v111
    %749 = vmatpush.msra.mxu0 %v107
    %750 = vmatpush.msra.mxu0 %v103
    %751 = vmatpush.msra.mxu0 %v99
    %752 = vmatpush.msra.mxu0 %v95
    %753 = vmatpush.msra.mxu0 %v91
    %754 = vmatmul.f32.gmra.mxu0 %v695
    %v755 = vpop.f32.mrf.mxu0
    %v756 = vadd.f32 0.0, %v755
    %757 = vdwg.mxu0
    %758 = vmatpush.msra.mxu0 %v152
    %759 = vmatpush.msra.mxu0 %v148
    %760 = vmatpush.msra.mxu0 %v144
    %761 = vmatpush.msra.mxu0 %v140
    %762 = vmatpush.msra.mxu0 %v136
    %763 = vmatpush.msra.mxu0 %v132
    %764 = vmatpush.msra.mxu0 %v128
    %765 = vmatpush.msra.mxu0 %v124
    %766 = vmatpush.msra.mxu0 %v120
    %767 = vmatpush.msra.mxu0 %v116
    %768 = vmatpush.msra.mxu0 %v112
    %769 = vmatpush.msra.mxu0 %v108
    %770 = vmatpush.msra.mxu0 %v104
    %771 = vmatpush.msra.mxu0 %v100
    %772 = vmatpush.msra.mxu0 %v96
    %773 = vmatpush.msra.mxu0 %v92
    %774 = vmatmul.f32.gmra.mxu0 %v695
    %v775 = vpop.f32.mrf.mxu0
    %v776 = vadd.f32 0.0, %v775
    %777 = vdwg.mxu0
    %s778 = scalar_lea.vmem [#allocation4], 160
    %v779 = vld [vmem:[%s778] sm:$0xff]
    %v780 = vld [vmem:[%s778 + $0x8] sm:$0xff]
    %v781 = vld [vmem:[%s778 + $0x10] sm:$0xff]
    %v782 = vld [vmem:[%s778 + $0x18] sm:$0xff]
    %v783 = vadd.f32 %v779, %v716
    %v784 = vadd.f32 %v780, %v736
    %v785 = vadd.f32 %v781, %v756
    %v786 = vadd.f32 %v782, %v776
    %v787 = vmul.f32 %v783, 0.5
    %v788 = vtanh.pop %v787
    %v789 = vmul.f32 %v788, 0.5
    %v790 = vadd.f32 %v789, 0.5
    %v791 = vmul.f32 %v784, 0.5
    %v792 = vtanh.pop %v791
    %v793 = vmul.f32 %v792, 0.5
    %v794 = vadd.f32 %v793, 0.5
    %v795 = vtanh.pop %v785
    %v796 = vmul.f32 %v786, 0.5
    %v797 = vtanh.pop %v796
    %v798 = vmul.f32 %v797, 0.5
    %v799 = vadd.f32 %v798, 0.5
    %v800 = vmul.f32 %v794, %v693
    %v801 = vmul.f32 %v790, %v795
    %v802 = vadd.f32 %v800, %v801
    %v803 = vtanh.pop %v802
    %v804 = vmul.f32 %v799, %v803
    %s805 = scalar_lea.vmem [#allocation12], 40
    %806 = vst [vmem:[%s805] sm:$0xff] %v804
    %807 = vmatpush.msra.mxu0 %v149
    %808 = vmatpush.msra.mxu0 %v145
    %809 = vmatpush.msra.mxu0 %v141
    %810 = vmatpush.msra.mxu0 %v137
    %811 = vmatpush.msra.mxu0 %v133
    %812 = vmatpush.msra.mxu0 %v129
    %813 = vmatpush.msra.mxu0 %v125
    %814 = vmatpush.msra.mxu0 %v121
    %815 = vmatpush.msra.mxu0 %v117
    %816 = vmatpush.msra.mxu0 %v113
    %817 = vmatpush.msra.mxu0 %v109
    %818 = vmatpush.msra.mxu0 %v105
    %819 = vmatpush.msra.mxu0 %v101
    %820 = vmatpush.msra.mxu0 %v97
    %821 = vmatpush.msra.mxu0 %v93
    %822 = vmatpush.msra.mxu0 %v89
    %823 = vmatmul.f32.gmra.mxu0 %v804
    %v824 = vpop.f32.mrf.mxu0
    %v825 = vadd.f32 0.0, %v824
    %826 = vdwg.mxu0
    %827 = vmatpush.msra.mxu0 %v150
    %828 = vmatpush.msra.mxu0 %v146
    %829 = vmatpush.msra.mxu0 %v142
    %830 = vmatpush.msra.mxu0 %v138
    %831 = vmatpush.msra.mxu0 %v134
    %832 = vmatpush.msra.mxu0 %v130
    %833 = vmatpush.msra.mxu0 %v126
    %834 = vmatpush.msra.mxu0 %v122
    %835 = vmatpush.msra.mxu0 %v118
    %836 = vmatpush.msra.mxu0 %v114
    %837 = vmatpush.msra.mxu0 %v110
    %838 = vmatpush.msra.mxu0 %v106
    %839 = vmatpush.msra.mxu0 %v102
    %840 = vmatpush.msra.mxu0 %v98
    %841 = vmatpush.msra.mxu0 %v94
    %842 = vmatpush.msra.mxu0 %v90
    %843 = vmatmul.f32.gmra.mxu0 %v804
    %v844 = vpop.f32.mrf.mxu0
    %v845 = vadd.f32 0.0, %v844
    %846 = vdwg.mxu0
    %847 = vmatpush.msra.mxu0 %v151
    %848 = vmatpush.msra.mxu0 %v147
    %849 = vmatpush.msra.mxu0 %v143
    %850 = vmatpush.msra.mxu0 %v139
    %851 = vmatpush.msra.mxu0 %v135
    %852 = vmatpush.msra.mxu0 %v131
    %853 = vmatpush.msra.mxu0 %v127
    %854 = vmatpush.msra.mxu0 %v123
    %855 = vmatpush.msra.mxu0 %v119
    %856 = vmatpush.msra.mxu0 %v115
    %857 = vmatpush.msra.mxu0 %v111
    %858 = vmatpush.msra.mxu0 %v107
    %859 = vmatpush.msra.mxu0 %v103
    %860 = vmatpush.msra.mxu0 %v99
    %861 = vmatpush.msra.mxu0 %v95
    %862 = vmatpush.msra.mxu0 %v91
    %863 = vmatmul.f32.gmra.mxu0 %v804
    %v864 = vpop.f32.mrf.mxu0
    %v865 = vadd.f32 0.0, %v864
    %866 = vdwg.mxu0
    %867 = vmatpush.msra.mxu0 %v152
    %868 = vmatpush.msra.mxu0 %v148
    %869 = vmatpush.msra.mxu0 %v144
    %870 = vmatpush.msra.mxu0 %v140
    %871 = vmatpush.msra.mxu0 %v136
    %872 = vmatpush.msra.mxu0 %v132
    %873 = vmatpush.msra.mxu0 %v128
    %874 = vmatpush.msra.mxu0 %v124
    %875 = vmatpush.msra.mxu0 %v120
    %876 = vmatpush.msra.mxu0 %v116
    %877 = vmatpush.msra.mxu0 %v112
    %878 = vmatpush.msra.mxu0 %v108
    %879 = vmatpush.msra.mxu0 %v104
    %880 = vmatpush.msra.mxu0 %v100
    %881 = vmatpush.msra.mxu0 %v96
    %882 = vmatpush.msra.mxu0 %v92
    %883 = vmatmul.f32.gmra.mxu0 %v804
    %v884 = vpop.f32.mrf.mxu0
    %v885 = vadd.f32 0.0, %v884
    %886 = vdwg.mxu0
    %s887 = scalar_lea.vmem [#allocation4], 192
    %v888 = vld [vmem:[%s887] sm:$0xff]
    %v889 = vld [vmem:[%s887 + $0x8] sm:$0xff]
    %v890 = vld [vmem:[%s887 + $0x10] sm:$0xff]
    %v891 = vld [vmem:[%s887 + $0x18] sm:$0xff]
    %v892 = vadd.f32 %v888, %v825
    %v893 = vadd.f32 %v889, %v845
    %v894 = vadd.f32 %v890, %v865
    %v895 = vadd.f32 %v891, %v885
    %v896 = vmul.f32 %v892, 0.5
    %v897 = vtanh.pop %v896
    %v898 = vmul.f32 %v897, 0.5
    %v899 = vadd.f32 %v898, 0.5
    %v900 = vmul.f32 %v893, 0.5
    %v901 = vtanh.pop %v900
    %v902 = vmul.f32 %v901, 0.5
    %v903 = vadd.f32 %v902, 0.5
    %v904 = vtanh.pop %v894
    %v905 = vmul.f32 %v895, 0.5
    %v906 = vtanh.pop %v905
    %v907 = vmul.f32 %v906, 0.5
    %v908 = vadd.f32 %v907, 0.5
    %v909 = vmul.f32 %v903, %v802
    %v910 = vmul.f32 %v899, %v904
    %v911 = vadd.f32 %v909, %v910
    %v912 = vtanh.pop %v911
    %v913 = vmul.f32 %v908, %v912
    %s914 = scalar_lea.vmem [#allocation12], 48
    %915 = vst [vmem:[%s914] sm:$0xff] %v913
    %916 = vmatpush.msra.mxu0 %v149
    %917 = vmatpush.msra.mxu0 %v145
    %918 = vmatpush.msra.mxu0 %v141
    %919 = vmatpush.msra.mxu0 %v137
    %920 = vmatpush.msra.mxu0 %v133
    %921 = vmatpush.msra.mxu0 %v129
    %922 = vmatpush.msra.mxu0 %v125
    %923 = vmatpush.msra.mxu0 %v121
    %924 = vmatpush.msra.mxu0 %v117
    %925 = vmatpush.msra.mxu0 %v113
    %926 = vmatpush.msra.mxu0 %v109
    %927 = vmatpush.msra.mxu0 %v105
    %928 = vmatpush.msra.mxu0 %v101
    %929 = vmatpush.msra.mxu0 %v97
    %930 = vmatpush.msra.mxu0 %v93
    %931 = vmatpush.msra.mxu0 %v89
    %932 = vmatmul.f32.gmra.mxu0 %v913
    %v933 = vpop.f32.mrf.mxu0
    %v934 = vadd.f32 0.0, %v933
    %935 = vdwg.mxu0
    %936 = vmatpush.msra.mxu0 %v150
    %937 = vmatpush.msra.mxu0 %v146
    %938 = vmatpush.msra.mxu0 %v142
    %939 = vmatpush.msra.mxu0 %v138
    %940 = vmatpush.msra.mxu0 %v134
    %941 = vmatpush.msra.mxu0 %v130
    %942 = vmatpush.msra.mxu0 %v126
    %943 = vmatpush.msra.mxu0 %v122
    %944 = vmatpush.msra.mxu0 %v118
    %945 = vmatpush.msra.mxu0 %v114
    %946 = vmatpush.msra.mxu0 %v110
    %947 = vmatpush.msra.mxu0 %v106
    %948 = vmatpush.msra.mxu0 %v102
    %949 = vmatpush.msra.mxu0 %v98
    %950 = vmatpush.msra.mxu0 %v94
    %951 = vmatpush.msra.mxu0 %v90
    %952 = vmatmul.f32.gmra.mxu0 %v913
    %v953 = vpop.f32.mrf.mxu0
    %v954 = vadd.f32 0.0, %v953
    %955 = vdwg.mxu0
    %956 = vmatpush.msra.mxu0 %v151
    %957 = vmatpush.msra.mxu0 %v147
    %958 = vmatpush.msra.mxu0 %v143
    %959 = vmatpush.msra.mxu0 %v139
    %960 = vmatpush.msra.mxu0 %v135
    %961 = vmatpush.msra.mxu0 %v131
    %962 = vmatpush.msra.mxu0 %v127
    %963 = vmatpush.msra.mxu0 %v123
    %964 = vmatpush.msra.mxu0 %v119
    %965 = vmatpush.msra.mxu0 %v115
    %966 = vmatpush.msra.mxu0 %v111
    %967 = vmatpush.msra.mxu0 %v107
    %968 = vmatpush.msra.mxu0 %v103
    %969 = vmatpush.msra.mxu0 %v99
    %970 = vmatpush.msra.mxu0 %v95
    %971 = vmatpush.msra.mxu0 %v91
    %972 = vmatmul.f32.gmra.mxu0 %v913
    %v973 = vpop.f32.mrf.mxu0
    %v974 = vadd.f32 0.0, %v973
    %975 = vdwg.mxu0
    %976 = vmatpush.msra.mxu0 %v152
    %977 = vmatpush.msra.mxu0 %v148
    %978 = vmatpush.msra.mxu0 %v144
    %979 = vmatpush.msra.mxu0 %v140
    %980 = vmatpush.msra.mxu0 %v136
    %981 = vmatpush.msra.mxu0 %v132
    %982 = vmatpush.msra.mxu0 %v128
    %983 = vmatpush.msra.mxu0 %v124
    %984 = vmatpush.msra.mxu0 %v120
    %985 = vmatpush.msra.mxu0 %v116
    %986 = vmatpush.msra.mxu0 %v112
    %987 = vmatpush.msra.mxu0 %v108
    %988 = vmatpush.msra.mxu0 %v104
    %989 = vmatpush.msra.mxu0 %v100
    %990 = vmatpush.msra.mxu0 %v96
    %991 = vmatpush.msra.mxu0 %v92
    %992 = vmatmul.f32.gmra.mxu0 %v913
    %v993 = vpop.f32.mrf.mxu0
    %v994 = vadd.f32 0.0, %v993
    %995 = vdwg.mxu0
    %s996 = scalar_lea.vmem [#allocation4], 224
    %v997 = vld [vmem:[%s996] sm:$0xff]
    %v998 = vld [vmem:[%s996 + $0x8] sm:$0xff]
    %v999 = vld [vmem:[%s996 + $0x10] sm:$0xff]
    %v1000 = vld [vmem:[%s996 + $0x18] sm:$0xff]
    %v1001 = vadd.f32 %v997, %v934
    %v1002 = vadd.f32 %v998, %v954
    %v1003 = vadd.f32 %v999, %v974
    %v1004 = vadd.f32 %v1000, %v994
    %v1005 = vmul.f32 %v1001, 0.5
    %v1006 = vtanh.pop %v1005
    %v1007 = vmul.f32 %v1006, 0.5
    %v1008 = vadd.f32 %v1007, 0.5
    %v1009 = vmul.f32 %v1002, 0.5
    %v1010 = vtanh.pop %v1009
    %v1011 = vmul.f32 %v1010, 0.5
    %v1012 = vadd.f32 %v1011, 0.5
    %v1013 = vtanh.pop %v1003
    %v1014 = vmul.f32 %v1004, 0.5
    %v1015 = vtanh.pop %v1014
    %v1016 = vmul.f32 %v1015, 0.5
    %v1017 = vadd.f32 %v1016, 0.5
    %v1018 = vmul.f32 %v1012, %v911
    %v1019 = vmul.f32 %v1008, %v1013
    %v1020 = vadd.f32 %v1018, %v1019
    %v1021 = vtanh.pop %v1020
    %v1022 = vmul.f32 %v1017, %v1021
    %s1023 = scalar_lea.vmem [#allocation12], 56
    %1024 = vst [vmem:[%s1023] sm:$0xff] %v1022
    %1025 = vst [vmem:[#allocation2] sm:$0xff] %v1022
    %1026 = vst [vmem:[#allocation3] sm:$0xff] %v1020
    // Predicated region
    $region38: #{tpu_custom_call.1} parent=1 // pred_check
      %p1027 = pneg %p81
    $region39: #{tpu_custom_call.1} parent=1 // pred_check_branch
      %1029 = sbr.rel (%p1027) target = $region41
    $region40: #{tpu_custom_call.1} parent=1 // pred_region
      %1030 = vst [vmem:[#allocation13] sm:$0xff] %v1022
      %1031 = vst [vmem:[#allocation15] sm:$0xff] %v1020
    $region41: #{tpu_custom_call.1} parent=1 // pred_fallthru
      _
    // Predicated region
    $region42: #{tpu_custom_call.1} parent=1 // pred_check
      _
    $region43: #{tpu_custom_call.1} parent=1 // pred_check_branch
      %1033 = sbr.rel (0) target = $region45
    $region44: #{tpu_custom_call.1} parent=1 // pred_region
      %1035 = vsyncadd [#allocation6], 0
      %s1036 = sshll.u32 [#allocation12], 4
      %s1037 = int_to_ptr.vmem [resolvable:$true] %s1036
      %s1038 = sshll.u32 %s4, 4
      %s1039 = int_to_ptr.hbm [resolvable:$true] %s1038
      %1044 = dma.vmem_to_hbm [thread:$0]  %s1037, 1024, %s1039, [#allocation6], 128, 128, 8
    $region45: #{tpu_custom_call.1} parent=1 // pred_fallthru
      _
    // Predicated region
    $region46: #{tpu_custom_call.1} parent=1 // pred_check
      _
    $region47: #{tpu_custom_call.1} parent=1 // pred_check_branch
      %1046 = sbr.rel (0) target = $region49
    $region48: #{tpu_custom_call.1} parent=1 // pred_region
      %1048 = vsyncadd [#allocation14], 0
      %s1050 = sshll.u32 [#allocation13], 4
      %s1051 = int_to_ptr.vmem [resolvable:$true] %s1050
      %s1052 = sshll.u32 %s5, 4
      %s1053 = int_to_ptr.hbm [resolvable:$true] %s1052
      %1055 = dma.vmem_to_hbm [thread:$0]  %s1051, 128, %s1053, [#allocation14]
    $region49: #{tpu_custom_call.1} parent=1 // pred_fallthru
      _
    // Predicated region
    $region50: #{tpu_custom_call.1} parent=1 // pred_check
      _
    $region51: #{tpu_custom_call.1} parent=1 // pred_check_branch
      %1057 = sbr.rel (0) target = $region53
    $region52: #{tpu_custom_call.1} parent=1 // pred_region
      %1059 = vsyncadd [#allocation14], 0
      %s1061 = sshll.u32 [#allocation15], 4
      %s1062 = int_to_ptr.vmem [resolvable:$true] %s1061
      %s1063 = sshll.u32 %s6, 4
      %s1064 = int_to_ptr.hbm [resolvable:$true] %s1063
      %1066 = dma.vmem_to_hbm [thread:$0]  %s1062, 128, %s1064, [#allocation14]
    $region53: #{tpu_custom_call.1} parent=1 // pred_fallthru
      _
    // Predicated region
    $region54: #{tpu_custom_call.1} parent=1 // pred_check
      _
    $region55: #{tpu_custom_call.1} parent=1 // pred_check_branch
      %1068 = sbr.rel (0) target = $region57
    $region56: #{tpu_custom_call.1} parent=1 // pred_region
      %1070 = dma.done [#allocation6], 1024
    $region57: #{tpu_custom_call.1} parent=1 // pred_fallthru
      _
    // Predicated region
    $region58: #{tpu_custom_call.1} parent=1 // pred_check
      _
    $region59: #{tpu_custom_call.1} parent=1 // pred_check_branch
      %1072 = sbr.rel (0) target = $region61
    $region60: #{tpu_custom_call.1} parent=1 // pred_region
      %1074 = dma.done [#allocation14], 128
    $region61: #{tpu_custom_call.1} parent=1 // pred_fallthru
      _
    // Predicated region
    $region62: #{tpu_custom_call.1} parent=1 // pred_check
      _
    $region63: #{tpu_custom_call.1} parent=1 // pred_check_branch
      %1076 = sbr.rel (0) target = $region65
    $region64: #{tpu_custom_call.1} parent=1 // pred_region
      %1078 = dma.done [#allocation14], 128
    $region65: #{tpu_custom_call.1} parent=1 // pred_fallthru
      _
    %1079 = vsyncpa [#allocation5], 1
    %1080 = vsyncpa [#allocation8], 1
    %1081 = vsyncpa [#allocation11], 1
    %1082 = vsyncpa [#allocation6], 1
    %1083 = vsyncpa [#allocation14], 1

// kernel: tpu_custom_call.1
$region0: #{tpu_custom_call.1}
  #allocation0 [shape = 'u32[]', space=smem, size = 0x4, offset = 0x4, fixed_abs, tag = 'smem constant byte address 0x4 - core index']
  #allocation1 [shape = 'u32[72,128]{1,0:T(1,128)}', space=vmem, size = 0x9000, scoped, tag = 'internal scratch']
  #allocation2 [shape = 'f32[8,128]{1,0:T(8,128)}', space=vmem, size = 0x1000, scoped, tag = 'scratch operand']
  #allocation3 [shape = 'f32[8,128]{1,0:T(8,128)}', space=vmem, size = 0x1000, scoped, tag = 'scratch operand']
  %s0 = inlined_call_operand.hbm [shape: f32[8,8,512], index: 0, kind: input, shape index: {}]
  %s1 = inlined_call_operand.hbm [shape: f32[8,128], index: 1, kind: input, shape index: {}]
  %s2 = inlined_call_operand.hbm [shape: f32[8,128], index: 2, kind: input, shape index: {}]
  %s3 = inlined_call_operand.hbm [shape: f32[128,512], index: 3, kind: input, shape index: {}]
  %s4 = inlined_call_operand.hbm [shape: f32[8,8,128], index: 4, kind: output, shape index: {0}]
  %s5 = inlined_call_operand.hbm [shape: f32[8,128], index: 5, kind: output, shape index: {1}]
  %s6 = inlined_call_operand.hbm [shape: f32[8,128], index: 6, kind: output, shape index: {2}]
  %7 = xla_tuple %s4, %s5, %s6
  %s8 = sld [smem:[#allocation0]]
  $region66: #{tpu_custom_call.1} parent=0
    _
  %s10 = ssub.s32 1, %s8
  %s11 = scalar_select 0, %s10, %s8
  $region1: #{tpu_custom_call.1} parent=0
    #allocation4 [shape = 'u8[131072]{0}', space=vmem, size = 0x20000, scoped, tag = 'input window, operand 0, single buffered']
    #allocation5 [shape = 's32[1]{0}', space=sflag, size = 0x4, scoped, tag = 'scoped memory for tpu_custom_call.1']
    #allocation6 [shape = 's32[1]{0}', space=sflag, size = 0x4, scoped, tag = 'scoped memory for tpu_custom_call.1']
    #allocation7 [shape = 'u8[4096]{0}', space=vmem, size = 0x1000, scoped, tag = 'input window, operand 1, single buffered']
    #allocation8 [shape = 's32[1]{0}', space=sflag, size = 0x4, scoped, tag = 'scoped memory for tpu_custom_call.1']
    #allocation9 [shape = 'u8[4096]{0}', space=vmem, size = 0x1000, scoped, tag = 'input window, operand 2, single buffered']
    #allocation10 [shape = 'u8[262144]{0}', space=vmem, size = 0x40000, scoped, tag = 'input window, operand 3, single buffered']
    #allocation11 [shape = 's32[1]{0}', space=sflag, size = 0x4, scoped, tag = 'scoped memory for tpu_custom_call.1']
    #allocation12 [shape = 'u8[32768]{0}', space=vmem, size = 0x8000, scoped, tag = 'output window, operand 0, single buffered']
    #allocation13 [shape = 'u8[4096]{0}', space=vmem, size = 0x1000, scoped, tag = 'output window, operand 1, single buffered']
    #allocation14 [shape = 's32[1]{0}', space=sflag, size = 0x4, scoped, tag = 'scoped memory for tpu_custom_call.1']
    #allocation15 [shape = 'u8[4096]{0}', space=vmem, size = 0x1000, scoped, tag = 'output window, operand 2, single buffered']
    %12 = vsyncpa [#allocation5], 0
    %13 = vsyncpa [#allocation8], 0
    %14 = vsyncpa [#allocation11], 0
    %15 = vsyncpa [#allocation6], 0
    %16 = vsyncpa [#allocation14], 0
    // Predicated region
    $region2: #{tpu_custom_call.1} parent=1 // pred_check
      _
    $region3: #{tpu_custom_call.1} parent=1 // pred_check_branch
      %18 = sbr.rel (0) target = $region5
    $region4: #{tpu_custom_call.1} parent=1 // pred_region
      %20 = vsyncadd [#allocation5], 0
      %s21 = sshll.u32 %s0, 4
      %s22 = int_to_ptr.hbm [resolvable:$true] %s21
      %s23 = sshll.u32 [#allocation4], 4
      %s24 = int_to_ptr.vmem [resolvable:$true] %s23
      %29 = dma.hbm_to_vmem [thread:$0]  %s22, 4096, %s24, [#allocation5], 512, 512, 32
    $region5: #{tpu_custom_call.1} parent=1 // pred_fallthru
      _
    // Predicated region
    $region6: #{tpu_custom_call.1} parent=1 // pred_check
      _
    $region7: #{tpu_custom_call.1} parent=1 // pred_check_branch
      %31 = sbr.rel (0) target = $region9
    $region8: #{tpu_custom_call.1} parent=1 // pred_region
      %33 = vsyncadd [#allocation8], 0
      %s35 = sshll.u32 %s1, 4
      %s36 = int_to_ptr.hbm [resolvable:$true] %s35
      %s37 = sshll.u32 [#allocation7], 4
      %s38 = int_to_ptr.vmem [resolvable:$true] %s37
      %40 = dma.hbm_to_vmem [thread:$0]  %s36, 128, %s38, [#allocation8]
    $region9: #{tpu_custom_call.1} parent=1 // pred_fallthru
      _
    // Predicated region
    $region10: #{tpu_custom_call.1} parent=1 // pred_check
      _
    $region11: #{tpu_custom_call.1} parent=1 // pred_check_branch
      %42 = sbr.rel (0) target = $region13
    $region12: #{tpu_custom_call.1} parent=1 // pred_region
      %44 = vsyncadd [#allocation8], 0
      %s46 = sshll.u32 %s2, 4
      %s47 = int_to_ptr.hbm [resolvable:$true] %s46
      %s48 = sshll.u32 [#allocation9], 4
      %s49 = int_to_ptr.vmem [resolvable:$true] %s48
      %51 = dma.hbm_to_vmem [thread:$0]  %s47, 128, %s49, [#allocation8]
    $region13: #{tpu_custom_call.1} parent=1 // pred_fallthru
      _
    // Predicated region
    $region14: #{tpu_custom_call.1} parent=1 // pred_check
      _
    $region15: #{tpu_custom_call.1} parent=1 // pred_check_branch
      %53 = sbr.rel (0) target = $region17
    $region16: #{tpu_custom_call.1} parent=1 // pred_region
      %55 = vsyncadd [#allocation11], 0
      %s56 = sshll.u32 %s3, 4
      %s57 = int_to_ptr.hbm [resolvable:$true] %s56
      %s58 = sshll.u32 [#allocation10], 4
      %s59 = int_to_ptr.vmem [resolvable:$true] %s58
      %64 = dma.hbm_to_vmem [thread:$0]  %s57, 8192, %s59, [#allocation11], 512, 512, 32
    $region17: #{tpu_custom_call.1} parent=1 // pred_fallthru
      _
    // Predicated region
    $region18: #{tpu_custom_call.1} parent=1 // pred_check
      _
    $region19: #{tpu_custom_call.1} parent=1 // pred_check_branch
      %66 = sbr.rel (0) target = $region21
    $region20: #{tpu_custom_call.1} parent=1 // pred_region
      %68 = dma.done [#allocation5], 4096
    $region21: #{tpu_custom_call.1} parent=1 // pred_fallthru
      _
    // Predicated region
    $region22: #{tpu_custom_call.1} parent=1 // pred_check
      _
    $region23: #{tpu_custom_call.1} parent=1 // pred_check_branch
      %70 = sbr.rel (0) target = $region25
    $region24: #{tpu_custom_call.1} parent=1 // pred_region
      %72 = dma.done [#allocation8], 128
    $region25: #{tpu_custom_call.1} parent=1 // pred_fallthru
      _
    // Predicated region
    $region26: #{tpu_custom_call.1} parent=1 // pred_check
      _
    $region27: #{tpu_custom_call.1} parent=1 // pred_check_branch
      %74 = sbr.rel (0) target = $region29
    $region28: #{tpu_custom_call.1} parent=1 // pred_region
      %76 = dma.done [#allocation8], 128
    $region29: #{tpu_custom_call.1} parent=1 // pred_fallthru
      _
    // Predicated region
    $region30: #{tpu_custom_call.1} parent=1 // pred_check
      _
    $region31: #{tpu_custom_call.1} parent=1 // pred_check_branch
      %78 = sbr.rel (0) target = $region33
    $region32: #{tpu_custom_call.1} parent=1 // pred_region
      %80 = dma.done [#allocation11], 8192
    $region33: #{tpu_custom_call.1} parent=1 // pred_fallthru
      _
    %p81 = scmp.eq.s32.totalorder 0, 0
    // Predicated region
    $region34: #{tpu_custom_call.1} parent=1 // pred_check
      %p82 = pneg %p81
    $region35: #{tpu_custom_call.1} parent=1 // pred_check_branch
      %84 = sbr.rel (%p82) target = $region37
    $region36: #{tpu_custom_call.1} parent=1 // pred_region
      %v85 = vld [vmem:[#allocation7] sm:$0xff]
      %86 = vst [vmem:[#allocation2] sm:$0xff] %v85
      %v87 = vld [vmem:[#allocation9] sm:$0xff]
      %88 = vst [vmem:[#allocation3] sm:$0xff] %v87
    $region37: #{tpu_custom_call.1} parent=1 // pred_fallthru
      _
    %v89 = vld [vmem:[#allocation10] sm:$0xff]
    %v90 = vld [vmem:[#allocation10 + $0x8] sm:$0xff]
    %v91 = vld [vmem:[#allocation10 + $0x10] sm:$0xff]
    %v92 = vld [vmem:[#allocation10 + $0x18] sm:$0xff]
    %v93 = vld [vmem:[#allocation10 + $0x20] sm:$0xff]
    %v94 = vld [vmem:[#allocation10 + $0x28] sm:$0xff]
    %v95 = vld [vmem:[#allocation10 + $0x30] sm:$0xff]
    %v96 = vld [vmem:[#allocation10 + $0x38] sm:$0xff]
    %v97 = vld [vmem:[#allocation10 + $0x40] sm:$0xff]
    %v98 = vld [vmem:[#allocation10 + $0x48] sm:$0xff]
    %v99 = vld [vmem:[#allocation10 + $0x50] sm:$0xff]
    %v100 = vld [vmem:[#allocation10 + $0x58] sm:$0xff]
    %v101 = vld [vmem:[#allocation10 + $0x60] sm:$0xff]
    %v102 = vld [vmem:[#allocation10 + $0x68] sm:$0xff]
    %v103 = vld [vmem:[#allocation10 + $0x70] sm:$0xff]
    %v104 = vld [vmem:[#allocation10 + $0x78] sm:$0xff]
    %v105 = vld [vmem:[#allocation10 + $0x80] sm:$0xff]
    %v106 = vld [vmem:[#allocation10 + $0x88] sm:$0xff]
    %v107 = vld [vmem:[#allocation10 + $0x90] sm:$0xff]
    %v108 = vld [vmem:[#allocation10 + $0x98] sm:$0xff]
    %v109 = vld [vmem:[#allocation10 + $0xa0] sm:$0xff]
    %v110 = vld [vmem:[#allocation10 + $0xa8] sm:$0xff]
    %v111 = vld [vmem:[#allocation10 + $0xb0] sm:$0xff]
    %v112 = vld [vmem:[#allocation10 + $0xb8] sm:$0xff]
    %v113 = vld [vmem:[#allocation10 + $0xc0] sm:$0xff]
    %v114 = vld [vmem:[#allocation10 + $0xc8] sm:$0xff]
    %v115 = vld [vmem:[#allocation10 + $0xd0] sm:$0xff]
    %v116 = vld [vmem:[#allocation10 + $0xd8] sm:$0xff]
    %v117 = vld [vmem:[#allocation10 + $0xe0] sm:$0xff]
    %v118 = vld [vmem:[#allocation10 + $0xe8] sm:$0xff]
    %v119 = vld [vmem:[#allocation10 + $0xf0] sm:$0xff]
    %v120 = vld [vmem:[#allocation10 + $0xf8] sm:$0xff]
    %v121 = vld [vmem:[#allocation10 + $0x100] sm:$0xff]
    %v122 = vld [vmem:[#allocation10 + $0x108] sm:$0xff]
    %v123 = vld [vmem:[#allocation10 + $0x110] sm:$0xff]
    %v124 = vld [vmem:[#allocation10 + $0x118] sm:$0xff]
    %v125 = vld [vmem:[#allocation10 + $0x120] sm:$0xff]
    %v126 = vld [vmem:[#allocation10 + $0x128] sm:$0xff]
    %v127 = vld [vmem:[#allocation10 + $0x130] sm:$0xff]
    %v128 = vld [vmem:[#allocation10 + $0x138] sm:$0xff]
    %v129 = vld [vmem:[#allocation10 + $0x140] sm:$0xff]
    %v130 = vld [vmem:[#allocation10 + $0x148] sm:$0xff]
    %v131 = vld [vmem:[#allocation10 + $0x150] sm:$0xff]
    %v132 = vld [vmem:[#allocation10 + $0x158] sm:$0xff]
    %v133 = vld [vmem:[#allocation10 + $0x160] sm:$0xff]
    %v134 = vld [vmem:[#allocation10 + $0x168] sm:$0xff]
    %v135 = vld [vmem:[#allocation10 + $0x170] sm:$0xff]
    %v136 = vld [vmem:[#allocation10 + $0x178] sm:$0xff]
    %v137 = vld [vmem:[#allocation10 + $0x180] sm:$0xff]
    %v138 = vld [vmem:[#allocation10 + $0x188] sm:$0xff]
    %v139 = vld [vmem:[#allocation10 + $0x190] sm:$0xff]
    %v140 = vld [vmem:[#allocation10 + $0x198] sm:$0xff]
    %v141 = vld [vmem:[#allocation10 + $0x1a0] sm:$0xff]
    %v142 = vld [vmem:[#allocation10 + $0x1a8] sm:$0xff]
    %v143 = vld [vmem:[#allocation10 + $0x1b0] sm:$0xff]
    %v144 = vld [vmem:[#allocation10 + $0x1b8] sm:$0xff]
    %v145 = vld [vmem:[#allocation10 + $0x1c0] sm:$0xff]
    %v146 = vld [vmem:[#allocation10 + $0x1c8] sm:$0xff]
    %v147 = vld [vmem:[#allocation10 + $0x1d0] sm:$0xff]
    %v148 = vld [vmem:[#allocation10 + $0x1d8] sm:$0xff]
    %v149 = vld [vmem:[#allocation10 + $0x1e0] sm:$0xff]
    %v150 = vld [vmem:[#allocation10 + $0x1e8] sm:$0xff]
    %v151 = vld [vmem:[#allocation10 + $0x1f0] sm:$0xff]
    %v152 = vld [vmem:[#allocation10 + $0x1f8] sm:$0xff]
    %v153 = vld [vmem:[#allocation2] sm:$0xff]
    %v154 = vld [vmem:[#allocation3] sm:$0xff]
    %155 = vmatpush.msra.mxu0 %v149
    %156 = vmatpush.msra.mxu0 %v145
    %157 = vmatpush.msra.mxu0 %v141
    %158 = vmatpush.msra.mxu0 %v137
    %159 = vmatpush.msra.mxu0 %v133
    %160 = vmatpush.msra.mxu0 %v129
    %161 = vmatpush.msra.mxu0 %v125
    %162 = vmatpush.msra.mxu0 %v121
    %163 = vmatpush.msra.mxu0 %v117
    %164 = vmatpush.msra.mxu0 %v113
    %165 = vmatpush.msra.mxu0 %v109
    %166 = vmatpush.msra.mxu0 %v105
    %167 = vmatpush.msra.mxu0 %v101
    %168 = vmatpush.msra.mxu0 %v97
    %169 = vmatpush.msra.mxu0 %v93
    %170 = vmatpush.msra.mxu0 %v89
    %171 = vmatmul.f32.gmra.mxu0 %v153
    %v172 = vpop.f32.mrf.mxu0
    %v173 = vadd.f32 0.0, %v172
    %174 = vdwg.mxu0
    %175 = vmatpush.msra.mxu0 %v150
    %176 = vmatpush.msra.mxu0 %v146
    %177 = vmatpush.msra.mxu0 %v142
    %178 = vmatpush.msra.mxu0 %v138
    %179 = vmatpush.msra.mxu0 %v134
    %180 = vmatpush.msra.mxu0 %v130
    %181 = vmatpush.msra.mxu0 %v126
    %182 = vmatpush.msra.mxu0 %v122
    %183 = vmatpush.msra.mxu0 %v118
    %184 = vmatpush.msra.mxu0 %v114
    %185 = vmatpush.msra.mxu0 %v110
    %186 = vmatpush.msra.mxu0 %v106
    %187 = vmatpush.msra.mxu0 %v102
    %188 = vmatpush.msra.mxu0 %v98
    %189 = vmatpush.msra.mxu0 %v94
    %190 = vmatpush.msra.mxu0 %v90
    %191 = vmatmul.f32.gmra.mxu0 %v153
    %v192 = vpop.f32.mrf.mxu0
    %v193 = vadd.f32 0.0, %v192
    %194 = vdwg.mxu0
    %195 = vmatpush.msra.mxu0 %v151
    %196 = vmatpush.msra.mxu0 %v147
    %197 = vmatpush.msra.mxu0 %v143
    %198 = vmatpush.msra.mxu0 %v139
    %199 = vmatpush.msra.mxu0 %v135
    %200 = vmatpush.msra.mxu0 %v131
    %201 = vmatpush.msra.mxu0 %v127
    %202 = vmatpush.msra.mxu0 %v123
    %203 = vmatpush.msra.mxu0 %v119
    %204 = vmatpush.msra.mxu0 %v115
    %205 = vmatpush.msra.mxu0 %v111
    %206 = vmatpush.msra.mxu0 %v107
    %207 = vmatpush.msra.mxu0 %v103
    %208 = vmatpush.msra.mxu0 %v99
    %209 = vmatpush.msra.mxu0 %v95
    %210 = vmatpush.msra.mxu0 %v91
    %211 = vmatmul.f32.gmra.mxu0 %v153
    %v212 = vpop.f32.mrf.mxu0
    %v213 = vadd.f32 0.0, %v212
    %214 = vdwg.mxu0
    %215 = vmatpush.msra.mxu0 %v152
    %216 = vmatpush.msra.mxu0 %v148
    %217 = vmatpush.msra.mxu0 %v144
    %218 = vmatpush.msra.mxu0 %v140
    %219 = vmatpush.msra.mxu0 %v136
    %220 = vmatpush.msra.mxu0 %v132
    %221 = vmatpush.msra.mxu0 %v128
    %222 = vmatpush.msra.mxu0 %v124
    %223 = vmatpush.msra.mxu0 %v120
    %224 = vmatpush.msra.mxu0 %v116
    %225 = vmatpush.msra.mxu0 %v112
    %226 = vmatpush.msra.mxu0 %v108
    %227 = vmatpush.msra.mxu0 %v104
    %228 = vmatpush.msra.mxu0 %v100
    %229 = vmatpush.msra.mxu0 %v96
    %230 = vmatpush.msra.mxu0 %v92
    %231 = vmatmul.f32.gmra.mxu0 %v153
    %v232 = vpop.f32.mrf.mxu0
    %v233 = vadd.f32 0.0, %v232
    %234 = vdwg.mxu0
    %v235 = vld [vmem:[#allocation4] sm:$0xff]
    %v236 = vld [vmem:[#allocation4 + $0x8] sm:$0xff]
    %v237 = vld [vmem:[#allocation4 + $0x10] sm:$0xff]
    %v238 = vld [vmem:[#allocation4 + $0x18] sm:$0xff]
    %v239 = vadd.f32 %v235, %v173
    %v240 = vadd.f32 %v236, %v193
    %v241 = vadd.f32 %v237, %v213
    %v242 = vadd.f32 %v238, %v233
    %v243 = vmul.f32 %v239, 0.5
    %v244 = vtanh.pop %v243
    %v245 = vmul.f32 %v244, 0.5
    %v246 = vadd.f32 %v245, 0.5
    %v247 = vmul.f32 %v240, 0.5
    %v248 = vtanh.pop %v247
    %v249 = vmul.f32 %v248, 0.5
    %v250 = vadd.f32 %v249, 0.5
    %v251 = vtanh.pop %v241
    %v252 = vmul.f32 %v242, 0.5
    %v253 = vtanh.pop %v252
    %v254 = vmul.f32 %v253, 0.5
    %v255 = vadd.f32 %v254, 0.5
    %v256 = vmul.f32 %v250, %v154
    %v257 = vmul.f32 %v246, %v251
    %v258 = vadd.f32 %v256, %v257
    %v259 = vtanh.pop %v258
    %v260 = vmul.f32 %v255, %v259
    %261 = vst [vmem:[#allocation12] sm:$0xff] %v260
    %262 = vmatpush.msra.mxu0 %v149
    %263 = vmatpush.msra.mxu0 %v145
    %264 = vmatpush.msra.mxu0 %v141
    %265 = vmatpush.msra.mxu0 %v137
    %266 = vmatpush.msra.mxu0 %v133
    %267 = vmatpush.msra.mxu0 %v129
    %268 = vmatpush.msra.mxu0 %v125
    %269 = vmatpush.msra.mxu0 %v121
    %270 = vmatpush.msra.mxu0 %v117
    %271 = vmatpush.msra.mxu0 %v113
    %272 = vmatpush.msra.mxu0 %v109
    %273 = vmatpush.msra.mxu0 %v105
    %274 = vmatpush.msra.mxu0 %v101
    %275 = vmatpush.msra.mxu0 %v97
    %276 = vmatpush.msra.mxu0 %v93
    %277 = vmatpush.msra.mxu0 %v89
    %278 = vmatmul.f32.gmra.mxu0 %v260
    %v279 = vpop.f32.mrf.mxu0
    %v280 = vadd.f32 0.0, %v279
    %281 = vdwg.mxu0
    %282 = vmatpush.msra.mxu0 %v150
    %283 = vmatpush.msra.mxu0 %v146
    %284 = vmatpush.msra.mxu0 %v142
    %285 = vmatpush.msra.mxu0 %v138
    %286 = vmatpush.msra.mxu0 %v134
    %287 = vmatpush.msra.mxu0 %v130
    %288 = vmatpush.msra.mxu0 %v126
    %289 = vmatpush.msra.mxu0 %v122
    %290 = vmatpush.msra.mxu0 %v118
    %291 = vmatpush.msra.mxu0 %v114
    %292 = vmatpush.msra.mxu0 %v110
    %293 = vmatpush.msra.mxu0 %v106
    %294 = vmatpush.msra.mxu0 %v102
    %295 = vmatpush.msra.mxu0 %v98
    %296 = vmatpush.msra.mxu0 %v94
    %297 = vmatpush.msra.mxu0 %v90
    %298 = vmatmul.f32.gmra.mxu0 %v260
    %v299 = vpop.f32.mrf.mxu0
    %v300 = vadd.f32 0.0, %v299
    %301 = vdwg.mxu0
    %302 = vmatpush.msra.mxu0 %v151
    %303 = vmatpush.msra.mxu0 %v147
    %304 = vmatpush.msra.mxu0 %v143
    %305 = vmatpush.msra.mxu0 %v139
    %306 = vmatpush.msra.mxu0 %v135
    %307 = vmatpush.msra.mxu0 %v131
    %308 = vmatpush.msra.mxu0 %v127
    %309 = vmatpush.msra.mxu0 %v123
    %310 = vmatpush.msra.mxu0 %v119
    %311 = vmatpush.msra.mxu0 %v115
    %312 = vmatpush.msra.mxu0 %v111
    %313 = vmatpush.msra.mxu0 %v107
    %314 = vmatpush.msra.mxu0 %v103
    %315 = vmatpush.msra.mxu0 %v99
    %316 = vmatpush.msra.mxu0 %v95
    %317 = vmatpush.msra.mxu0 %v91
    %318 = vmatmul.f32.gmra.mxu0 %v260
    %v319 = vpop.f32.mrf.mxu0
    %v320 = vadd.f32 0.0, %v319
    %321 = vdwg.mxu0
    %322 = vmatpush.msra.mxu0 %v152
    %323 = vmatpush.msra.mxu0 %v148
    %324 = vmatpush.msra.mxu0 %v144
    %325 = vmatpush.msra.mxu0 %v140
    %326 = vmatpush.msra.mxu0 %v136
    %327 = vmatpush.msra.mxu0 %v132
    %328 = vmatpush.msra.mxu0 %v128
    %329 = vmatpush.msra.mxu0 %v124
    %330 = vmatpush.msra.mxu0 %v120
    %331 = vmatpush.msra.mxu0 %v116
    %332 = vmatpush.msra.mxu0 %v112
    %333 = vmatpush.msra.mxu0 %v108
    %334 = vmatpush.msra.mxu0 %v104
    %335 = vmatpush.msra.mxu0 %v100
    %336 = vmatpush.msra.mxu0 %v96
    %337 = vmatpush.msra.mxu0 %v92
    %338 = vmatmul.f32.gmra.mxu0 %v260
    %v339 = vpop.f32.mrf.mxu0
    %v340 = vadd.f32 0.0, %v339
    %341 = vdwg.mxu0
    %s342 = scalar_lea.vmem [#allocation4], 32
    %v343 = vld [vmem:[%s342] sm:$0xff]
    %v344 = vld [vmem:[%s342 + $0x8] sm:$0xff]
    %v345 = vld [vmem:[%s342 + $0x10] sm:$0xff]
    %v346 = vld [vmem:[%s342 + $0x18] sm:$0xff]
    %v347 = vadd.f32 %v343, %v280
    %v348 = vadd.f32 %v344, %v300
    %v349 = vadd.f32 %v345, %v320
    %v350 = vadd.f32 %v346, %v340
    %v351 = vmul.f32 %v347, 0.5
    %v352 = vtanh.pop %v351
    %v353 = vmul.f32 %v352, 0.5
    %v354 = vadd.f32 %v353, 0.5
    %v355 = vmul.f32 %v348, 0.5
    %v356 = vtanh.pop %v355
    %v357 = vmul.f32 %v356, 0.5
    %v358 = vadd.f32 %v357, 0.5
    %v359 = vtanh.pop %v349
    %v360 = vmul.f32 %v350, 0.5
    %v361 = vtanh.pop %v360
    %v362 = vmul.f32 %v361, 0.5
    %v363 = vadd.f32 %v362, 0.5
    %v364 = vmul.f32 %v358, %v258
    %v365 = vmul.f32 %v354, %v359
    %v366 = vadd.f32 %v364, %v365
    %v367 = vtanh.pop %v366
    %v368 = vmul.f32 %v363, %v367
    %s369 = scalar_lea.vmem [#allocation12], 8
    %370 = vst [vmem:[%s369] sm:$0xff] %v368
    %371 = vmatpush.msra.mxu0 %v149
    %372 = vmatpush.msra.mxu0 %v145
    %373 = vmatpush.msra.mxu0 %v141
    %374 = vmatpush.msra.mxu0 %v137
    %375 = vmatpush.msra.mxu0 %v133
    %376 = vmatpush.msra.mxu0 %v129
    %377 = vmatpush.msra.mxu0 %v125
    %378 = vmatpush.msra.mxu0 %v121
    %379 = vmatpush.msra.mxu0 %v117
    %380 = vmatpush.msra.mxu0 %v113
    %381 = vmatpush.msra.mxu0 %v109
    %382 = vmatpush.msra.mxu0 %v105
    %383 = vmatpush.msra.mxu0 %v101
    %384 = vmatpush.msra.mxu0 %v97
    %385 = vmatpush.msra.mxu0 %v93
    %386 = vmatpush.msra.mxu0 %v89
    %387 = vmatmul.f32.gmra.mxu0 %v368
    %v388 = vpop.f32.mrf.mxu0
    %v389 = vadd.f32 0.0, %v388
    %390 = vdwg.mxu0
    %391 = vmatpush.msra.mxu0 %v150
    %392 = vmatpush.msra.mxu0 %v146
    %393 = vmatpush.msra.mxu0 %v142
    %394 = vmatpush.msra.mxu0 %v138
    %395 = vmatpush.msra.mxu0 %v134
    %396 = vmatpush.msra.mxu0 %v130
    %397 = vmatpush.msra.mxu0 %v126
    %398 = vmatpush.msra.mxu0 %v122
    %399 = vmatpush.msra.mxu0 %v118
    %400 = vmatpush.msra.mxu0 %v114
    %401 = vmatpush.msra.mxu0 %v110
    %402 = vmatpush.msra.mxu0 %v106
    %403 = vmatpush.msra.mxu0 %v102
    %404 = vmatpush.msra.mxu0 %v98
    %405 = vmatpush.msra.mxu0 %v94
    %406 = vmatpush.msra.mxu0 %v90
    %407 = vmatmul.f32.gmra.mxu0 %v368
    %v408 = vpop.f32.mrf.mxu0
    %v409 = vadd.f32 0.0, %v408
    %410 = vdwg.mxu0
    %411 = vmatpush.msra.mxu0 %v151
    %412 = vmatpush.msra.mxu0 %v147
    %413 = vmatpush.msra.mxu0 %v143
    %414 = vmatpush.msra.mxu0 %v139
    %415 = vmatpush.msra.mxu0 %v135
    %416 = vmatpush.msra.mxu0 %v131
    %417 = vmatpush.msra.mxu0 %v127
    %418 = vmatpush.msra.mxu0 %v123
    %419 = vmatpush.msra.mxu0 %v119
    %420 = vmatpush.msra.mxu0 %v115
    %421 = vmatpush.msra.mxu0 %v111
    %422 = vmatpush.msra.mxu0 %v107
    %423 = vmatpush.msra.mxu0 %v103
    %424 = vmatpush.msra.mxu0 %v99
    %425 = vmatpush.msra.mxu0 %v95
    %426 = vmatpush.msra.mxu0 %v91
    %427 = vmatmul.f32.gmra.mxu0 %v368
    %v428 = vpop.f32.mrf.mxu0
    %v429 = vadd.f32 0.0, %v428
    %430 = vdwg.mxu0
    %431 = vmatpush.msra.mxu0 %v152
    %432 = vmatpush.msra.mxu0 %v148
    %433 = vmatpush.msra.mxu0 %v144
    %434 = vmatpush.msra.mxu0 %v140
    %435 = vmatpush.msra.mxu0 %v136
    %436 = vmatpush.msra.mxu0 %v132
    %437 = vmatpush.msra.mxu0 %v128
    %438 = vmatpush.msra.mxu0 %v124
    %439 = vmatpush.msra.mxu0 %v120
    %440 = vmatpush.msra.mxu0 %v116
    %441 = vmatpush.msra.mxu0 %v112
    %442 = vmatpush.msra.mxu0 %v108
    %443 = vmatpush.msra.mxu0 %v104
    %444 = vmatpush.msra.mxu0 %v100
    %445 = vmatpush.msra.mxu0 %v96
    %446 = vmatpush.msra.mxu0 %v92
    %447 = vmatmul.f32.gmra.mxu0 %v368
    %v448 = vpop.f32.mrf.mxu0
    %v449 = vadd.f32 0.0, %v448
    %450 = vdwg.mxu0
    %s451 = scalar_lea.vmem [#allocation4], 64
    %v452 = vld [vmem:[%s451] sm:$0xff]
    %v453 = vld [vmem:[%s451 + $0x8] sm:$0xff]
    %v454 = vld [vmem:[%s451 + $0x10] sm:$0xff]
    %v455 = vld [vmem:[%s451 + $0x18] sm:$0xff]
    %v456 = vadd.f32 %v452, %v389
    %v457 = vadd.f32 %v453, %v409
    %v458 = vadd.f32 %v454, %v429
    %v459 = vadd.f32 %v455, %v449
    %v460 = vmul.f32 %v456, 0.5
    %v461 = vtanh.pop %v460
    %v462 = vmul.f32 %v461, 0.5
    %v463 = vadd.f32 %v462, 0.5
    %v464 = vmul.f32 %v457, 0.5
    %v465 = vtanh.pop %v464
    %v466 = vmul.f32 %v465, 0.5
    %v467 = vadd.f32 %v466, 0.5
    %v468 = vtanh.pop %v458
    %v469 = vmul.f32 %v459, 0.5
    %v470 = vtanh.pop %v469
    %v471 = vmul.f32 %v470, 0.5
    %v472 = vadd.f32 %v471, 0.5
    %v473 = vmul.f32 %v467, %v366
    %v474 = vmul.f32 %v463, %v468
    %v475 = vadd.f32 %v473, %v474
    %v476 = vtanh.pop %v475
    %v477 = vmul.f32 %v472, %v476
    %s478 = scalar_lea.vmem [#allocation12], 16
    %479 = vst [vmem:[%s478] sm:$0xff] %v477
    %480 = vmatpush.msra.mxu0 %v149
    %481 = vmatpush.msra.mxu0 %v145
    %482 = vmatpush.msra.mxu0 %v141
    %483 = vmatpush.msra.mxu0 %v137
    %484 = vmatpush.msra.mxu0 %v133
    %485 = vmatpush.msra.mxu0 %v129
    %486 = vmatpush.msra.mxu0 %v125
    %487 = vmatpush.msra.mxu0 %v121
    %488 = vmatpush.msra.mxu0 %v117
    %489 = vmatpush.msra.mxu0 %v113
    %490 = vmatpush.msra.mxu0 %v109
    %491 = vmatpush.msra.mxu0 %v105
    %492 = vmatpush.msra.mxu0 %v101
    %493 = vmatpush.msra.mxu0 %v97
    %494 = vmatpush.msra.mxu0 %v93
    %495 = vmatpush.msra.mxu0 %v89
    %496 = vmatmul.f32.gmra.mxu0 %v477
    %v497 = vpop.f32.mrf.mxu0
    %v498 = vadd.f32 0.0, %v497
    %499 = vdwg.mxu0
    %500 = vmatpush.msra.mxu0 %v150
    %501 = vmatpush.msra.mxu0 %v146
    %502 = vmatpush.msra.mxu0 %v142
    %503 = vmatpush.msra.mxu0 %v138
    %504 = vmatpush.msra.mxu0 %v134
    %505 = vmatpush.msra.mxu0 %v130
    %506 = vmatpush.msra.mxu0 %v126
    %507 = vmatpush.msra.mxu0 %v122
    %508 = vmatpush.msra.mxu0 %v118
    %509 = vmatpush.msra.mxu0 %v114
    %510 = vmatpush.msra.mxu0 %v110
    %511 = vmatpush.msra.mxu0 %v106
    %512 = vmatpush.msra.mxu0 %v102
    %513 = vmatpush.msra.mxu0 %v98
    %514 = vmatpush.msra.mxu0 %v94
    %515 = vmatpush.msra.mxu0 %v90
    %516 = vmatmul.f32.gmra.mxu0 %v477
    %v517 = vpop.f32.mrf.mxu0
    %v518 = vadd.f32 0.0, %v517
    %519 = vdwg.mxu0
    %520 = vmatpush.msra.mxu0 %v151
    %521 = vmatpush.msra.mxu0 %v147
    %522 = vmatpush.msra.mxu0 %v143
    %523 = vmatpush.msra.mxu0 %v139
    %524 = vmatpush.msra.mxu0 %v135
    %525 = vmatpush.msra.mxu0 %v131
    %526 = vmatpush.msra.mxu0 %v127
    %527 = vmatpush.msra.mxu0 %v123
    %528 = vmatpush.msra.mxu0 %v119
    %529 = vmatpush.msra.mxu0 %v115
    %530 = vmatpush.msra.mxu0 %v111
    %531 = vmatpush.msra.mxu0 %v107
    %532 = vmatpush.msra.mxu0 %v103
    %533 = vmatpush.msra.mxu0 %v99
    %534 = vmatpush.msra.mxu0 %v95
    %535 = vmatpush.msra.mxu0 %v91
    %536 = vmatmul.f32.gmra.mxu0 %v477
    %v537 = vpop.f32.mrf.mxu0
    %v538 = vadd.f32 0.0, %v537
    %539 = vdwg.mxu0
    %540 = vmatpush.msra.mxu0 %v152
    %541 = vmatpush.msra.mxu0 %v148
    %542 = vmatpush.msra.mxu0 %v144
    %543 = vmatpush.msra.mxu0 %v140
    %544 = vmatpush.msra.mxu0 %v136
    %545 = vmatpush.msra.mxu0 %v132
    %546 = vmatpush.msra.mxu0 %v128
    %547 = vmatpush.msra.mxu0 %v124
    %548 = vmatpush.msra.mxu0 %v120
    %549 = vmatpush.msra.mxu0 %v116
    %550 = vmatpush.msra.mxu0 %v112
    %551 = vmatpush.msra.mxu0 %v108
    %552 = vmatpush.msra.mxu0 %v104
    %553 = vmatpush.msra.mxu0 %v100
    %554 = vmatpush.msra.mxu0 %v96
    %555 = vmatpush.msra.mxu0 %v92
    %556 = vmatmul.f32.gmra.mxu0 %v477
    %v557 = vpop.f32.mrf.mxu0
    %v558 = vadd.f32 0.0, %v557
    %559 = vdwg.mxu0
    %s560 = scalar_lea.vmem [#allocation4], 96
    %v561 = vld [vmem:[%s560] sm:$0xff]
    %v562 = vld [vmem:[%s560 + $0x8] sm:$0xff]
    %v563 = vld [vmem:[%s560 + $0x10] sm:$0xff]
    %v564 = vld [vmem:[%s560 + $0x18] sm:$0xff]
    %v565 = vadd.f32 %v561, %v498
    %v566 = vadd.f32 %v562, %v518
    %v567 = vadd.f32 %v563, %v538
    %v568 = vadd.f32 %v564, %v558
    %v569 = vmul.f32 %v565, 0.5
    %v570 = vtanh.pop %v569
    %v571 = vmul.f32 %v570, 0.5
    %v572 = vadd.f32 %v571, 0.5
    %v573 = vmul.f32 %v566, 0.5
    %v574 = vtanh.pop %v573
    %v575 = vmul.f32 %v574, 0.5
    %v576 = vadd.f32 %v575, 0.5
    %v577 = vtanh.pop %v567
    %v578 = vmul.f32 %v568, 0.5
    %v579 = vtanh.pop %v578
    %v580 = vmul.f32 %v579, 0.5
    %v581 = vadd.f32 %v580, 0.5
    %v582 = vmul.f32 %v576, %v475
    %v583 = vmul.f32 %v572, %v577
    %v584 = vadd.f32 %v582, %v583
    %v585 = vtanh.pop %v584
    %v586 = vmul.f32 %v581, %v585
    %s587 = scalar_lea.vmem [#allocation12], 24
    %588 = vst [vmem:[%s587] sm:$0xff] %v586
    %589 = vmatpush.msra.mxu0 %v149
    %590 = vmatpush.msra.mxu0 %v145
    %591 = vmatpush.msra.mxu0 %v141
    %592 = vmatpush.msra.mxu0 %v137
    %593 = vmatpush.msra.mxu0 %v133
    %594 = vmatpush.msra.mxu0 %v129
    %595 = vmatpush.msra.mxu0 %v125
    %596 = vmatpush.msra.mxu0 %v121
    %597 = vmatpush.msra.mxu0 %v117
    %598 = vmatpush.msra.mxu0 %v113
    %599 = vmatpush.msra.mxu0 %v109
    %600 = vmatpush.msra.mxu0 %v105
    %601 = vmatpush.msra.mxu0 %v101
    %602 = vmatpush.msra.mxu0 %v97
    %603 = vmatpush.msra.mxu0 %v93
    %604 = vmatpush.msra.mxu0 %v89
    %605 = vmatmul.f32.gmra.mxu0 %v586
    %v606 = vpop.f32.mrf.mxu0
    %v607 = vadd.f32 0.0, %v606
    %608 = vdwg.mxu0
    %609 = vmatpush.msra.mxu0 %v150
    %610 = vmatpush.msra.mxu0 %v146
    %611 = vmatpush.msra.mxu0 %v142
    %612 = vmatpush.msra.mxu0 %v138
    %613 = vmatpush.msra.mxu0 %v134
    %614 = vmatpush.msra.mxu0 %v130
    %615 = vmatpush.msra.mxu0 %v126
    %616 = vmatpush.msra.mxu0 %v122
    %617 = vmatpush.msra.mxu0 %v118
    %618 = vmatpush.msra.mxu0 %v114
    %619 = vmatpush.msra.mxu0 %v110
    %620 = vmatpush.msra.mxu0 %v106
    %621 = vmatpush.msra.mxu0 %v102
    %622 = vmatpush.msra.mxu0 %v98
    %623 = vmatpush.msra.mxu0 %v94
    %624 = vmatpush.msra.mxu0 %v90
    %625 = vmatmul.f32.gmra.mxu0 %v586
    %v626 = vpop.f32.mrf.mxu0
    %v627 = vadd.f32 0.0, %v626
    %628 = vdwg.mxu0
    %629 = vmatpush.msra.mxu0 %v151
    %630 = vmatpush.msra.mxu0 %v147
    %631 = vmatpush.msra.mxu0 %v143
    %632 = vmatpush.msra.mxu0 %v139
    %633 = vmatpush.msra.mxu0 %v135
    %634 = vmatpush.msra.mxu0 %v131
    %635 = vmatpush.msra.mxu0 %v127
    %636 = vmatpush.msra.mxu0 %v123
    %637 = vmatpush.msra.mxu0 %v119
    %638 = vmatpush.msra.mxu0 %v115
    %639 = vmatpush.msra.mxu0 %v111
    %640 = vmatpush.msra.mxu0 %v107
    %641 = vmatpush.msra.mxu0 %v103
    %642 = vmatpush.msra.mxu0 %v99
    %643 = vmatpush.msra.mxu0 %v95
    %644 = vmatpush.msra.mxu0 %v91
    %645 = vmatmul.f32.gmra.mxu0 %v586
    %v646 = vpop.f32.mrf.mxu0
    %v647 = vadd.f32 0.0, %v646
    %648 = vdwg.mxu0
    %649 = vmatpush.msra.mxu0 %v152
    %650 = vmatpush.msra.mxu0 %v148
    %651 = vmatpush.msra.mxu0 %v144
    %652 = vmatpush.msra.mxu0 %v140
    %653 = vmatpush.msra.mxu0 %v136
    %654 = vmatpush.msra.mxu0 %v132
    %655 = vmatpush.msra.mxu0 %v128
    %656 = vmatpush.msra.mxu0 %v124
    %657 = vmatpush.msra.mxu0 %v120
    %658 = vmatpush.msra.mxu0 %v116
    %659 = vmatpush.msra.mxu0 %v112
    %660 = vmatpush.msra.mxu0 %v108
    %661 = vmatpush.msra.mxu0 %v104
    %662 = vmatpush.msra.mxu0 %v100
    %663 = vmatpush.msra.mxu0 %v96
    %664 = vmatpush.msra.mxu0 %v92
    %665 = vmatmul.f32.gmra.mxu0 %v586
    %v666 = vpop.f32.mrf.mxu0
    %v667 = vadd.f32 0.0, %v666
    %668 = vdwg.mxu0
    %s669 = scalar_lea.vmem [#allocation4], 128
    %v670 = vld [vmem:[%s669] sm:$0xff]
    %v671 = vld [vmem:[%s669 + $0x8] sm:$0xff]
    %v672 = vld [vmem:[%s669 + $0x10] sm:$0xff]
    %v673 = vld [vmem:[%s669 + $0x18] sm:$0xff]
    %v674 = vadd.f32 %v670, %v607
    %v675 = vadd.f32 %v671, %v627
    %v676 = vadd.f32 %v672, %v647
    %v677 = vadd.f32 %v673, %v667
    %v678 = vmul.f32 %v674, 0.5
    %v679 = vtanh.pop %v678
    %v680 = vmul.f32 %v679, 0.5
    %v681 = vadd.f32 %v680, 0.5
    %v682 = vmul.f32 %v675, 0.5
    %v683 = vtanh.pop %v682
    %v684 = vmul.f32 %v683, 0.5
    %v685 = vadd.f32 %v684, 0.5
    %v686 = vtanh.pop %v676
    %v687 = vmul.f32 %v677, 0.5
    %v688 = vtanh.pop %v687
    %v689 = vmul.f32 %v688, 0.5
    %v690 = vadd.f32 %v689, 0.5
    %v691 = vmul.f32 %v685, %v584
    %v692 = vmul.f32 %v681, %v686
    %v693 = vadd.f32 %v691, %v692
    %v694 = vtanh.pop %v693
    %v695 = vmul.f32 %v690, %v694
    %s696 = scalar_lea.vmem [#allocation12], 32
    %697 = vst [vmem:[%s696] sm:$0xff] %v695
    %698 = vmatpush.msra.mxu0 %v149
    %699 = vmatpush.msra.mxu0 %v145
    %700 = vmatpush.msra.mxu0 %v141
    %701 = vmatpush.msra.mxu0 %v137
    %702 = vmatpush.msra.mxu0 %v133
    %703 = vmatpush.msra.mxu0 %v129
    %704 = vmatpush.msra.mxu0 %v125
    %705 = vmatpush.msra.mxu0 %v121
    %706 = vmatpush.msra.mxu0 %v117
    %707 = vmatpush.msra.mxu0 %v113
    %708 = vmatpush.msra.mxu0 %v109
    %709 = vmatpush.msra.mxu0 %v105
    %710 = vmatpush.msra.mxu0 %v101
    %711 = vmatpush.msra.mxu0 %v97
    %712 = vmatpush.msra.mxu0 %v93
    %713 = vmatpush.msra.mxu0 %v89
    %714 = vmatmul.f32.gmra.mxu0 %v695
    %v715 = vpop.f32.mrf.mxu0
    %v716 = vadd.f32 0.0, %v715
    %717 = vdwg.mxu0
    %718 = vmatpush.msra.mxu0 %v150
    %719 = vmatpush.msra.mxu0 %v146
    %720 = vmatpush.msra.mxu0 %v142
    %721 = vmatpush.msra.mxu0 %v138
    %722 = vmatpush.msra.mxu0 %v134
    %723 = vmatpush.msra.mxu0 %v130
    %724 = vmatpush.msra.mxu0 %v126
    %725 = vmatpush.msra.mxu0 %v122
    %726 = vmatpush.msra.mxu0 %v118
    %727 = vmatpush.msra.mxu0 %v114
    %728 = vmatpush.msra.mxu0 %v110
    %729 = vmatpush.msra.mxu0 %v106
    %730 = vmatpush.msra.mxu0 %v102
    %731 = vmatpush.msra.mxu0 %v98
    %732 = vmatpush.msra.mxu0 %v94
    %733 = vmatpush.msra.mxu0 %v90
    %734 = vmatmul.f32.gmra.mxu0 %v695
    %v735 = vpop.f32.mrf.mxu0
    %v736 = vadd.f32 0.0, %v735
    %737 = vdwg.mxu0
    %738 = vmatpush.msra.mxu0 %v151
    %739 = vmatpush.msra.mxu0 %v147
    %740 = vmatpush.msra.mxu0 %v143
    %741 = vmatpush.msra.mxu0 %v139
    %742 = vmatpush.msra.mxu0 %v135
    %743 = vmatpush.msra.mxu0 %v131
    %744 = vmatpush.msra.mxu0 %v127
    %745 = vmatpush.msra.mxu0 %v123
    %746 = vmatpush.msra.mxu0 %v119
    %747 = vmatpush.msra.mxu0 %v115
    %748 = vmatpush.msra.mxu0 %v111
    %749 = vmatpush.msra.mxu0 %v107
    %750 = vmatpush.msra.mxu0 %v103
    %751 = vmatpush.msra.mxu0 %v99
    %752 = vmatpush.msra.mxu0 %v95
    %753 = vmatpush.msra.mxu0 %v91
    %754 = vmatmul.f32.gmra.mxu0 %v695
    %v755 = vpop.f32.mrf.mxu0
    %v756 = vadd.f32 0.0, %v755
    %757 = vdwg.mxu0
    %758 = vmatpush.msra.mxu0 %v152
    %759 = vmatpush.msra.mxu0 %v148
    %760 = vmatpush.msra.mxu0 %v144
    %761 = vmatpush.msra.mxu0 %v140
    %762 = vmatpush.msra.mxu0 %v136
    %763 = vmatpush.msra.mxu0 %v132
    %764 = vmatpush.msra.mxu0 %v128
    %765 = vmatpush.msra.mxu0 %v124
    %766 = vmatpush.msra.mxu0 %v120
    %767 = vmatpush.msra.mxu0 %v116
    %768 = vmatpush.msra.mxu0 %v112
    %769 = vmatpush.msra.mxu0 %v108
    %770 = vmatpush.msra.mxu0 %v104
    %771 = vmatpush.msra.mxu0 %v100
    %772 = vmatpush.msra.mxu0 %v96
    %773 = vmatpush.msra.mxu0 %v92
    %774 = vmatmul.f32.gmra.mxu0 %v695
    %v775 = vpop.f32.mrf.mxu0
    %v776 = vadd.f32 0.0, %v775
    %777 = vdwg.mxu0
    %s778 = scalar_lea.vmem [#allocation4], 160
    %v779 = vld [vmem:[%s778] sm:$0xff]
    %v780 = vld [vmem:[%s778 + $0x8] sm:$0xff]
    %v781 = vld [vmem:[%s778 + $0x10] sm:$0xff]
    %v782 = vld [vmem:[%s778 + $0x18] sm:$0xff]
    %v783 = vadd.f32 %v779, %v716
    %v784 = vadd.f32 %v780, %v736
    %v785 = vadd.f32 %v781, %v756
    %v786 = vadd.f32 %v782, %v776
    %v787 = vmul.f32 %v783, 0.5
    %v788 = vtanh.pop %v787
    %v789 = vmul.f32 %v788, 0.5
    %v790 = vadd.f32 %v789, 0.5
    %v791 = vmul.f32 %v784, 0.5
    %v792 = vtanh.pop %v791
    %v793 = vmul.f32 %v792, 0.5
    %v794 = vadd.f32 %v793, 0.5
    %v795 = vtanh.pop %v785
    %v796 = vmul.f32 %v786, 0.5
    %v797 = vtanh.pop %v796
    %v798 = vmul.f32 %v797, 0.5
    %v799 = vadd.f32 %v798, 0.5
    %v800 = vmul.f32 %v794, %v693
    %v801 = vmul.f32 %v790, %v795
    %v802 = vadd.f32 %v800, %v801
    %v803 = vtanh.pop %v802
    %v804 = vmul.f32 %v799, %v803
    %s805 = scalar_lea.vmem [#allocation12], 40
    %806 = vst [vmem:[%s805] sm:$0xff] %v804
    %807 = vmatpush.msra.mxu0 %v149
    %808 = vmatpush.msra.mxu0 %v145
    %809 = vmatpush.msra.mxu0 %v141
    %810 = vmatpush.msra.mxu0 %v137
    %811 = vmatpush.msra.mxu0 %v133
    %812 = vmatpush.msra.mxu0 %v129
    %813 = vmatpush.msra.mxu0 %v125
    %814 = vmatpush.msra.mxu0 %v121
    %815 = vmatpush.msra.mxu0 %v117
    %816 = vmatpush.msra.mxu0 %v113
    %817 = vmatpush.msra.mxu0 %v109
    %818 = vmatpush.msra.mxu0 %v105
    %819 = vmatpush.msra.mxu0 %v101
    %820 = vmatpush.msra.mxu0 %v97
    %821 = vmatpush.msra.mxu0 %v93
    %822 = vmatpush.msra.mxu0 %v89
    %823 = vmatmul.f32.gmra.mxu0 %v804
    %v824 = vpop.f32.mrf.mxu0
    %v825 = vadd.f32 0.0, %v824
    %826 = vdwg.mxu0
    %827 = vmatpush.msra.mxu0 %v150
    %828 = vmatpush.msra.mxu0 %v146
    %829 = vmatpush.msra.mxu0 %v142
    %830 = vmatpush.msra.mxu0 %v138
    %831 = vmatpush.msra.mxu0 %v134
    %832 = vmatpush.msra.mxu0 %v130
    %833 = vmatpush.msra.mxu0 %v126
    %834 = vmatpush.msra.mxu0 %v122
    %835 = vmatpush.msra.mxu0 %v118
    %836 = vmatpush.msra.mxu0 %v114
    %837 = vmatpush.msra.mxu0 %v110
    %838 = vmatpush.msra.mxu0 %v106
    %839 = vmatpush.msra.mxu0 %v102
    %840 = vmatpush.msra.mxu0 %v98
    %841 = vmatpush.msra.mxu0 %v94
    %842 = vmatpush.msra.mxu0 %v90
    %843 = vmatmul.f32.gmra.mxu0 %v804
    %v844 = vpop.f32.mrf.mxu0
    %v845 = vadd.f32 0.0, %v844
    %846 = vdwg.mxu0
    %847 = vmatpush.msra.mxu0 %v151
    %848 = vmatpush.msra.mxu0 %v147
    %849 = vmatpush.msra.mxu0 %v143
    %850 = vmatpush.msra.mxu0 %v139
    %851 = vmatpush.msra.mxu0 %v135
    %852 = vmatpush.msra.mxu0 %v131
    %853 = vmatpush.msra.mxu0 %v127
    %854 = vmatpush.msra.mxu0 %v123
    %855 = vmatpush.msra.mxu0 %v119
    %856 = vmatpush.msra.mxu0 %v115
    %857 = vmatpush.msra.mxu0 %v111
    %858 = vmatpush.msra.mxu0 %v107
    %859 = vmatpush.msra.mxu0 %v103
    %860 = vmatpush.msra.mxu0 %v99
    %861 = vmatpush.msra.mxu0 %v95
    %862 = vmatpush.msra.mxu0 %v91
    %863 = vmatmul.f32.gmra.mxu0 %v804
    %v864 = vpop.f32.mrf.mxu0
    %v865 = vadd.f32 0.0, %v864
    %866 = vdwg.mxu0
    %867 = vmatpush.msra.mxu0 %v152
    %868 = vmatpush.msra.mxu0 %v148
    %869 = vmatpush.msra.mxu0 %v144
    %870 = vmatpush.msra.mxu0 %v140
    %871 = vmatpush.msra.mxu0 %v136
    %872 = vmatpush.msra.mxu0 %v132
    %873 = vmatpush.msra.mxu0 %v128
    %874 = vmatpush.msra.mxu0 %v124
    %875 = vmatpush.msra.mxu0 %v120
    %876 = vmatpush.msra.mxu0 %v116
    %877 = vmatpush.msra.mxu0 %v112
    %878 = vmatpush.msra.mxu0 %v108
    %879 = vmatpush.msra.mxu0 %v104
    %880 = vmatpush.msra.mxu0 %v100
    %881 = vmatpush.msra.mxu0 %v96
    %882 = vmatpush.msra.mxu0 %v92
    %883 = vmatmul.f32.gmra.mxu0 %v804
    %v884 = vpop.f32.mrf.mxu0
    %v885 = vadd.f32 0.0, %v884
    %886 = vdwg.mxu0
    %s887 = scalar_lea.vmem [#allocation4], 192
    %v888 = vld [vmem:[%s887] sm:$0xff]
    %v889 = vld [vmem:[%s887 + $0x8] sm:$0xff]
    %v890 = vld [vmem:[%s887 + $0x10] sm:$0xff]
    %v891 = vld [vmem:[%s887 + $0x18] sm:$0xff]
    %v892 = vadd.f32 %v888, %v825
    %v893 = vadd.f32 %v889, %v845
    %v894 = vadd.f32 %v890, %v865
    %v895 = vadd.f32 %v891, %v885
    %v896 = vmul.f32 %v892, 0.5
    %v897 = vtanh.pop %v896
    %v898 = vmul.f32 %v897, 0.5
    %v899 = vadd.f32 %v898, 0.5
    %v900 = vmul.f32 %v893, 0.5
    %v901 = vtanh.pop %v900
    %v902 = vmul.f32 %v901, 0.5
    %v903 = vadd.f32 %v902, 0.5
    %v904 = vtanh.pop %v894
    %v905 = vmul.f32 %v895, 0.5
    %v906 = vtanh.pop %v905
    %v907 = vmul.f32 %v906, 0.5
    %v908 = vadd.f32 %v907, 0.5
    %v909 = vmul.f32 %v903, %v802
    %v910 = vmul.f32 %v899, %v904
    %v911 = vadd.f32 %v909, %v910
    %v912 = vtanh.pop %v911
    %v913 = vmul.f32 %v908, %v912
    %s914 = scalar_lea.vmem [#allocation12], 48
    %915 = vst [vmem:[%s914] sm:$0xff] %v913
    %916 = vmatpush.msra.mxu0 %v149
    %917 = vmatpush.msra.mxu0 %v145
    %918 = vmatpush.msra.mxu0 %v141
    %919 = vmatpush.msra.mxu0 %v137
    %920 = vmatpush.msra.mxu0 %v133
    %921 = vmatpush.msra.mxu0 %v129
    %922 = vmatpush.msra.mxu0 %v125
    %923 = vmatpush.msra.mxu0 %v121
    %924 = vmatpush.msra.mxu0 %v117
    %925 = vmatpush.msra.mxu0 %v113
    %926 = vmatpush.msra.mxu0 %v109
    %927 = vmatpush.msra.mxu0 %v105
    %928 = vmatpush.msra.mxu0 %v101
    %929 = vmatpush.msra.mxu0 %v97
    %930 = vmatpush.msra.mxu0 %v93
    %931 = vmatpush.msra.mxu0 %v89
    %932 = vmatmul.f32.gmra.mxu0 %v913
    %v933 = vpop.f32.mrf.mxu0
    %v934 = vadd.f32 0.0, %v933
    %935 = vdwg.mxu0
    %936 = vmatpush.msra.mxu0 %v150
    %937 = vmatpush.msra.mxu0 %v146
    %938 = vmatpush.msra.mxu0 %v142
    %939 = vmatpush.msra.mxu0 %v138
    %940 = vmatpush.msra.mxu0 %v134
    %941 = vmatpush.msra.mxu0 %v130
    %942 = vmatpush.msra.mxu0 %v126
    %943 = vmatpush.msra.mxu0 %v122
    %944 = vmatpush.msra.mxu0 %v118
    %945 = vmatpush.msra.mxu0 %v114
    %946 = vmatpush.msra.mxu0 %v110
    %947 = vmatpush.msra.mxu0 %v106
    %948 = vmatpush.msra.mxu0 %v102
    %949 = vmatpush.msra.mxu0 %v98
    %950 = vmatpush.msra.mxu0 %v94
    %951 = vmatpush.msra.mxu0 %v90
    %952 = vmatmul.f32.gmra.mxu0 %v913
    %v953 = vpop.f32.mrf.mxu0
    %v954 = vadd.f32 0.0, %v953
    %955 = vdwg.mxu0
    %956 = vmatpush.msra.mxu0 %v151
    %957 = vmatpush.msra.mxu0 %v147
    %958 = vmatpush.msra.mxu0 %v143
    %959 = vmatpush.msra.mxu0 %v139
    %960 = vmatpush.msra.mxu0 %v135
    %961 = vmatpush.msra.mxu0 %v131
    %962 = vmatpush.msra.mxu0 %v127
    %963 = vmatpush.msra.mxu0 %v123
    %964 = vmatpush.msra.mxu0 %v119
    %965 = vmatpush.msra.mxu0 %v115
    %966 = vmatpush.msra.mxu0 %v111
    %967 = vmatpush.msra.mxu0 %v107
    %968 = vmatpush.msra.mxu0 %v103
    %969 = vmatpush.msra.mxu0 %v99
    %970 = vmatpush.msra.mxu0 %v95
    %971 = vmatpush.msra.mxu0 %v91
    %972 = vmatmul.f32.gmra.mxu0 %v913
    %v973 = vpop.f32.mrf.mxu0
    %v974 = vadd.f32 0.0, %v973
    %975 = vdwg.mxu0
    %976 = vmatpush.msra.mxu0 %v152
    %977 = vmatpush.msra.mxu0 %v148
    %978 = vmatpush.msra.mxu0 %v144
    %979 = vmatpush.msra.mxu0 %v140
    %980 = vmatpush.msra.mxu0 %v136
    %981 = vmatpush.msra.mxu0 %v132
    %982 = vmatpush.msra.mxu0 %v128
    %983 = vmatpush.msra.mxu0 %v124
    %984 = vmatpush.msra.mxu0 %v120
    %985 = vmatpush.msra.mxu0 %v116
    %986 = vmatpush.msra.mxu0 %v112
    %987 = vmatpush.msra.mxu0 %v108
    %988 = vmatpush.msra.mxu0 %v104
    %989 = vmatpush.msra.mxu0 %v100
    %990 = vmatpush.msra.mxu0 %v96
    %991 = vmatpush.msra.mxu0 %v92
    %992 = vmatmul.f32.gmra.mxu0 %v913
    %v993 = vpop.f32.mrf.mxu0
    %v994 = vadd.f32 0.0, %v993
    %995 = vdwg.mxu0
    %s996 = scalar_lea.vmem [#allocation4], 224
    %v997 = vld [vmem:[%s996] sm:$0xff]
    %v998 = vld [vmem:[%s996 + $0x8] sm:$0xff]
    %v999 = vld [vmem:[%s996 + $0x10] sm:$0xff]
    %v1000 = vld [vmem:[%s996 + $0x18] sm:$0xff]
    %v1001 = vadd.f32 %v997, %v934
    %v1002 = vadd.f32 %v998, %v954
    %v1003 = vadd.f32 %v999, %v974
    %v1004 = vadd.f32 %v1000, %v994
    %v1005 = vmul.f32 %v1001, 0.5
    %v1006 = vtanh.pop %v1005
    %v1007 = vmul.f32 %v1006, 0.5
    %v1008 = vadd.f32 %v1007, 0.5
    %v1009 = vmul.f32 %v1002, 0.5
    %v1010 = vtanh.pop %v1009
    %v1011 = vmul.f32 %v1010, 0.5
    %v1012 = vadd.f32 %v1011, 0.5
    %v1013 = vtanh.pop %v1003
    %v1014 = vmul.f32 %v1004, 0.5
    %v1015 = vtanh.pop %v1014
    %v1016 = vmul.f32 %v1015, 0.5
    %v1017 = vadd.f32 %v1016, 0.5
    %v1018 = vmul.f32 %v1012, %v911
    %v1019 = vmul.f32 %v1008, %v1013
    %v1020 = vadd.f32 %v1018, %v1019
    %v1021 = vtanh.pop %v1020
    %v1022 = vmul.f32 %v1017, %v1021
    %s1023 = scalar_lea.vmem [#allocation12], 56
    %1024 = vst [vmem:[%s1023] sm:$0xff] %v1022
    %1025 = vst [vmem:[#allocation2] sm:$0xff] %v1022
    %1026 = vst [vmem:[#allocation3] sm:$0xff] %v1020
    // Predicated region
    $region38: #{tpu_custom_call.1} parent=1 // pred_check
      %p1027 = pneg %p81
    $region39: #{tpu_custom_call.1} parent=1 // pred_check_branch
      %1029 = sbr.rel (%p1027) target = $region41
    $region40: #{tpu_custom_call.1} parent=1 // pred_region
      %1030 = vst [vmem:[#allocation13] sm:$0xff] %v1022
      %1031 = vst [vmem:[#allocation15] sm:$0xff] %v1020
    $region41: #{tpu_custom_call.1} parent=1 // pred_fallthru
      _
    // Predicated region
    $region42: #{tpu_custom_call.1} parent=1 // pred_check
      _
    $region43: #{tpu_custom_call.1} parent=1 // pred_check_branch
      %1033 = sbr.rel (0) target = $region45
    $region44: #{tpu_custom_call.1} parent=1 // pred_region
      %1035 = vsyncadd [#allocation6], 0
      %s1036 = sshll.u32 [#allocation12], 4
      %s1037 = int_to_ptr.vmem [resolvable:$true] %s1036
      %s1038 = sshll.u32 %s4, 4
      %s1039 = int_to_ptr.hbm [resolvable:$true] %s1038
      %1044 = dma.vmem_to_hbm [thread:$0]  %s1037, 1024, %s1039, [#allocation6], 128, 128, 8
    $region45: #{tpu_custom_call.1} parent=1 // pred_fallthru
      _
    // Predicated region
    $region46: #{tpu_custom_call.1} parent=1 // pred_check
      _
    $region47: #{tpu_custom_call.1} parent=1 // pred_check_branch
      %1046 = sbr.rel (0) target = $region49
    $region48: #{tpu_custom_call.1} parent=1 // pred_region
      %1048 = vsyncadd [#allocation14], 0
      %s1050 = sshll.u32 [#allocation13], 4
      %s1051 = int_to_ptr.vmem [resolvable:$true] %s1050
      %s1052 = sshll.u32 %s5, 4
      %s1053 = int_to_ptr.hbm [resolvable:$true] %s1052
      %1055 = dma.vmem_to_hbm [thread:$0]  %s1051, 128, %s1053, [#allocation14]
    $region49: #{tpu_custom_call.1} parent=1 // pred_fallthru
      _
    // Predicated region
    $region50: #{tpu_custom_call.1} parent=1 // pred_check
      _
    $region51: #{tpu_custom_call.1} parent=1 // pred_check_branch
      %1057 = sbr.rel (0) target = $region53
    $region52: #{tpu_custom_call.1} parent=1 // pred_region
      %1059 = vsyncadd [#allocation14], 0
      %s1061 = sshll.u32 [#allocation15], 4
      %s1062 = int_to_ptr.vmem [resolvable:$true] %s1061
      %s1063 = sshll.u32 %s6, 4
      %s1064 = int_to_ptr.hbm [resolvable:$true] %s1063
      %1066 = dma.vmem_to_hbm [thread:$0]  %s1062, 128, %s1064, [#allocation14]
    $region53: #{tpu_custom_call.1} parent=1 // pred_fallthru
      _
    // Predicated region
    $region54: #{tpu_custom_call.1} parent=1 // pred_check
      _
    $region55: #{tpu_custom_call.1} parent=1 // pred_check_branch
      %1068 = sbr.rel (0) target = $region57
    $region56: #{tpu_custom_call.1} parent=1 // pred_region
      %1070 = dma.done [#allocation6], 1024
    $region57: #{tpu_custom_call.1} parent=1 // pred_fallthru
      _
    // Predicated region
    $region58: #{tpu_custom_call.1} parent=1 // pred_check
      _
    $region59: #{tpu_custom_call.1} parent=1 // pred_check_branch
      %1072 = sbr.rel (0) target = $region61
    $region60: #{tpu_custom_call.1} parent=1 // pred_region
      %1074 = dma.done [#allocation14], 128
    $region61: #{tpu_custom_call.1} parent=1 // pred_fallthru
      _
    // Predicated region
    $region62: #{tpu_custom_call.1} parent=1 // pred_check
      _
    $region63: #{tpu_custom_call.1} parent=1 // pred_check_branch
      %1076 = sbr.rel (0) target = $region65
    $region64: #{tpu_custom_call.1} parent=1 // pred_region
      %1078 = dma.done [#allocation14], 128
    $region65: #{tpu_custom_call.1} parent=1 // pred_fallthru
      _
    %1079 = vsyncpa [#allocation5], 1
    %1080 = vsyncpa [#allocation8], 1
    %1081 = vsyncpa [#allocation11], 1
    %1082 = vsyncpa [#allocation6], 1
    %1083 = vsyncpa [#allocation14], 1

</llo_original>
